<compile_context>
chip_gen: v5e
topology: v5e:2x2
jax: 0.10.0
libtpu: 0.0.40
codegen_flags: <defaults>
</compile_context>

<pallas_src>
import jax
import jax.numpy as jnp
from jax import lax
from jax.experimental import pallas as pl
from jax.experimental.pallas import tpu as pltpu


_C0 = 8  # sublane-aligned column offset of the first interior y column in scratch


# ----------------------------------------------------------------------------
# Fused C1 kernel: cv1 (1x1 conv + SiLU), 3x3 conv + SiLU, residual add
# ----------------------------------------------------------------------------
def _c1_fused_kernel(x_mid_ref, x_top_ref, x_bot_ref,
                     w1_ref, b1_ref, w3_ref, b3_ref,
                     o_ref, ypad_ref):
    # x_mid_ref : (HT*W, C1)       current row tile of x (channels-last, rows flat)
    # x_top_ref : (W, C1)          x row just above the tile (clamped at image top)
    # x_bot_ref : (W, C1)          x row just below the tile (clamped at image bottom)
    # w1_ref    : (C1, C2)         bf16, BN-folded 1x1 weights
    # b1_ref    : (1, C2)          f32,  BN-folded 1x1 bias
    # w3_ref    : (9, C2, C2)      bf16, BN-folded 3x3 weights, (kh*kw, cin, cout)
    # b3_ref    : (1, C2)          f32,  BN-folded 3x3 bias
    # o_ref     : (HT*W, C2)       output tile
    # ypad_ref  : (HT+2, W+_C0+2, C2) bf16 VMEM scratch with the padded y tile
    W = x_top_ref.shape[0]
    HT = x_mid_ref.shape[0] // W
    C2 = w1_ref.shape[1]

    i = pl.program_id(1)
    n_row = pl.num_programs(1)

    w1 = w1_ref[...]                     # (C1, C2) bf16
    b1 = b1_ref[...]                     # (1, C2)  f32

    def cv1(x2d):                        # 1x1 conv + folded BN + SiLU (f32 accum)
        z = jnp.dot(x2d.astype(jnp.bfloat16), w1,
                    preferred_element_type=jnp.float32) + b1
        return z * jax.nn.sigmoid(z)

    # interior tile; keep the f32 value live for the residual add
    y_mid = cv1(x_mid_ref[...])                                   # (HT*W, C2) f32

    # --- assemble the padded y tile in bf16 scratch -------------------------
    # Zero ONLY the pad columns read by the dx taps (2-wide slivers so the
    # packed-bf16 stores stay sublane-aligned).  Never gate on program_id:
    # under ("parallel","parallel") each core has its own scratch.
    zcol = jnp.zeros((HT + 2, 2, C2), jnp.bfloat16)
    ypad_ref[:, _C0 - 2:_C0, :] = zcol
    ypad_ref[:, _C0 + W:_C0 + W + 2, :] = zcol

    ypad_ref[1:HT + 1, _C0:_C0 + W, :] = (
        y_mid.reshape(HT, W, C2).astype(jnp.bfloat16))

    zrow = jnp.zeros((1, W, C2), jnp.bfloat16)

    # top halo row (image row i*HT - 1); zero at the image top border
    @pl.when(i > 0)
    def _():
        yt = cv1(x_top_ref[...])
        ypad_ref[0:1, _C0:_C0 + W, :] = yt.reshape(1, W, C2).astype(jnp.bfloat16)

    @pl.when(i == 0)
    def _():
        ypad_ref[0:1, _C0:_C0 + W, :] = zrow

    # bottom halo row (image row (i+1)*HT); zero at the image bottom border
    @pl.when(i < n_row - 1)
    def _():
        yb = cv1(x_bot_ref[...])
        ypad_ref[HT + 1:HT + 2, _C0:_C0 + W, :] = (
            yb.reshape(1, W, C2).astype(jnp.bfloat16))

    @pl.when(i == n_row - 1)
    def _():
        ypad_ref[HT + 1:HT + 2, _C0:_C0 + W, :] = zrow

    # --- 3x3 conv: 9 MXU matmuls (K=C2) on shifted bf16 slices of the scratch
    acc = b3_ref[...] + jnp.dot(
        ypad_ref[0:HT, _C0 - 1:_C0 - 1 + W, :].reshape(HT * W, C2),
        w3_ref[0], preferred_element_type=jnp.float32)
    for t in range(1, 9):
        dy, dx = divmod(t, 3)
        lhs = ypad_ref[dy:dy + HT, _C0 - 1 + dx:_C0 - 1 + dx + W, :]
        acc = acc + jnp.dot(lhs.reshape(HT * W, C2), w3_ref[t],
                            preferred_element_type=jnp.float32)

    # SiLU(z) + y  (residual on the f32 y_mid held in vregs)
    o_ref[...] = (acc * jax.nn.sigmoid(acc) + y_mid).astype(o_ref.dtype)


# ----------------------------------------------------------------------------
# Tiling / VMEM budgeting (generation-aware)
# ----------------------------------------------------------------------------
def _vmem_capacity_bytes():
    try:
        return int(pltpu.get_tpu_info().vmem_capacity_bytes)
    except Exception:
        return 64 * 1024 * 1024          # conservative default (v7x per-TC VMEM)


def _tile_vmem_bytes(HT, W, C1, C2):
    x_tile = HT * W * C1 * 4
    halos = 2 * W * C1 * 4
    out_tile = HT * W * C2 * 4
    scratch = (HT + 2) * (W + _C0 + 2) * C2 * 2              # bf16 ypad
    weights = (C1 * C2 + 9 * C2 * C2) * 2 + 2 * C2 * 4
    live = 3 * HT * W * C2 * 4                               # y_mid, acc, temps
    return 2 * (x_tile + halos + out_tile + weights) + scratch + live


def _pick_row_tile(H, W, C1, C2, N, vmem_budget):
    """Largest divisor of H whose working set fits the VMEM budget, preferring
    >= 2 grid steps (pipelining) and an even step count (v7x dual-TC)."""
    cands = [d for d in range(1, H + 1) if H % d == 0]
    fitting = [d for d in cands if _tile_vmem_bytes(d, W, C1, C2) <= vmem_budget]
    if not fitting:
        fitting = [1]
    multi = [d for d in fitting if N * (H // d) >= 2]
    even = [d for d in multi if (N * (H // d)) % 2 == 0]
    pool = even or multi or fitting
    return max(pool)


def c1_block_fused(x_nchw, w1, b1, w3, b3, *, row_tile=None):
    """Fused C1 (n=1).  x_nchw: (N, C1, H, W) -> (N, C2, H, W)."""
    N, C1, H, W = x_nchw.shape
    C2 = w1.shape[1]
    assert w1.shape == (C1, C2) and w3.shape == (3, 3, C2, C2)
    assert W % 8 == 0, "width must be a multiple of 8 (sublane) for halo specs"

    vmem_cap = _vmem_capacity_bytes()
    HT = row_tile if row_tile is not None else _pick_row_tile(
        H, W, C1, C2, N, vmem_budget=vmem_cap // 2)
    assert H % HT == 0
    n_row_tiles = H // HT

    # NCHW -> channels-last, rows flattened: (N, H*W, C1)
    x = jnp.transpose(x_nchw, (0, 2, 3, 1)).reshape(N, H * W, C1)
    w1b = w1.astype(jnp.bfloat16)
    w3b = w3.reshape(9, C2, C2).astype(jnp.bfloat16)       # (kh*kw, cin, cout)
    b1r = b1.reshape(1, C2).astype(jnp.float32)
    b3r = b3.reshape(1, C2).astype(jnp.float32)

    out = pl.pallas_call(
        _c1_fused_kernel,
        out_shape=jax.ShapeDtypeStruct((N, H * W, C2), jnp.float32),
        grid=(N, n_row_tiles),
        in_specs=[
            # current row tile of x
            pl.BlockSpec((None, HT * W, C1), lambda n, i: (n, i, 0)),
            # 1-row top / bottom halos (row index clamped to the image)
            pl.BlockSpec((None, W, C1),
                         lambda n, i: (n, jnp.maximum(i * HT - 1, 0), 0)),
            pl.BlockSpec((None, W, C1),
                         lambda n, i: (n, jnp.minimum((i + 1) * HT, H - 1), 0)),
            pl.BlockSpec((C1, C2), lambda n, i: (0, 0)),
            pl.BlockSpec((1, C2), lambda n, i: (0, 0)),
            pl.BlockSpec((9, C2, C2), lambda n, i: (0, 0, 0)),
            pl.BlockSpec((1, C2), lambda n, i: (0, 0)),
        ],
        out_specs=pl.BlockSpec((None, HT * W, C2), lambda n, i: (n, i, 0)),
        scratch_shapes=[pltpu.VMEM((HT + 2, W + _C0 + 2, C2), jnp.bfloat16)],
        compiler_params=pltpu.CompilerParams(
            dimension_semantics=("parallel", "parallel"),
            vmem_limit_bytes=int(vmem_cap * 3 // 4)),
    )(x, x, x, w1b, b1r, w3b, b3r)

    return jnp.transpose(out.reshape(N, H, W, C2), (0, 3, 1, 2))


@jax.jit
def c1_forward(x_nchw, cv1_w, cv1_b, m_w, m_b):
    """C1 forward (n=1): y = cv1(x); out = m(y) + y."""
    return c1_block_fused(x_nchw, cv1_w, cv1_b, m_w, m_b)


# ----------------------------------------------------------------------------
# Parameter construction (deterministic) + BN folding (glue, plain JAX)
# ----------------------------------------------------------------------------
def _fold_bn(w_out_last, gamma, beta, mean, var, eps=1e-3):
    scale = gamma / jnp.sqrt(var + eps)          # (C2,)
    return w_out_last * scale, beta - mean * scale


def make_c1_params(key, c1, c2, n=1):
    keys = jax.random.split(key, 5 * (1 + n))
    ki = iter(keys)
    params = {}
    # cv1: 1x1 conv as (C1, C2)
    w1 = jax.random.normal(next(ki), (c1, c2), jnp.float32) * 0.1
    g1 = 1.0 + 0.1 * jax.random.normal(next(ki), (c2,), jnp.float32)
    be1 = 0.1 * jax.random.normal(next(ki), (c2,), jnp.float32)
    mu1 = 0.1 * jax.random.normal(next(ki), (c2,), jnp.float32)
    va1 = jnp.abs(1.0 + 0.1 * jax.random.normal(next(ki), (c2,), jnp.float32))
    params["cv1_w"], params["cv1_b"] = _fold_bn(w1, g1, be1, mu1, va1)
    # m: n blocks of 3x3 conv, HWIO weights (3, 3, C2, C2)
    params["m"] = []
    for _ in range(n):
        w3 = jax.random.normal(next(ki), (3, 3, c2, c2), jnp.float32) * 0.05
        g3 = 1.0 + 0.1 * jax.random.normal(next(ki), (c2,), jnp.float32)
        be3 = 0.1 * jax.random.normal(next(ki), (c2,), jnp.float32)
        mu3 = 0.1 * jax.random.normal(next(ki), (c2,), jnp.float32)
        va3 = jnp.abs(1.0 + 0.1 * jax.random.normal(next(ki), (c2,), jnp.float32))
        params["m"].append(_fold_bn(w3, g3, be3, mu3, va3))
    return params


# ----------------------------------------------------------------------------
# Pure-JAX reference (loose self-check; kernel uses bf16 MXU inputs)
# ----------------------------------------------------------------------------
def c1_reference(x_nchw, w1, b1, w3, b3):
    x = jnp.transpose(x_nchw, (0, 2, 3, 1))
    y = jnp.einsum("nhwc,cd->nhwd", x, w1, precision=lax.Precision.HIGHEST) + b1
    y = y * jax.nn.sigmoid(y)
    z = lax.conv_general_dilated(
        y, w3, window_strides=(1, 1), padding=((1, 1), (1, 1)),
        dimension_numbers=("NHWC", "HWIO", "NHWC"),
        precision=lax.Precision.HIGHEST) + b3
    z = z * jax.nn.sigmoid(z)
    return jnp.transpose(z + y, (0, 3, 1, 2))


if __name__ == "__main__":
    N, C_IN, C_OUT, H, W = 2, 4, 8, 16, 16
    key = jax.random.PRNGKey(0)
    k_x, k_p = jax.random.split(key)

    x = jax.random.normal(k_x, (N, C_IN, H, W), jnp.float32)
    params = make_c1_params(k_p, C_IN, C_OUT, n=1)
    m_w, m_b = params["m"][0]

    out = c1_forward(x, params["cv1_w"], params["cv1_b"], m_w, m_b)
    jax.block_until_ready(out)
    assert out.shape == (N, C_OUT, H, W)

    ref = c1_reference(x, params["cv1_w"], params["cv1_b"], m_w, m_b)
    err = float(jnp.max(jnp.abs(out - ref)))
    assert err < 5e-2, f"max abs error too large: {err}"
    print("KERNEL_OK")
</pallas_src>

<mosaic_0001>
module attributes {stable_mosaic.version = 11 : i64} {
  func.func @_c1_fused_kernel(%arg0: i32, %arg1: i32, %arg2: memref<1x256x4xf32, #tpu.memory_space<vmem>>, %arg3: memref<1x16x4xf32, #tpu.memory_space<vmem>>, %arg4: memref<1x16x4xf32, #tpu.memory_space<vmem>>, %arg5: memref<4x8xbf16, #tpu.memory_space<vmem>>, %arg6: memref<1x8xf32, #tpu.memory_space<vmem>>, %arg7: memref<9x8x8xbf16, #tpu.memory_space<vmem>>, %arg8: memref<1x8xf32, #tpu.memory_space<vmem>>, %arg9: memref<1x256x8xf32, #tpu.memory_space<vmem>>, %arg10: memref<18x26x8xbf16, #tpu.memory_space<vmem>>) attributes {dimension_semantics = [#tpu.dimension_semantics<parallel>, #tpu.dimension_semantics<parallel>], iteration_bounds = array<i64: 2, 1>, scalar_prefetch = 0 : i64, scratch_operands = 1 : i64, tpu.core_type = #tpu.core_type<tc>, window_params = [{transform_indices = @transform_0, window_bounds = array<i64: 1, 256, 4>}, {transform_indices = @transform_1, window_bounds = array<i64: 1, 16, 4>}, {transform_indices = @transform_2, window_bounds = array<i64: 1, 16, 4>}, {pipeline_mode = #tpu.pipeline_mode<synchronous>, transform_indices = @transform_3, window_bounds = array<i64: 4, 8>}, {pipeline_mode = #tpu.pipeline_mode<synchronous>, transform_indices = @transform_4, window_bounds = array<i64: 1, 8>}, {pipeline_mode = #tpu.pipeline_mode<synchronous>, transform_indices = @transform_5, window_bounds = array<i64: 9, 8, 8>}, {pipeline_mode = #tpu.pipeline_mode<synchronous>, transform_indices = @transform_6, window_bounds = array<i64: 1, 8>}, {transform_indices = @transform_7, window_bounds = array<i64: 1, 256, 8>}]} {
    %c0 = arith.constant 0 : index
    %c0_0 = arith.constant 0 : index
    %0 = vector.load %arg5[%c0, %c0_0] : memref<4x8xbf16, #tpu.memory_space<vmem>>, vector<4x8xbf16>
    %c0_1 = arith.constant 0 : index
    %c0_2 = arith.constant 0 : index
    %1 = vector.load %arg6[%c0_1, %c0_2] : memref<1x8xf32, #tpu.memory_space<vmem>>, vector<1x8xf32>
    %c0_3 = arith.constant 0 : index
    %c0_4 = arith.constant 0 : index
    %c0_5 = arith.constant 0 : index
    %2 = vector.load %arg2[%c0_3, %c0_4, %c0_5] : memref<1x256x4xf32, #tpu.memory_space<vmem>>, vector<1x256x4xf32>
    %3 = vector.shape_cast %2 : vector<1x256x4xf32> to vector<256x4xf32>
    %4 = arith.truncf %3 : vector<256x4xf32> to vector<256x4xbf16>
    %cst = arith.constant dense<0.000000e+00> : vector<256x8xf32>
    %5 = tpu.matmul %4, %0, %cst {dimension_numbers = #tpu.dot_dimension_numbers<[1], [0], [0], [1], [0, 0, 1, 1], [], []>} : vector<256x4xbf16>, vector<4x8xbf16>, vector<256x8xf32> -> vector<256x8xf32>
    %6 = vector.broadcast %1 : vector<1x8xf32> to vector<256x8xf32>
    %7 = arith.addf %5, %6 : vector<256x8xf32>
    %8 = arith.negf %7 : vector<256x8xf32>
    %9 = math.exp %8 : vector<256x8xf32>
    %cst_6 = arith.constant 1.000000e+00 : f32
    %10 = vector.broadcast %cst_6 : f32 to vector<256x8xf32>
    %11 = arith.addf %10, %9 : vector<256x8xf32>
    %12 = arith.divf %10, %11 : vector<256x8xf32>
    %13 = arith.mulf %7, %12 : vector<256x8xf32>
    %cst_7 = arith.constant 0.000000e+00 : bf16
    %14 = vector.broadcast %cst_7 : bf16 to vector<18x2x8xbf16>
    %c0_8 = arith.constant 0 : index
    %c6 = arith.constant 6 : index
    %c0_9 = arith.constant 0 : index
    %15 = vector.load %arg10[%c0_8, %c6, %c0_9] : memref<18x26x8xbf16, #tpu.memory_space<vmem>>, vector<18x2x8xbf16>
    tpu.vector_store %arg10[%c0_8, %c6, %c0_9], %14 {strides = array<i32>} : memref<18x26x8xbf16, #tpu.memory_space<vmem>>, vector<18x2x8xbf16>,
    %c0_10 = arith.constant 0 : index
    %c24 = arith.constant 24 : index
    %c0_11 = arith.constant 0 : index
    %16 = vector.load %arg10[%c0_10, %c24, %c0_11] : memref<18x26x8xbf16, #tpu.memory_space<vmem>>, vector<18x2x8xbf16>
    tpu.vector_store %arg10[%c0_10, %c24, %c0_11], %14 {strides = array<i32>} : memref<18x26x8xbf16, #tpu.memory_space<vmem>>, vector<18x2x8xbf16>,
    %17 = vector.shape_cast %13 : vector<256x8xf32> to vector<16x16x8xf32>
    %18 = arith.truncf %17 : vector<16x16x8xf32> to vector<16x16x8xbf16>
    %c1 = arith.constant 1 : index
    %c8 = arith.constant 8 : index
    %c0_12 = arith.constant 0 : index
    %19 = vector.load %arg10[%c1, %c8, %c0_12] : memref<18x26x8xbf16, #tpu.memory_space<vmem>>, vector<16x16x8xbf16>
    tpu.vector_store %arg10[%c1, %c8, %c0_12], %18 {strides = array<i32>} : memref<18x26x8xbf16, #tpu.memory_space<vmem>>, vector<16x16x8xbf16>,
    %cst_13 = arith.constant 0.000000e+00 : bf16
    %20 = vector.broadcast %cst_13 : bf16 to vector<1x16x8xbf16>
    %c0_i32 = arith.constant 0 : i32
    %21 = arith.cmpi sgt, %arg1, %c0_i32 : i32
    %22 = arith.extui %21 : i1 to i32
    %c0_i32_14 = arith.constant 0 : i32
    %23 = arith.cmpi ne, %22, %c0_i32_14 : i32
    scf.if %23 {
      %c0_84 = arith.constant 0 : index
      %c0_85 = arith.constant 0 : index
      %c0_86 = arith.constant 0 : index
      %99 = vector.load %arg3[%c0_84, %c0_85, %c0_86] : memref<1x16x4xf32, #tpu.memory_space<vmem>>, vector<1x16x4xf32>
      %100 = vector.shape_cast %99 : vector<1x16x4xf32> to vector<16x4xf32>
      %101 = arith.truncf %100 : vector<16x4xf32> to vector<16x4xbf16>
      %cst_87 = arith.constant dense<0.000000e+00> : vector<16x8xf32>
      %102 = tpu.matmul %101, %0, %cst_87 {dimension_numbers = #tpu.dot_dimension_numbers<[1], [0], [0], [1], [0, 0, 1, 1], [], []>} : vector<16x4xbf16>, vector<4x8xbf16>, vector<16x8xf32> -> vector<16x8xf32>
      %103 = vector.broadcast %1 : vector<1x8xf32> to vector<16x8xf32>
      %104 = arith.addf %102, %103 : vector<16x8xf32>
      %105 = arith.negf %104 : vector<16x8xf32>
      %106 = math.exp %105 : vector<16x8xf32>
      %cst_88 = arith.constant 1.000000e+00 : f32
      %107 = vector.broadcast %cst_88 : f32 to vector<16x8xf32>
      %108 = arith.addf %107, %106 : vector<16x8xf32>
      %109 = arith.divf %107, %108 : vector<16x8xf32>
      %110 = arith.mulf %104, %109 : vector<16x8xf32>
      %111 = vector.shape_cast %110 : vector<16x8xf32> to vector<1x16x8xf32>
      %112 = arith.truncf %111 : vector<1x16x8xf32> to vector<1x16x8xbf16>
      %c0_89 = arith.constant 0 : index
      %c8_90 = arith.constant 8 : index
      %c0_91 = arith.constant 0 : index
      %113 = vector.load %arg10[%c0_89, %c8_90, %c0_91] : memref<18x26x8xbf16, #tpu.memory_space<vmem>>, vector<1x16x8xbf16>
      tpu.vector_store %arg10[%c0_89, %c8_90, %c0_91], %112 {strides = array<i32>} : memref<18x26x8xbf16, #tpu.memory_space<vmem>>, vector<1x16x8xbf16>,
    } else {
    }
    %c0_i32_15 = arith.constant 0 : i32
    %24 = arith.cmpi eq, %arg1, %c0_i32_15 : i32
    %25 = arith.extui %24 : i1 to i32
    %c0_i32_16 = arith.constant 0 : i32
    %26 = arith.cmpi ne, %25, %c0_i32_16 : i32
    scf.if %26 {
      %c0_84 = arith.constant 0 : index
      %c8_85 = arith.constant 8 : index
      %c0_86 = arith.constant 0 : index
      %99 = vector.load %arg10[%c0_84, %c8_85, %c0_86] : memref<18x26x8xbf16, #tpu.memory_space<vmem>>, vector<1x16x8xbf16>
      tpu.vector_store %arg10[%c0_84, %c8_85, %c0_86], %20 {strides = array<i32>} : memref<18x26x8xbf16, #tpu.memory_space<vmem>>, vector<1x16x8xbf16>,
    } else {
    }
    %c0_i32_17 = arith.constant 0 : i32
    %27 = arith.cmpi slt, %arg1, %c0_i32_17 : i32
    %28 = arith.extui %27 : i1 to i32
    %c0_i32_18 = arith.constant 0 : i32
    %29 = arith.cmpi ne, %28, %c0_i32_18 : i32
    scf.if %29 {
      %c0_84 = arith.constant 0 : index
      %c0_85 = arith.constant 0 : index
      %c0_86 = arith.constant 0 : index
      %99 = vector.load %arg4[%c0_84, %c0_85, %c0_86] : memref<1x16x4xf32, #tpu.memory_space<vmem>>, vector<1x16x4xf32>
      %100 = vector.shape_cast %99 : vector<1x16x4xf32> to vector<16x4xf32>
      %101 = arith.truncf %100 : vector<16x4xf32> to vector<16x4xbf16>
      %cst_87 = arith.constant dense<0.000000e+00> : vector<16x8xf32>
      %102 = tpu.matmul %101, %0, %cst_87 {dimension_numbers = #tpu.dot_dimension_numbers<[1], [0], [0], [1], [0, 0, 1, 1], [], []>} : vector<16x4xbf16>, vector<4x8xbf16>, vector<16x8xf32> -> vector<16x8xf32>
      %103 = vector.broadcast %1 : vector<1x8xf32> to vector<16x8xf32>
      %104 = arith.addf %102, %103 : vector<16x8xf32>
      %105 = arith.negf %104 : vector<16x8xf32>
      %106 = math.exp %105 : vector<16x8xf32>
      %cst_88 = arith.constant 1.000000e+00 : f32
      %107 = vector.broadcast %cst_88 : f32 to vector<16x8xf32>
      %108 = arith.addf %107, %106 : vector<16x8xf32>
      %109 = arith.divf %107, %108 : vector<16x8xf32>
      %110 = arith.mulf %104, %109 : vector<16x8xf32>
      %111 = vector.shape_cast %110 : vector<16x8xf32> to vector<1x16x8xf32>
      %112 = arith.truncf %111 : vector<1x16x8xf32> to vector<1x16x8xbf16>
      %c17 = arith.constant 17 : index
      %c8_89 = arith.constant 8 : index
      %c0_90 = arith.constant 0 : index
      %113 = vector.load %arg10[%c17, %c8_89, %c0_90] : memref<18x26x8xbf16, #tpu.memory_space<vmem>>, vector<1x16x8xbf16>
      tpu.vector_store %arg10[%c17, %c8_89, %c0_90], %112 {strides = array<i32>} : memref<18x26x8xbf16, #tpu.memory_space<vmem>>, vector<1x16x8xbf16>,
    } else {
    }
    %c0_i32_19 = arith.constant 0 : i32
    %30 = arith.cmpi eq, %arg1, %c0_i32_19 : i32
    %31 = arith.extui %30 : i1 to i32
    %c0_i32_20 = arith.constant 0 : i32
    %32 = arith.cmpi ne, %31, %c0_i32_20 : i32
    scf.if %32 {
      %c17 = arith.constant 17 : index
      %c8_84 = arith.constant 8 : index
      %c0_85 = arith.constant 0 : index
      %99 = vector.load %arg10[%c17, %c8_84, %c0_85] : memref<18x26x8xbf16, #tpu.memory_space<vmem>>, vector<1x16x8xbf16>
      tpu.vector_store %arg10[%c17, %c8_84, %c0_85], %20 {strides = array<i32>} : memref<18x26x8xbf16, #tpu.memory_space<vmem>>, vector<1x16x8xbf16>,
    } else {
    }
    %c0_21 = arith.constant 0 : index
    %c0_22 = arith.constant 0 : index
    %33 = vector.load %arg8[%c0_21, %c0_22] : memref<1x8xf32, #tpu.memory_space<vmem>>, vector<1x8xf32>
    %c0_23 = arith.constant 0 : index
    %c7 = arith.constant 7 : index
    %c0_24 = arith.constant 0 : index
    %34 = vector.load %arg10[%c0_23, %c7, %c0_24] : memref<18x26x8xbf16, #tpu.memory_space<vmem>>, vector<16x16x8xbf16>
    %35 = vector.shape_cast %34 : vector<16x16x8xbf16> to vector<256x8xbf16>
    %c0_25 = arith.constant 0 : index
    %c0_26 = arith.constant 0 : index
    %c0_27 = arith.constant 0 : index
    %36 = vector.load %arg7[%c0_25, %c0_26, %c0_27] : memref<9x8x8xbf16, #tpu.memory_space<vmem>>, vector<1x8x8xbf16>
    %37 = vector.shape_cast %36 : vector<1x8x8xbf16> to vector<8x8xbf16>
    %cst_28 = arith.constant dense<0.000000e+00> : vector<256x8xf32>
    %38 = tpu.matmul %35, %37, %cst_28 {dimension_numbers = #tpu.dot_dimension_numbers<[1], [0], [0], [1], [0, 0, 1, 1], [], []>} : vector<256x8xbf16>, vector<8x8xbf16>, vector<256x8xf32> -> vector<256x8xf32>
    %39 = vector.broadcast %33 : vector<1x8xf32> to vector<256x8xf32>
    %40 = arith.addf %39, %38 : vector<256x8xf32>
    %c0_29 = arith.constant 0 : index
    %c8_30 = arith.constant 8 : index
    %c0_31 = arith.constant 0 : index
    %41 = vector.load %arg10[%c0_29, %c8_30, %c0_31] : memref<18x26x8xbf16, #tpu.memory_space<vmem>>, vector<16x16x8xbf16>
    %42 = vector.shape_cast %41 : vector<16x16x8xbf16> to vector<256x8xbf16>
    %c1_32 = arith.constant 1 : index
    %c0_33 = arith.constant 0 : index
    %c0_34 = arith.constant 0 : index
    %43 = vector.load %arg7[%c1_32, %c0_33, %c0_34] : memref<9x8x8xbf16, #tpu.memory_space<vmem>>, vector<1x8x8xbf16>
    %44 = vector.shape_cast %43 : vector<1x8x8xbf16> to vector<8x8xbf16>
    %cst_35 = arith.constant dense<0.000000e+00> : vector<256x8xf32>
    %45 = tpu.matmul %42, %44, %cst_35 {dimension_numbers = #tpu.dot_dimension_numbers<[1], [0], [0], [1], [0, 0, 1, 1], [], []>} : vector<256x8xbf16>, vector<8x8xbf16>, vector<256x8xf32> -> vector<256x8xf32>
    %46 = arith.addf %40, %45 : vector<256x8xf32>
    %c0_36 = arith.constant 0 : index
    %c9 = arith.constant 9 : index
    %c0_37 = arith.constant 0 : index
    %47 = vector.load %arg10[%c0_36, %c9, %c0_37] : memref<18x26x8xbf16, #tpu.memory_space<vmem>>, vector<16x16x8xbf16>
    %48 = vector.shape_cast %47 : vector<16x16x8xbf16> to vector<256x8xbf16>
    %c2 = arith.constant 2 : index
    %c0_38 = arith.constant 0 : index
    %c0_39 = arith.constant 0 : index
    %49 = vector.load %arg7[%c2, %c0_38, %c0_39] : memref<9x8x8xbf16, #tpu.memory_space<vmem>>, vector<1x8x8xbf16>
    %50 = vector.shape_cast %49 : vector<1x8x8xbf16> to vector<8x8xbf16>
    %cst_40 = arith.constant dense<0.000000e+00> : vector<256x8xf32>
    %51 = tpu.matmul %48, %50, %cst_40 {dimension_numbers = #tpu.dot_dimension_numbers<[1], [0], [0], [1], [0, 0, 1, 1], [], []>} : vector<256x8xbf16>, vector<8x8xbf16>, vector<256x8xf32> -> vector<256x8xf32>
    %52 = arith.addf %46, %51 : vector<256x8xf32>
    %c1_41 = arith.constant 1 : index
    %c7_42 = arith.constant 7 : index
    %c0_43 = arith.constant 0 : index
    %53 = vector.load %arg10[%c1_41, %c7_42, %c0_43] : memref<18x26x8xbf16, #tpu.memory_space<vmem>>, vector<16x16x8xbf16>
    %54 = vector.shape_cast %53 : vector<16x16x8xbf16> to vector<256x8xbf16>
    %c3 = arith.constant 3 : index
    %c0_44 = arith.constant 0 : index
    %c0_45 = arith.constant 0 : index
    %55 = vector.load %arg7[%c3, %c0_44, %c0_45] : memref<9x8x8xbf16, #tpu.memory_space<vmem>>, vector<1x8x8xbf16>
    %56 = vector.shape_cast %55 : vector<1x8x8xbf16> to vector<8x8xbf16>
    %cst_46 = arith.constant dense<0.000000e+00> : vector<256x8xf32>
    %57 = tpu.matmul %54, %56, %cst_46 {dimension_numbers = #tpu.dot_dimension_numbers<[1], [0], [0], [1], [0, 0, 1, 1], [], []>} : vector<256x8xbf16>, vector<8x8xbf16>, vector<256x8xf32> -> vector<256x8xf32>
    %58 = arith.addf %52, %57 : vector<256x8xf32>
    %c1_47 = arith.constant 1 : index
    %c8_48 = arith.constant 8 : index
    %c0_49 = arith.constant 0 : index
    %59 = vector.load %arg10[%c1_47, %c8_48, %c0_49] : memref<18x26x8xbf16, #tpu.memory_space<vmem>>, vector<16x16x8xbf16>
    %60 = vector.shape_cast %59 : vector<16x16x8xbf16> to vector<256x8xbf16>
    %c4 = arith.constant 4 : index
    %c0_50 = arith.constant 0 : index
    %c0_51 = arith.constant 0 : index
    %61 = vector.load %arg7[%c4, %c0_50, %c0_51] : memref<9x8x8xbf16, #tpu.memory_space<vmem>>, vector<1x8x8xbf16>
    %62 = vector.shape_cast %61 : vector<1x8x8xbf16> to vector<8x8xbf16>
    %cst_52 = arith.constant dense<0.000000e+00> : vector<256x8xf32>
    %63 = tpu.matmul %60, %62, %cst_52 {dimension_numbers = #tpu.dot_dimension_numbers<[1], [0], [0], [1], [0, 0, 1, 1], [], []>} : vector<256x8xbf16>, vector<8x8xbf16>, vector<256x8xf32> -> vector<256x8xf32>
    %64 = arith.addf %58, %63 : vector<256x8xf32>
    %c1_53 = arith.constant 1 : index
    %c9_54 = arith.constant 9 : index
    %c0_55 = arith.constant 0 : index
    %65 = vector.load %arg10[%c1_53, %c9_54, %c0_55] : memref<18x26x8xbf16, #tpu.memory_space<vmem>>, vector<16x16x8xbf16>
    %66 = vector.shape_cast %65 : vector<16x16x8xbf16> to vector<256x8xbf16>
    %c5 = arith.constant 5 : index
    %c0_56 = arith.constant 0 : index
    %c0_57 = arith.constant 0 : index
    %67 = vector.load %arg7[%c5, %c0_56, %c0_57] : memref<9x8x8xbf16, #tpu.memory_space<vmem>>, vector<1x8x8xbf16>
    %68 = vector.shape_cast %67 : vector<1x8x8xbf16> to vector<8x8xbf16>
    %cst_58 = arith.constant dense<0.000000e+00> : vector<256x8xf32>
    %69 = tpu.matmul %66, %68, %cst_58 {dimension_numbers = #tpu.dot_dimension_numbers<[1], [0], [0], [1], [0, 0, 1, 1], [], []>} : vector<256x8xbf16>, vector<8x8xbf16>, vector<256x8xf32> -> vector<256x8xf32>
    %70 = arith.addf %64, %69 : vector<256x8xf32>
    %c2_59 = arith.constant 2 : index
    %c7_60 = arith.constant 7 : index
    %c0_61 = arith.constant 0 : index
    %71 = vector.load %arg10[%c2_59, %c7_60, %c0_61] : memref<18x26x8xbf16, #tpu.memory_space<vmem>>, vector<16x16x8xbf16>
    %72 = vector.shape_cast %71 : vector<16x16x8xbf16> to vector<256x8xbf16>
    %c6_62 = arith.constant 6 : index
    %c0_63 = arith.constant 0 : index
    %c0_64 = arith.constant 0 : index
    %73 = vector.load %arg7[%c6_62, %c0_63, %c0_64] : memref<9x8x8xbf16, #tpu.memory_space<vmem>>, vector<1x8x8xbf16>
    %74 = vector.shape_cast %73 : vector<1x8x8xbf16> to vector<8x8xbf16>
    %cst_65 = arith.constant dense<0.000000e+00> : vector<256x8xf32>
    %75 = tpu.matmul %72, %74, %cst_65 {dimension_numbers = #tpu.dot_dimension_numbers<[1], [0], [0], [1], [0, 0, 1, 1], [], []>} : vector<256x8xbf16>, vector<8x8xbf16>, vector<256x8xf32> -> vector<256x8xf32>
    %76 = arith.addf %70, %75 : vector<256x8xf32>
    %c2_66 = arith.constant 2 : index
    %c8_67 = arith.constant 8 : index
    %c0_68 = arith.constant 0 : index
    %77 = vector.load %arg10[%c2_66, %c8_67, %c0_68] : memref<18x26x8xbf16, #tpu.memory_space<vmem>>, vector<16x16x8xbf16>
    %78 = vector.shape_cast %77 : vector<16x16x8xbf16> to vector<256x8xbf16>
    %c7_69 = arith.constant 7 : index
    %c0_70 = arith.constant 0 : index
    %c0_71 = arith.constant 0 : index
    %79 = vector.load %arg7[%c7_69, %c0_70, %c0_71] : memref<9x8x8xbf16, #tpu.memory_space<vmem>>, vector<1x8x8xbf16>
    %80 = vector.shape_cast %79 : vector<1x8x8xbf16> to vector<8x8xbf16>
    %cst_72 = arith.constant dense<0.000000e+00> : vector<256x8xf32>
    %81 = tpu.matmul %78, %80, %cst_72 {dimension_numbers = #tpu.dot_dimension_numbers<[1], [0], [0], [1], [0, 0, 1, 1], [], []>} : vector<256x8xbf16>, vector<8x8xbf16>, vector<256x8xf32> -> vector<256x8xf32>
    %82 = arith.addf %76, %81 : vector<256x8xf32>
    %c2_73 = arith.constant 2 : index
    %c9_74 = arith.constant 9 : index
    %c0_75 = arith.constant 0 : index
    %83 = vector.load %arg10[%c2_73, %c9_74, %c0_75] : memref<18x26x8xbf16, #tpu.memory_space<vmem>>, vector<16x16x8xbf16>
    %84 = vector.shape_cast %83 : vector<16x16x8xbf16> to vector<256x8xbf16>
    %c8_76 = arith.constant 8 : index
    %c0_77 = arith.constant 0 : index
    %c0_78 = arith.constant 0 : index
    %85 = vector.load %arg7[%c8_76, %c0_77, %c0_78] : memref<9x8x8xbf16, #tpu.memory_space<vmem>>, vector<1x8x8xbf16>
    %86 = vector.shape_cast %85 : vector<1x8x8xbf16> to vector<8x8xbf16>
    %cst_79 = arith.constant dense<0.000000e+00> : vector<256x8xf32>
    %87 = tpu.matmul %84, %86, %cst_79 {dimension_numbers = #tpu.dot_dimension_numbers<[1], [0], [0], [1], [0, 0, 1, 1], [], []>} : vector<256x8xbf16>, vector<8x8xbf16>, vector<256x8xf32> -> vector<256x8xf32>
    %88 = arith.addf %82, %87 : vector<256x8xf32>
    %89 = arith.negf %88 : vector<256x8xf32>
    %90 = math.exp %89 : vector<256x8xf32>
    %cst_80 = arith.constant 1.000000e+00 : f32
    %91 = vector.broadcast %cst_80 : f32 to vector<256x8xf32>
    %92 = arith.addf %91, %90 : vector<256x8xf32>
    %93 = arith.divf %91, %92 : vector<256x8xf32>
    %94 = arith.mulf %88, %93 : vector<256x8xf32>
    %95 = arith.addf %94, %13 : vector<256x8xf32>
    %c0_81 = arith.constant 0 : index
    %c0_82 = arith.constant 0 : index
    %c0_83 = arith.constant 0 : index
    %96 = vector.load %arg9[%c0_81, %c0_82, %c0_83] : memref<1x256x8xf32, #tpu.memory_space<vmem>>, vector<1x256x8xf32>
    %97 = vector.shape_cast %96 : vector<1x256x8xf32> to vector<256x8xf32>
    %98 = vector.shape_cast %95 : vector<256x8xf32> to vector<1x256x8xf32>
    tpu.vector_store %arg9[%c0_81, %c0_82, %c0_83], %98 {strides = array<i32>} : memref<1x256x8xf32, #tpu.memory_space<vmem>>, vector<1x256x8xf32>,
    return
  }
  func.func @transform_0(%arg0: i32, %arg1: i32) -> (i32, i32, i32) {
    %c0_i32 = arith.constant 0 : i32
    %c0_i32_0 = arith.constant 0 : i32
    return %arg0, %arg1, %c0_i32 : i32, i32, i32
  }
  func.func @transform_1(%arg0: i32, %arg1: i32) -> (i32, i32, i32) {
    %c16_i32 = arith.constant 16 : i32
    %0 = arith.muli %arg1, %c16_i32 : i32
    %c1_i32 = arith.constant 1 : i32
    %1 = arith.subi %0, %c1_i32 : i32
    %c0_i32 = arith.constant 0 : i32
    %2 = arith.maxsi %1, %c0_i32 : i32
    %c0_i32_0 = arith.constant 0 : i32
    %c0_i32_1 = arith.constant 0 : i32
    return %arg0, %2, %c0_i32_0 : i32, i32, i32
  }
  func.func @transform_2(%arg0: i32, %arg1: i32) -> (i32, i32, i32) {
    %c1_i32 = arith.constant 1 : i32
    %0 = arith.addi %arg1, %c1_i32 : i32
    %c16_i32 = arith.constant 16 : i32
    %1 = arith.muli %0, %c16_i32 : i32
    %c15_i32 = arith.constant 15 : i32
    %2 = arith.minsi %1, %c15_i32 : i32
    %c0_i32 = arith.constant 0 : i32
    %c0_i32_0 = arith.constant 0 : i32
    return %arg0, %2, %c0_i32 : i32, i32, i32
  }
  func.func @transform_3(%arg0: i32, %arg1: i32) -> (i32, i32) {
    %c0_i32 = arith.constant 0 : i32
    %c0_i32_0 = arith.constant 0 : i32
    %c0_i32_1 = arith.constant 0 : i32
    return %c0_i32, %c0_i32_0 : i32, i32
  }
  func.func @transform_4(%arg0: i32, %arg1: i32) -> (i32, i32) {
    %c0_i32 = arith.constant 0 : i32
    %c0_i32_0 = arith.constant 0 : i32
    %c0_i32_1 = arith.constant 0 : i32
    return %c0_i32, %c0_i32_0 : i32, i32
  }
  func.func @transform_5(%arg0: i32, %arg1: i32) -> (i32, i32, i32) {
    %c0_i32 = arith.constant 0 : i32
    %c0_i32_0 = arith.constant 0 : i32
    %c0_i32_1 = arith.constant 0 : i32
    %c0_i32_2 = arith.constant 0 : i32
    return %c0_i32, %c0_i32_0, %c0_i32_1 : i32, i32, i32
  }
  func.func @transform_6(%arg0: i32, %arg1: i32) -> (i32, i32) {
    %c0_i32 = arith.constant 0 : i32
    %c0_i32_0 = arith.constant 0 : i32
    %c0_i32_1 = arith.constant 0 : i32
    return %c0_i32, %c0_i32_0 : i32, i32
  }
  func.func @transform_7(%arg0: i32, %arg1: i32) -> (i32, i32, i32) {
    %c0_i32 = arith.constant 0 : i32
    %c0_i32_0 = arith.constant 0 : i32
    return %arg0, %arg1, %c0_i32 : i32, i32, i32
  }
}

</mosaic_0001>

<llo_original>
// kernel: c1_forward.1
$region0: #{c1_forward.1}
  #allocation0 [shape = 'u32[]', space=smem, size = 0x4, offset = 0x4, fixed_abs, tag = 'smem constant byte address 0x4 - core index']
  #allocation1 [shape = 'u32[72,128]{1,0:T(1,128)}', space=vmem, size = 0x9000, scoped, tag = 'internal scratch']
  #allocation2 [shape = 'bf16[18,26,8]{2,1,0:T(8,128)(2,1)}', space=vmem, size = 0x24000, scoped, tag = 'scratch operand']
  %s0 = inlined_call_operand.vmem [shape: f32[2,256,4], index: 0, kind: input, shape index: {}, may-alias: {0,1,2}]
  %s1 = inlined_call_operand.vmem [shape: f32[2,256,4], index: 1, kind: input, shape index: {}, may-alias: {0,1,2}]
  %s2 = inlined_call_operand.vmem [shape: f32[2,256,4], index: 2, kind: input, shape index: {}, may-alias: {0,1,2}]
  %s3 = inlined_call_operand.vmem [shape: bf16[4,8], index: 3, kind: input, shape index: {}]
  %s4 = inlined_call_operand.vmem [shape: f32[1,8], index: 4, kind: input, shape index: {}]
  %s5 = inlined_call_operand.vmem [shape: bf16[9,8,8], index: 5, kind: input, shape index: {}]
  %s6 = inlined_call_operand.vmem [shape: f32[1,8], index: 6, kind: input, shape index: {}]
  %s7 = inlined_call_operand.vmem [shape: f32[2,256,8], index: 7, kind: output, shape index: {}]
  %s8 = sld [smem:[#allocation0]]
  $region77: #{c1_forward.1} parent=0
    _
  %s10 = ssub.s32 1, %s8
  %s11 = scalar_select 0, %s10, %s8
  loop: start=0, step=1, limit=4
  $region2: #{c1_forward.1} parent=0 // loop_pre_header
    _
  $region3: #{c1_forward.1} parent=0 // loop_header
    %s13 = sphi 0, %s17
    %p14 = scmp.ge.s32.totalorder %s13, 4
    %s20 = sphi 0, %s32
    %s21 = sphi 0, %s28
    %s22 = sphi 0, %s20
    %s23 = sphi 0, %s21
    %s24 = sphi 0, %s22
    %s25 = sphi 0, %s23
    %s37 = sphi 0, %s39
    %s40 = sphi 0, %s37
    %s41 = sphi 0, %s40
    %s57 = sphi 0, %s41
    %s73 = sphi 0, %s75
    %s76 = sphi 0, %s73
    %s77 = sphi 0, %s76
    %s93 = sphi 0, %s77
    %s109 = sphi 0, %s111
    %s112 = sphi 0, %s109
    %s113 = sphi 0, %s112
    %s129 = sphi 0, %s113
    %s133 = sphi 0, %s133
    %s135 = sphi 0, %s133
    %s136 = sphi 0, %s135
    %s150 = sphi 0, %s136
    %s154 = sphi 0, %s154
    %s156 = sphi 0, %s154
    %s157 = sphi 0, %s156
    %s171 = sphi 0, %s157
    %s175 = sphi 0, %s175
    %s177 = sphi 0, %s175
    %s178 = sphi 0, %s177
    %s192 = sphi 0, %s178
    %s196 = sphi 0, %s196
    %s198 = sphi 0, %s196
    %s199 = sphi 0, %s198
    %s213 = sphi 0, %s199
    %s221 = sphi 0, %s223
    %s224 = sphi 0, %s221
    %s225 = sphi 0, %s224
    %s241 = sphi 0, %s225
  $region4: #{c1_forward.1} parent=0 // loop_header_branch
    %16 = sbr.rel (%p14) target = $region8
  $region5: #{c1_forward.1} parent=0 // loop_body
    %s18 = ssub.s32 %s13, 1
    %s19 = ssub.s32 %s13, 2
    %s26 = sadd.s32 1, %s21
    %p27 = scmp.ge.s32.totalorder %s26, 1
    %s28 = scalar_select %p27, 0, %s26
    %s29 = sadd.s32 1, %s20
    %s30 = scalar_select %p27, %s29, %s20
    %p31 = scmp.ge.s32.totalorder %s30, 2
    %s32 = scalar_select %p31, 0, %s30
    %s33 = ssub.s32 %s20, %s32
    %s34 = ssub.s32 %s21, %s28
    %s35 = sor.u32 %s33, %s34
    %p36 = scmp.eq.s32.totalorder %s35, 0
    %s38 = sadd.s32 %s37, 1
    %s39 = scalar_select %p36, %s37, %s38
    %p42 = pneg %p36
    %p43 = scmp.eq.s32.totalorder %s13, 1
    %p44 = por %p42, %p43
    %p45 = scmp.ne.s32.totalorder %s37, %s40
    %p46 = scmp.eq.s32.totalorder %s13, 0
    %p47 = por %p45, %p46
    %p48 = scmp.ne.s32.totalorder %s37, %s40
    %p49 = scmp.eq.s32.totalorder %s18, 1
    %p50 = por %p48, %p49
    %p51 = scmp.ne.s32.totalorder %s40, %s41
    %p52 = scmp.eq.s32.totalorder %s18, 0
    %p53 = por %p51, %p52
    %p54 = scmp.ne.s32.totalorder %s40, %s41
    %p55 = scmp.eq.s32.totalorder %s19, 1
    %p56 = por %p54, %p55
    %p58 = scmp.ne.s32.totalorder %s41, %s57
    %p59 = scmp.eq.s32.totalorder %s19, 0
    %p60 = por %p58, %p59
    %s61 = smul.u32 %s21, 16
    %s62 = ssub.s32 %s61, 1
    %p63 = scmp.gt.s32.totalorder %s62, 0
    %s64 = scalar_select %p63, %s62, 0
    %s65 = smul.u32 %s28, 16
    %s66 = ssub.s32 %s65, 1
    %p67 = scmp.gt.s32.totalorder %s66, 0
    %s68 = scalar_select %p67, %s66, 0
    %s69 = ssub.s32 %s20, %s32
    %s70 = ssub.s32 %s64, %s68
    %s71 = sor.u32 %s69, %s70
    %p72 = scmp.eq.s32.totalorder %s71, 0
    %s74 = sadd.s32 %s73, 1
    %s75 = scalar_select %p72, %s73, %s74
    %p78 = pneg %p72
    %p79 = scmp.eq.s32.totalorder %s13, 1
    %p80 = por %p78, %p79
    %p81 = scmp.ne.s32.totalorder %s73, %s76
    %p82 = scmp.eq.s32.totalorder %s13, 0
    %p83 = por %p81, %p82
    %p84 = scmp.ne.s32.totalorder %s73, %s76
    %p85 = scmp.eq.s32.totalorder %s18, 1
    %p86 = por %p84, %p85
    %p87 = scmp.ne.s32.totalorder %s76, %s77
    %p88 = scmp.eq.s32.totalorder %s18, 0
    %p89 = por %p87, %p88
    %p90 = scmp.ne.s32.totalorder %s76, %s77
    %p91 = scmp.eq.s32.totalorder %s19, 1
    %p92 = por %p90, %p91
    %p94 = scmp.ne.s32.totalorder %s77, %s93
    %p95 = scmp.eq.s32.totalorder %s19, 0
    %p96 = por %p94, %p95
    %s97 = sadd.s32 %s21, 1
    %s98 = smul.u32 %s97, 16
    %p99 = scmp.lt.s32.totalorder %s98, 15
    %s100 = scalar_select %p99, %s98, 15
    %s101 = sadd.s32 %s28, 1
    %s102 = smul.u32 %s101, 16
    %p103 = scmp.lt.s32.totalorder %s102, 15
    %s104 = scalar_select %p103, %s102, 15
    %s105 = ssub.s32 %s20, %s32
    %s106 = ssub.s32 %s100, %s104
    %s107 = sor.u32 %s105, %s106
    %p108 = scmp.eq.s32.totalorder %s107, 0
    %s110 = sadd.s32 %s109, 1
    %s111 = scalar_select %p108, %s109, %s110
    %p114 = pneg %p108
    %p115 = scmp.eq.s32.totalorder %s13, 1
    %p116 = por %p114, %p115
    %p117 = scmp.ne.s32.totalorder %s109, %s112
    %p118 = scmp.eq.s32.totalorder %s13, 0
    %p119 = por %p117, %p118
    %p120 = scmp.ne.s32.totalorder %s109, %s112
    %p121 = scmp.eq.s32.totalorder %s18, 1
    %p122 = por %p120, %p121
    %p123 = scmp.ne.s32.totalorder %s112, %s113
    %p124 = scmp.eq.s32.totalorder %s18, 0
    %p125 = por %p123, %p124
    %p126 = scmp.ne.s32.totalorder %s112, %s113
    %p127 = scmp.eq.s32.totalorder %s19, 1
    %p128 = por %p126, %p127
    %p130 = scmp.ne.s32.totalorder %s113, %s129
    %p131 = scmp.eq.s32.totalorder %s19, 0
    %p132 = por %p130, %p131
    %s134 = sadd.s32 %s133, 1
    %p137 = scmp.eq.s32.totalorder %s13, 1
    %p138 = scmp.ne.s32.totalorder %s133, %s135
    %p139 = scmp.eq.s32.totalorder %s13, 0
    %p140 = por %p138, %p139
    %p141 = scmp.ne.s32.totalorder %s133, %s135
    %p142 = scmp.eq.s32.totalorder %s18, 1
    %p143 = por %p141, %p142
    %p144 = scmp.ne.s32.totalorder %s135, %s136
    %p145 = scmp.eq.s32.totalorder %s18, 0
    %p146 = por %p144, %p145
    %p147 = scmp.ne.s32.totalorder %s135, %s136
    %p148 = scmp.eq.s32.totalorder %s19, 1
    %p149 = por %p147, %p148
    %p151 = scmp.ne.s32.totalorder %s136, %s150
    %p152 = scmp.eq.s32.totalorder %s19, 0
    %p153 = por %p151, %p152
    %s155 = sadd.s32 %s154, 1
    %p158 = scmp.eq.s32.totalorder %s13, 1
    %p159 = scmp.ne.s32.totalorder %s154, %s156
    %p160 = scmp.eq.s32.totalorder %s13, 0
    %p161 = por %p159, %p160
    %p162 = scmp.ne.s32.totalorder %s154, %s156
    %p163 = scmp.eq.s32.totalorder %s18, 1
    %p164 = por %p162, %p163
    %p165 = scmp.ne.s32.totalorder %s156, %s157
    %p166 = scmp.eq.s32.totalorder %s18, 0
    %p167 = por %p165, %p166
    %p168 = scmp.ne.s32.totalorder %s156, %s157
    %p169 = scmp.eq.s32.totalorder %s19, 1
    %p170 = por %p168, %p169
    %p172 = scmp.ne.s32.totalorder %s157, %s171
    %p173 = scmp.eq.s32.totalorder %s19, 0
    %p174 = por %p172, %p173
    %s176 = sadd.s32 %s175, 1
    %p179 = scmp.eq.s32.totalorder %s13, 1
    %p180 = scmp.ne.s32.totalorder %s175, %s177
    %p181 = scmp.eq.s32.totalorder %s13, 0
    %p182 = por %p180, %p181
    %p183 = scmp.ne.s32.totalorder %s175, %s177
    %p184 = scmp.eq.s32.totalorder %s18, 1
    %p185 = por %p183, %p184
    %p186 = scmp.ne.s32.totalorder %s177, %s178
    %p187 = scmp.eq.s32.totalorder %s18, 0
    %p188 = por %p186, %p187
    %p189 = scmp.ne.s32.totalorder %s177, %s178
    %p190 = scmp.eq.s32.totalorder %s19, 1
    %p191 = por %p189, %p190
    %p193 = scmp.ne.s32.totalorder %s178, %s192
    %p194 = scmp.eq.s32.totalorder %s19, 0
    %p195 = por %p193, %p194
    %s197 = sadd.s32 %s196, 1
    %p200 = scmp.eq.s32.totalorder %s13, 1
    %p201 = scmp.ne.s32.totalorder %s196, %s198
    %p202 = scmp.eq.s32.totalorder %s13, 0
    %p203 = por %p201, %p202
    %p204 = scmp.ne.s32.totalorder %s196, %s198
    %p205 = scmp.eq.s32.totalorder %s18, 1
    %p206 = por %p204, %p205
    %p207 = scmp.ne.s32.totalorder %s198, %s199
    %p208 = scmp.eq.s32.totalorder %s18, 0
    %p209 = por %p207, %p208
    %p210 = scmp.ne.s32.totalorder %s198, %s199
    %p211 = scmp.eq.s32.totalorder %s19, 1
    %p212 = por %p210, %p211
    %p214 = scmp.ne.s32.totalorder %s199, %s213
    %p215 = scmp.eq.s32.totalorder %s19, 0
    %p216 = por %p214, %p215
    %s217 = ssub.s32 %s20, %s32
    %s218 = ssub.s32 %s21, %s28
    %s219 = sor.u32 %s217, %s218
    %p220 = scmp.eq.s32.totalorder %s219, 0
    %s222 = sadd.s32 %s221, 1
    %s223 = scalar_select %p220, %s221, %s222
    %p226 = pneg %p220
    %p227 = scmp.eq.s32.totalorder %s13, 1
    %p228 = por %p226, %p227
    %p229 = scmp.ne.s32.totalorder %s221, %s224
    %p230 = scmp.eq.s32.totalorder %s13, 0
    %p231 = por %p229, %p230
    %p232 = scmp.ne.s32.totalorder %s221, %s224
    %p233 = scmp.eq.s32.totalorder %s18, 1
    %p234 = por %p232, %p233
    %p235 = scmp.ne.s32.totalorder %s224, %s225
    %p236 = scmp.eq.s32.totalorder %s18, 0
    %p237 = por %p235, %p236
    %p238 = scmp.ne.s32.totalorder %s224, %s225
    %p239 = scmp.eq.s32.totalorder %s19, 1
    %p240 = por %p238, %p239
    %p242 = scmp.ne.s32.totalorder %s225, %s241
    %p243 = scmp.eq.s32.totalorder %s19, 0
    %p244 = por %p242, %p243
    %p245 = scmp.le.s32.totalorder 1, %s13
    %p246 = scmp.lt.s32.totalorder %s13, 3
    %p247 = pnand %p245, %p246
    %p248 = pneg %p247
    // Predicated region
    $region9: #{c1_forward.1} parent=5 // pred_check
      _
    $region10: #{c1_forward.1} parent=5 // pred_check_branch
      %250 = sbr.rel (%p247) target = $region12
    $region11: #{c1_forward.1} parent=5 // pred_region
      %s251 = ssub.s32 %s13, 1
      // Predicated region
      $region13: #{c1_forward.1} parent=11 // pred_check
        %p252 = pneg %p146
      $region14: #{c1_forward.1} parent=11 // pred_check_branch
        %254 = sbr.rel (%p252) target = $region16
      $region15: #{c1_forward.1} parent=11 // pred_region
        _
      $region16: #{c1_forward.1} parent=11 // pred_fallthru
        _
      // Predicated region
      $region17: #{c1_forward.1} parent=11 // pred_check
        %p255 = pneg %p167
      $region18: #{c1_forward.1} parent=11 // pred_check_branch
        %257 = sbr.rel (%p255) target = $region20
      $region19: #{c1_forward.1} parent=11 // pred_region
        _
      $region20: #{c1_forward.1} parent=11 // pred_fallthru
        _
      // Predicated region
      $region21: #{c1_forward.1} parent=11 // pred_check
        %p258 = pneg %p188
      $region22: #{c1_forward.1} parent=11 // pred_check_branch
        %260 = sbr.rel (%p258) target = $region24
      $region23: #{c1_forward.1} parent=11 // pred_region
        _
      $region24: #{c1_forward.1} parent=11 // pred_fallthru
        _
      // Predicated region
      $region25: #{c1_forward.1} parent=11 // pred_check
        %p261 = pneg %p209
      $region26: #{c1_forward.1} parent=11 // pred_check_branch
        %263 = sbr.rel (%p261) target = $region28
      $region27: #{c1_forward.1} parent=11 // pred_region
        _
      $region28: #{c1_forward.1} parent=11 // pred_fallthru
        _
    $region12: #{c1_forward.1} parent=5 // pred_fallthru
      _
    %p264 = scmp.lt.s32.totalorder %s13, 2
    // Predicated region
    $region29: #{c1_forward.1} parent=5 // pred_check
      %p265 = pneg %p264
    $region30: #{c1_forward.1} parent=5 // pred_check_branch
      %267 = sbr.rel (%p265) target = $region32
    $region31: #{c1_forward.1} parent=5 // pred_region
      // Predicated region
      $region33: #{c1_forward.1} parent=31 // pred_check
        %p268 = pneg %p47
      $region34: #{c1_forward.1} parent=31 // pred_check_branch
        %270 = sbr.rel (%p268) target = $region36
      $region35: #{c1_forward.1} parent=31 // pred_region
        %s271 = smul.u32 32, %s21
        %p272 = scmp.lt.s32.totalorder %s20, 1
        %s273 = scalar_select %p272, %s20, 1
        %p274 = scmp.lt.s32.totalorder %s271, 31
        %s275 = scalar_select %p274, %s271, 31
        %s276 = smul.addr %s273, 32
        %s277 = sadd.s32 %s275, %s276
        %s278 = smul.addr %s277, 8
        %s279 = scalar_lea.vmem %s0, %s278
        %s280 = smul.u32 32, %s21
      $region36: #{c1_forward.1} parent=31 // pred_fallthru
        _
      // Predicated region
      $region37: #{c1_forward.1} parent=31 // pred_check
        %p281 = pneg %p83
      $region38: #{c1_forward.1} parent=31 // pred_check_branch
        %283 = sbr.rel (%p281) target = $region40
      $region39: #{c1_forward.1} parent=31 // pred_region
        %s284 = smul.u32 %s21, 16
        %s285 = ssub.s32 %s284, 1
        %p286 = scmp.gt.s32.totalorder %s285, 0
        %s287 = scalar_select %p286, %s285, 0
        %s288 = smul.u32 2, %s287
        %p289 = scmp.lt.s32.totalorder %s20, 1
        %s290 = scalar_select %p289, %s20, 1
        %p291 = scmp.lt.s32.totalorder %s288, 31
        %s292 = scalar_select %p291, %s288, 31
        %s293 = smul.addr %s290, 32
        %s294 = sadd.s32 %s292, %s293
        %s295 = smul.addr %s294, 8
        %s296 = scalar_lea.vmem %s1, %s295
        %s297 = smul.u32 %s21, 16
        %s298 = ssub.s32 %s297, 1
        %p299 = scmp.gt.s32.totalorder %s298, 0
        %s300 = scalar_select %p299, %s298, 0
        %s301 = smul.u32 2, %s300
      $region40: #{c1_forward.1} parent=31 // pred_fallthru
        _
      // Predicated region
      $region41: #{c1_forward.1} parent=31 // pred_check
        %p302 = pneg %p119
      $region42: #{c1_forward.1} parent=31 // pred_check_branch
        %304 = sbr.rel (%p302) target = $region44
      $region43: #{c1_forward.1} parent=31 // pred_region
        %s305 = sadd.s32 %s21, 1
        %s306 = smul.u32 %s305, 16
        %p307 = scmp.lt.s32.totalorder %s306, 15
        %s308 = scalar_select %p307, %s306, 15
        %s309 = smul.u32 2, %s308
        %p310 = scmp.lt.s32.totalorder %s20, 1
        %s311 = scalar_select %p310, %s20, 1
        %p312 = scmp.lt.s32.totalorder %s309, 31
        %s313 = scalar_select %p312, %s309, 31
        %s314 = smul.addr %s311, 32
        %s315 = sadd.s32 %s313, %s314
        %s316 = smul.addr %s315, 8
        %s317 = scalar_lea.vmem %s2, %s316
        %s318 = sadd.s32 %s21, 1
        %s319 = smul.u32 %s318, 16
        %p320 = scmp.lt.s32.totalorder %s319, 15
        %s321 = scalar_select %p320, %s319, 15
        %s322 = smul.u32 2, %s321
      $region44: #{c1_forward.1} parent=31 // pred_fallthru
        _
    $region32: #{c1_forward.1} parent=5 // pred_fallthru
      _
    %p323 = scmp.le.s32.totalorder 1, %s13
    %p324 = scmp.lt.s32.totalorder %s13, 3
    %p325 = pnand %p323, %p324
    %p326 = pneg %p325
    // Predicated region
    $region45: #{c1_forward.1} parent=5 // pred_check
      _
    $region46: #{c1_forward.1} parent=5 // pred_check_branch
      %328 = sbr.rel (%p325) target = $region48
    $region47: #{c1_forward.1} parent=5 // pred_region
      %s329 = ssub.s32 %s13, 1
      %s330 = smul.u32 32, %s23
      %p331 = scmp.lt.s32.totalorder %s22, 1
      %s332 = scalar_select %p331, %s22, 1
      %p333 = scmp.lt.s32.totalorder %s330, 31
      %s334 = scalar_select %p333, %s330, 31
      %s335 = smul.addr %s332, 32
      %s336 = sadd.s32 %s334, %s335
      %s337 = smul.addr %s336, 8
      %s338 = scalar_lea.vmem %s0, %s337
      %p339 = pneg %p53
      %p340 = pneg %p50
      %s341 = smul.u32 %s23, 16
      %s342 = ssub.s32 %s341, 1
      %p343 = scmp.gt.s32.totalorder %s342, 0
      %s344 = scalar_select %p343, %s342, 0
      %s345 = smul.u32 2, %s344
      %p346 = scmp.lt.s32.totalorder %s22, 1
      %s347 = scalar_select %p346, %s22, 1
      %p348 = scmp.lt.s32.totalorder %s345, 31
      %s349 = scalar_select %p348, %s345, 31
      %s350 = smul.addr %s347, 32
      %s351 = sadd.s32 %s349, %s350
      %s352 = smul.addr %s351, 8
      %s353 = scalar_lea.vmem %s1, %s352
      %p354 = pneg %p89
      %p355 = pneg %p86
      %s356 = sadd.s32 %s23, 1
      %s357 = smul.u32 %s356, 16
      %p358 = scmp.lt.s32.totalorder %s357, 15
      %s359 = scalar_select %p358, %s357, 15
      %s360 = smul.u32 2, %s359
      %p361 = scmp.lt.s32.totalorder %s22, 1
      %s362 = scalar_select %p361, %s22, 1
      %p363 = scmp.lt.s32.totalorder %s360, 31
      %s364 = scalar_select %p363, %s360, 31
      %s365 = smul.addr %s362, 32
      %s366 = sadd.s32 %s364, %s365
      %s367 = smul.addr %s366, 8
      %s368 = scalar_lea.vmem %s2, %s367
      %p369 = pneg %p125
      %p370 = pneg %p122
      %p371 = pneg %p146
      %p372 = pneg %p143
      %p373 = pneg %p167
      %p374 = pneg %p164
      %p375 = pneg %p188
      %p376 = pneg %p185
      %p377 = pneg %p209
      %p378 = pneg %p206
      %p379 = pneg %p237
      %p380 = pneg %p234
      %s381 = smul.u32 32, %s23
      %p382 = scmp.lt.s32.totalorder %s22, 1
      %s383 = scalar_select %p382, %s22, 1
      %p384 = scmp.lt.s32.totalorder %s381, 31
      %s385 = scalar_select %p384, %s381, 31
      %s386 = smul.addr %s383, 32
      %s387 = sadd.s32 %s385, %s386
      %s388 = smul.addr %s387, 8
      %s389 = scalar_lea.vmem %s7, %s388
      %s390 = smul.u32 32, %s23
      %p391 = scmp.lt.s32.totalorder %s22, 1
      %s392 = scalar_select %p391, %s22, 1
      %p393 = scmp.lt.s32.totalorder %s390, 31
      %s394 = scalar_select %p393, %s390, 31
      %s395 = smul.addr %s392, 32
      %s396 = sadd.s32 %s394, %s395
      %s397 = smul.addr %s396, 8
      %s398 = scalar_lea.vmem %s0, %s397
      %s399 = smul.u32 32, %s23
      %s400 = smul.u32 %s23, 16
      %s401 = ssub.s32 %s400, 1
      %p402 = scmp.gt.s32.totalorder %s401, 0
      %s403 = scalar_select %p402, %s401, 0
      %s404 = smul.u32 2, %s403
      %p405 = scmp.lt.s32.totalorder %s22, 1
      %s406 = scalar_select %p405, %s22, 1
      %p407 = scmp.lt.s32.totalorder %s404, 31
      %s408 = scalar_select %p407, %s404, 31
      %s409 = smul.addr %s406, 32
      %s410 = sadd.s32 %s408, %s409
      %s411 = smul.addr %s410, 8
      %s412 = scalar_lea.vmem %s1, %s411
      %s413 = smul.u32 %s23, 16
      %s414 = ssub.s32 %s413, 1
      %p415 = scmp.gt.s32.totalorder %s414, 0
      %s416 = scalar_select %p415, %s414, 0
      %s417 = smul.u32 2, %s416
      %s418 = sadd.s32 %s23, 1
      %s419 = smul.u32 %s418, 16
      %p420 = scmp.lt.s32.totalorder %s419, 15
      %s421 = scalar_select %p420, %s419, 15
      %s422 = smul.u32 2, %s421
      %p423 = scmp.lt.s32.totalorder %s22, 1
      %s424 = scalar_select %p423, %s22, 1
      %p425 = scmp.lt.s32.totalorder %s422, 31
      %s426 = scalar_select %p425, %s422, 31
      %s427 = smul.addr %s424, 32
      %s428 = sadd.s32 %s426, %s427
      %s429 = smul.addr %s428, 8
      %s430 = scalar_lea.vmem %s2, %s429
      %s431 = sadd.s32 %s23, 1
      %s432 = smul.u32 %s431, 16
      %p433 = scmp.lt.s32.totalorder %s432, 15
      %s434 = scalar_select %p433, %s432, 15
      %s435 = smul.u32 2, %s434
      %s436 = smul.u32 32, %s23
      %p437 = scmp.lt.s32.totalorder %s22, 1
      %s438 = scalar_select %p437, %s22, 1
      %p439 = scmp.lt.s32.totalorder %s436, 31
      %s440 = scalar_select %p439, %s436, 31
      %s441 = smul.addr %s438, 32
      %s442 = sadd.s32 %s440, %s441
      %s443 = smul.addr %s442, 8
      %s444 = scalar_lea.vmem %s7, %s443
      %s445 = smul.u32 32, %s23
      %v447 = vld [vmem:[%s3] sm:$0x3]
      %v448 = vld [vmem:[%s4] sm:$0x1]
      %v449 = vld [vmem:[%s398] sm:$0xff]
      %v450 = vld [vmem:[%s398 + $0x8] sm:$0xff]
      %v451 = vld [vmem:[%s398 + $0x10] sm:$0xff]
      %v452 = vld [vmem:[%s398 + $0x18] sm:$0xff]
      %v453 = vld [vmem:[%s398 + $0x20] sm:$0xff]
      %v454 = vld [vmem:[%s398 + $0x28] sm:$0xff]
      %v455 = vld [vmem:[%s398 + $0x30] sm:$0xff]
      %v456 = vld [vmem:[%s398 + $0x38] sm:$0xff]
      %v457 = vld [vmem:[%s398 + $0x40] sm:$0xff]
      %v458 = vld [vmem:[%s398 + $0x48] sm:$0xff]
      %v459 = vld [vmem:[%s398 + $0x50] sm:$0xff]
      %v460 = vld [vmem:[%s398 + $0x58] sm:$0xff]
      %v461 = vld [vmem:[%s398 + $0x60] sm:$0xff]
      %v462 = vld [vmem:[%s398 + $0x68] sm:$0xff]
      %v463 = vld [vmem:[%s398 + $0x70] sm:$0xff]
      %v464 = vld [vmem:[%s398 + $0x78] sm:$0xff]
      %v465 = vld [vmem:[%s398 + $0x80] sm:$0xff]
      %v466 = vld [vmem:[%s398 + $0x88] sm:$0xff]
      %v467 = vld [vmem:[%s398 + $0x90] sm:$0xff]
      %v468 = vld [vmem:[%s398 + $0x98] sm:$0xff]
      %v469 = vld [vmem:[%s398 + $0xa0] sm:$0xff]
      %v470 = vld [vmem:[%s398 + $0xa8] sm:$0xff]
      %v471 = vld [vmem:[%s398 + $0xb0] sm:$0xff]
      %v472 = vld [vmem:[%s398 + $0xb8] sm:$0xff]
      %v473 = vld [vmem:[%s398 + $0xc0] sm:$0xff]
      %v474 = vld [vmem:[%s398 + $0xc8] sm:$0xff]
      %v475 = vld [vmem:[%s398 + $0xd0] sm:$0xff]
      %v476 = vld [vmem:[%s398 + $0xd8] sm:$0xff]
      %v477 = vld [vmem:[%s398 + $0xe0] sm:$0xff]
      %v478 = vld [vmem:[%s398 + $0xe8] sm:$0xff]
      %v479 = vld [vmem:[%s398 + $0xf0] sm:$0xff]
      %v480 = vld [vmem:[%s398 + $0xf8] sm:$0xff]
      %v481 = vpack.c.bf16 %v450, %v449
      %v482 = vpack.c.bf16 %v452, %v451
      %v483 = vpack.c.bf16 %v454, %v453
      %v484 = vpack.c.bf16 %v456, %v455
      %v485 = vpack.c.bf16 %v458, %v457
      %v486 = vpack.c.bf16 %v460, %v459
      %v487 = vpack.c.bf16 %v462, %v461
      %v488 = vpack.c.bf16 %v464, %v463
      %v489 = vpack.c.bf16 %v466, %v465
      %v490 = vpack.c.bf16 %v468, %v467
      %v491 = vpack.c.bf16 %v470, %v469
      %v492 = vpack.c.bf16 %v472, %v471
      %v493 = vpack.c.bf16 %v474, %v473
      %v494 = vpack.c.bf16 %v476, %v475
      %v495 = vpack.c.bf16 %v478, %v477
      %v496 = vpack.c.bf16 %v480, %v479
      %v498 = vperm.slane %v448, 0
      %vm500 = vcmask 31744
      %v502 = vsel %vm500, %v481, 0
      %v505 = vsel %vm500, %v482, 0
      %v508 = vsel %vm500, %v483, 0
      %v511 = vsel %vm500, %v484, 0
      %v514 = vsel %vm500, %v485, 0
      %v517 = vsel %vm500, %v486, 0
      %v520 = vsel %vm500, %v487, 0
      %v523 = vsel %vm500, %v488, 0
      %v526 = vsel %vm500, %v489, 0
      %v529 = vsel %vm500, %v490, 0
      %v532 = vsel %vm500, %v491, 0
      %v535 = vsel %vm500, %v492, 0
      %v538 = vsel %vm500, %v493, 0
      %v541 = vsel %vm500, %v494, 0
      %v544 = vsel %vm500, %v495, 0
      %v547 = vsel %vm500, %v496, 0
      %vm549 = vcmask 1041408
      %v551 = vsel %vm549, %v447, 0
      %553 = vmatpush.bf16.msra.mxu0 0
      %554 = vmatpush.bf16.msra.mxu0 0
      %555 = vmatpush.bf16.msra.mxu0 0
      %556 = vmatpush.bf16.msra.mxu0 0
      %557 = vmatpush.bf16.msra.mxu0 0
      %558 = vmatpush.bf16.msra.mxu0 0
      %559 = vmatpush.bf16.msra.mxu0 0
      %560 = vmatpush.bf16.msra.mxu0 %v551
      %561 = vmatmul.bf16.gmra.mxu0 %v502
      %v562 = vpop.f32.mrf.mxu0
      %v563 = vadd.f32 %v498, %v562
      %v564 = vpop.f32.mrf.mxu0
      %v565 = vadd.f32 %v498, %v564
      %566 = vmatmul.bf16.gmra.mxu0 %v505
      %v567 = vpop.f32.mrf.mxu0
      %v568 = vadd.f32 %v498, %v567
      %v569 = vpop.f32.mrf.mxu0
      %v570 = vadd.f32 %v498, %v569
      %571 = vmatmul.bf16.gmra.mxu0 %v508
      %v572 = vpop.f32.mrf.mxu0
      %v573 = vadd.f32 %v498, %v572
      %v574 = vpop.f32.mrf.mxu0
      %v575 = vadd.f32 %v498, %v574
      %576 = vmatmul.bf16.gmra.mxu0 %v511
      %v577 = vpop.f32.mrf.mxu0
      %v578 = vadd.f32 %v498, %v577
      %v579 = vpop.f32.mrf.mxu0
      %v580 = vadd.f32 %v498, %v579
      %581 = vmatmul.bf16.gmra.mxu0 %v514
      %v582 = vpop.f32.mrf.mxu0
      %v583 = vadd.f32 %v498, %v582
      %v584 = vpop.f32.mrf.mxu0
      %v585 = vadd.f32 %v498, %v584
      %586 = vmatmul.bf16.gmra.mxu0 %v517
      %v587 = vpop.f32.mrf.mxu0
      %v588 = vadd.f32 %v498, %v587
      %v589 = vpop.f32.mrf.mxu0
      %v590 = vadd.f32 %v498, %v589
      %591 = vmatmul.bf16.gmra.mxu0 %v520
      %v592 = vpop.f32.mrf.mxu0
      %v593 = vadd.f32 %v498, %v592
      %v594 = vpop.f32.mrf.mxu0
      %v595 = vadd.f32 %v498, %v594
      %596 = vmatmul.bf16.gmra.mxu0 %v523
      %v597 = vpop.f32.mrf.mxu0
      %v598 = vadd.f32 %v498, %v597
      %v599 = vpop.f32.mrf.mxu0
      %v600 = vadd.f32 %v498, %v599
      %601 = vmatmul.bf16.gmra.mxu0 %v526
      %v602 = vpop.f32.mrf.mxu0
      %v603 = vadd.f32 %v498, %v602
      %v604 = vpop.f32.mrf.mxu0
      %v605 = vadd.f32 %v498, %v604
      %606 = vmatmul.bf16.gmra.mxu0 %v529
      %v607 = vpop.f32.mrf.mxu0
      %v608 = vadd.f32 %v498, %v607
      %v609 = vpop.f32.mrf.mxu0
      %v610 = vadd.f32 %v498, %v609
      %611 = vmatmul.bf16.gmra.mxu0 %v532
      %v612 = vpop.f32.mrf.mxu0
      %v613 = vadd.f32 %v498, %v612
      %v614 = vpop.f32.mrf.mxu0
      %v615 = vadd.f32 %v498, %v614
      %616 = vmatmul.bf16.gmra.mxu0 %v535
      %v617 = vpop.f32.mrf.mxu0
      %v618 = vadd.f32 %v498, %v617
      %v619 = vpop.f32.mrf.mxu0
      %v620 = vadd.f32 %v498, %v619
      %621 = vmatmul.bf16.gmra.mxu0 %v538
      %v622 = vpop.f32.mrf.mxu0
      %v623 = vadd.f32 %v498, %v622
      %v624 = vpop.f32.mrf.mxu0
      %v625 = vadd.f32 %v498, %v624
      %626 = vmatmul.bf16.gmra.mxu0 %v541
      %v627 = vpop.f32.mrf.mxu0
      %v628 = vadd.f32 %v498, %v627
      %v629 = vpop.f32.mrf.mxu0
      %v630 = vadd.f32 %v498, %v629
      %631 = vmatmul.bf16.gmra.mxu0 %v544
      %v632 = vpop.f32.mrf.mxu0
      %v633 = vadd.f32 %v498, %v632
      %v634 = vpop.f32.mrf.mxu0
      %v635 = vadd.f32 %v498, %v634
      %636 = vmatmul.bf16.gmra.mxu0 %v547
      %v637 = vpop.f32.mrf.mxu0
      %v638 = vadd.f32 %v498, %v637
      %v639 = vpop.f32.mrf.mxu0
      %v640 = vadd.f32 %v498, %v639
      %641 = vdwg.mxu0
      %v642 = vxor.u32 %v563, 2147483648
      %v643 = vxor.u32 %v565, 2147483648
      %v644 = vxor.u32 %v568, 2147483648
      %v645 = vxor.u32 %v570, 2147483648
      %v646 = vxor.u32 %v573, 2147483648
      %v647 = vxor.u32 %v575, 2147483648
      %v648 = vxor.u32 %v578, 2147483648
      %v649 = vxor.u32 %v580, 2147483648
      %v650 = vxor.u32 %v583, 2147483648
      %v651 = vxor.u32 %v585, 2147483648
      %v652 = vxor.u32 %v588, 2147483648
      %v653 = vxor.u32 %v590, 2147483648
      %v654 = vxor.u32 %v593, 2147483648
      %v655 = vxor.u32 %v595, 2147483648
      %v656 = vxor.u32 %v598, 2147483648
      %v657 = vxor.u32 %v600, 2147483648
      %v658 = vxor.u32 %v603, 2147483648
      %v659 = vxor.u32 %v605, 2147483648
      %v660 = vxor.u32 %v608, 2147483648
      %v661 = vxor.u32 %v610, 2147483648
      %v662 = vxor.u32 %v613, 2147483648
      %v663 = vxor.u32 %v615, 2147483648
      %v664 = vxor.u32 %v618, 2147483648
      %v665 = vxor.u32 %v620, 2147483648
      %v666 = vxor.u32 %v623, 2147483648
      %v667 = vxor.u32 %v625, 2147483648
      %v668 = vxor.u32 %v628, 2147483648
      %v669 = vxor.u32 %v630, 2147483648
      %v670 = vxor.u32 %v633, 2147483648
      %v671 = vxor.u32 %v635, 2147483648
      %v672 = vxor.u32 %v638, 2147483648
      %v673 = vxor.u32 %v640, 2147483648
      %v674 = vmul.f32 %v642, 1.442695
      %v675 = vpow.pop %v674
      %v676 = vmul.f32 %v643, 1.442695
      %v677 = vpow.pop %v676
      %v678 = vmul.f32 %v644, 1.442695
      %v679 = vpow.pop %v678
      %v680 = vmul.f32 %v645, 1.442695
      %v681 = vpow.pop %v680
      %v682 = vmul.f32 %v646, 1.442695
      %v683 = vpow.pop %v682
      %v684 = vmul.f32 %v647, 1.442695
      %v685 = vpow.pop %v684
      %v686 = vmul.f32 %v648, 1.442695
      %v687 = vpow.pop %v686
      %v688 = vmul.f32 %v649, 1.442695
      %v689 = vpow.pop %v688
      %v690 = vmul.f32 %v650, 1.442695
      %v691 = vpow.pop %v690
      %v692 = vmul.f32 %v651, 1.442695
      %v693 = vpow.pop %v692
      %v694 = vmul.f32 %v652, 1.442695
      %v695 = vpow.pop %v694
      %v696 = vmul.f32 %v653, 1.442695
      %v697 = vpow.pop %v696
      %v698 = vmul.f32 %v654, 1.442695
      %v699 = vpow.pop %v698
      %v700 = vmul.f32 %v655, 1.442695
      %v701 = vpow.pop %v700
      %v702 = vmul.f32 %v656, 1.442695
      %v703 = vpow.pop %v702
      %v704 = vmul.f32 %v657, 1.442695
      %v705 = vpow.pop %v704
      %v706 = vmul.f32 %v658, 1.442695
      %v707 = vpow.pop %v706
      %v708 = vmul.f32 %v659, 1.442695
      %v709 = vpow.pop %v708
      %v710 = vmul.f32 %v660, 1.442695
      %v711 = vpow.pop %v710
      %v712 = vmul.f32 %v661, 1.442695
      %v713 = vpow.pop %v712
      %v714 = vmul.f32 %v662, 1.442695
      %v715 = vpow.pop %v714
      %v716 = vmul.f32 %v663, 1.442695
      %v717 = vpow.pop %v716
      %v718 = vmul.f32 %v664, 1.442695
      %v719 = vpow.pop %v718
      %v720 = vmul.f32 %v665, 1.442695
      %v721 = vpow.pop %v720
      %v722 = vmul.f32 %v666, 1.442695
      %v723 = vpow.pop %v722
      %v724 = vmul.f32 %v667, 1.442695
      %v725 = vpow.pop %v724
      %v726 = vmul.f32 %v668, 1.442695
      %v727 = vpow.pop %v726
      %v728 = vmul.f32 %v669, 1.442695
      %v729 = vpow.pop %v728
      %v730 = vmul.f32 %v670, 1.442695
      %v731 = vpow.pop %v730
      %v732 = vmul.f32 %v671, 1.442695
      %v733 = vpow.pop %v732
      %v734 = vmul.f32 %v672, 1.442695
      %v735 = vpow.pop %v734
      %v736 = vmul.f32 %v673, 1.442695
      %v737 = vpow.pop %v736
      %v738 = vadd.f32 %v675, 1.0
      %v739 = vadd.f32 %v677, 1.0
      %v740 = vadd.f32 %v679, 1.0
      %v741 = vadd.f32 %v681, 1.0
      %v742 = vadd.f32 %v683, 1.0
      %v743 = vadd.f32 %v685, 1.0
      %v744 = vadd.f32 %v687, 1.0
      %v745 = vadd.f32 %v689, 1.0
      %v746 = vadd.f32 %v691, 1.0
      %v747 = vadd.f32 %v693, 1.0
      %v748 = vadd.f32 %v695, 1.0
      %v749 = vadd.f32 %v697, 1.0
      %v750 = vadd.f32 %v699, 1.0
      %v751 = vadd.f32 %v701, 1.0
      %v752 = vadd.f32 %v703, 1.0
      %v753 = vadd.f32 %v705, 1.0
      %v754 = vadd.f32 %v707, 1.0
      %v755 = vadd.f32 %v709, 1.0
      %v756 = vadd.f32 %v711, 1.0
      %v757 = vadd.f32 %v713, 1.0
      %v758 = vadd.f32 %v715, 1.0
      %v759 = vadd.f32 %v717, 1.0
      %v760 = vadd.f32 %v719, 1.0
      %v761 = vadd.f32 %v721, 1.0
      %v762 = vadd.f32 %v723, 1.0
      %v763 = vadd.f32 %v725, 1.0
      %v764 = vadd.f32 %v727, 1.0
      %v765 = vadd.f32 %v729, 1.0
      %v766 = vadd.f32 %v731, 1.0
      %v767 = vadd.f32 %v733, 1.0
      %v768 = vadd.f32 %v735, 1.0
      %v769 = vadd.f32 %v737, 1.0
      %v770 = vrcp.pop %v738
      %v771 = vmul.f32 %v738, %v770
      %v772 = vsub.f32 1.0, %v771
      %v773 = vmul.f32 %v770, %v772
      %v774 = vadd.f32 %v770, %v773
      %vm775 = vweird.f32 %v738
      %vm776 = vweird.f32 %v770
      %vm777 = vmor %vm775, %vm776
      %v778 = vsel %vm777, %v770, %v774
      %v779 = vand.u32 2147483647, %v738
      %vm780 = vcmp.eq.f32.partialorder %v779, 8.507059e+37
      %v781 = vand.u32 %v738, 2147483648
      %v782 = vor.u32 1.1754944e-38, %v781
      %v783 = vsel %vm780, %v782, %v778
      %v784 = vmul.f32 1.0, %v783
      %v785 = vrcp.pop %v739
      %v786 = vmul.f32 %v739, %v785
      %v787 = vsub.f32 1.0, %v786
      %v788 = vmul.f32 %v785, %v787
      %v789 = vadd.f32 %v785, %v788
      %vm790 = vweird.f32 %v739
      %vm791 = vweird.f32 %v785
      %vm792 = vmor %vm790, %vm791
      %v793 = vsel %vm792, %v785, %v789
      %v794 = vand.u32 2147483647, %v739
      %vm795 = vcmp.eq.f32.partialorder %v794, 8.507059e+37
      %v796 = vand.u32 %v739, 2147483648
      %v797 = vor.u32 1.1754944e-38, %v796
      %v798 = vsel %vm795, %v797, %v793
      %v799 = vmul.f32 1.0, %v798
      %v800 = vrcp.pop %v740
      %v801 = vmul.f32 %v740, %v800
      %v802 = vsub.f32 1.0, %v801
      %v803 = vmul.f32 %v800, %v802
      %v804 = vadd.f32 %v800, %v803
      %vm805 = vweird.f32 %v740
      %vm806 = vweird.f32 %v800
      %vm807 = vmor %vm805, %vm806
      %v808 = vsel %vm807, %v800, %v804
      %v809 = vand.u32 2147483647, %v740
      %vm810 = vcmp.eq.f32.partialorder %v809, 8.507059e+37
      %v811 = vand.u32 %v740, 2147483648
      %v812 = vor.u32 1.1754944e-38, %v811
      %v813 = vsel %vm810, %v812, %v808
      %v814 = vmul.f32 1.0, %v813
      %v815 = vrcp.pop %v741
      %v816 = vmul.f32 %v741, %v815
      %v817 = vsub.f32 1.0, %v816
      %v818 = vmul.f32 %v815, %v817
      %v819 = vadd.f32 %v815, %v818
      %vm820 = vweird.f32 %v741
      %vm821 = vweird.f32 %v815
      %vm822 = vmor %vm820, %vm821
      %v823 = vsel %vm822, %v815, %v819
      %v824 = vand.u32 2147483647, %v741
      %vm825 = vcmp.eq.f32.partialorder %v824, 8.507059e+37
      %v826 = vand.u32 %v741, 2147483648
      %v827 = vor.u32 1.1754944e-38, %v826
      %v828 = vsel %vm825, %v827, %v823
      %v829 = vmul.f32 1.0, %v828
      %v830 = vrcp.pop %v742
      %v831 = vmul.f32 %v742, %v830
      %v832 = vsub.f32 1.0, %v831
      %v833 = vmul.f32 %v830, %v832
      %v834 = vadd.f32 %v830, %v833
      %vm835 = vweird.f32 %v742
      %vm836 = vweird.f32 %v830
      %vm837 = vmor %vm835, %vm836
      %v838 = vsel %vm837, %v830, %v834
      %v839 = vand.u32 2147483647, %v742
      %vm840 = vcmp.eq.f32.partialorder %v839, 8.507059e+37
      %v841 = vand.u32 %v742, 2147483648
      %v842 = vor.u32 1.1754944e-38, %v841
      %v843 = vsel %vm840, %v842, %v838
      %v844 = vmul.f32 1.0, %v843
      %v845 = vrcp.pop %v743
      %v846 = vmul.f32 %v743, %v845
      %v847 = vsub.f32 1.0, %v846
      %v848 = vmul.f32 %v845, %v847
      %v849 = vadd.f32 %v845, %v848
      %vm850 = vweird.f32 %v743
      %vm851 = vweird.f32 %v845
      %vm852 = vmor %vm850, %vm851
      %v853 = vsel %vm852, %v845, %v849
      %v854 = vand.u32 2147483647, %v743
      %vm855 = vcmp.eq.f32.partialorder %v854, 8.507059e+37
      %v856 = vand.u32 %v743, 2147483648
      %v857 = vor.u32 1.1754944e-38, %v856
      %v858 = vsel %vm855, %v857, %v853
      %v859 = vmul.f32 1.0, %v858
      %v860 = vrcp.pop %v744
      %v861 = vmul.f32 %v744, %v860
      %v862 = vsub.f32 1.0, %v861
      %v863 = vmul.f32 %v860, %v862
      %v864 = vadd.f32 %v860, %v863
      %vm865 = vweird.f32 %v744
      %vm866 = vweird.f32 %v860
      %vm867 = vmor %vm865, %vm866
      %v868 = vsel %vm867, %v860, %v864
      %v869 = vand.u32 2147483647, %v744
      %vm870 = vcmp.eq.f32.partialorder %v869, 8.507059e+37
      %v871 = vand.u32 %v744, 2147483648
      %v872 = vor.u32 1.1754944e-38, %v871
      %v873 = vsel %vm870, %v872, %v868
      %v874 = vmul.f32 1.0, %v873
      %v875 = vrcp.pop %v745
      %v876 = vmul.f32 %v745, %v875
      %v877 = vsub.f32 1.0, %v876
      %v878 = vmul.f32 %v875, %v877
      %v879 = vadd.f32 %v875, %v878
      %vm880 = vweird.f32 %v745
      %vm881 = vweird.f32 %v875
      %vm882 = vmor %vm880, %vm881
      %v883 = vsel %vm882, %v875, %v879
      %v884 = vand.u32 2147483647, %v745
      %vm885 = vcmp.eq.f32.partialorder %v884, 8.507059e+37
      %v886 = vand.u32 %v745, 2147483648
      %v887 = vor.u32 1.1754944e-38, %v886
      %v888 = vsel %vm885, %v887, %v883
      %v889 = vmul.f32 1.0, %v888
      %v890 = vrcp.pop %v746
      %v891 = vmul.f32 %v746, %v890
      %v892 = vsub.f32 1.0, %v891
      %v893 = vmul.f32 %v890, %v892
      %v894 = vadd.f32 %v890, %v893
      %vm895 = vweird.f32 %v746
      %vm896 = vweird.f32 %v890
      %vm897 = vmor %vm895, %vm896
      %v898 = vsel %vm897, %v890, %v894
      %v899 = vand.u32 2147483647, %v746
      %vm900 = vcmp.eq.f32.partialorder %v899, 8.507059e+37
      %v901 = vand.u32 %v746, 2147483648
      %v902 = vor.u32 1.1754944e-38, %v901
      %v903 = vsel %vm900, %v902, %v898
      %v904 = vmul.f32 1.0, %v903
      %v905 = vrcp.pop %v747
      %v906 = vmul.f32 %v747, %v905
      %v907 = vsub.f32 1.0, %v906
      %v908 = vmul.f32 %v905, %v907
      %v909 = vadd.f32 %v905, %v908
      %vm910 = vweird.f32 %v747
      %vm911 = vweird.f32 %v905
      %vm912 = vmor %vm910, %vm911
      %v913 = vsel %vm912, %v905, %v909
      %v914 = vand.u32 2147483647, %v747
      %vm915 = vcmp.eq.f32.partialorder %v914, 8.507059e+37
      %v916 = vand.u32 %v747, 2147483648
      %v917 = vor.u32 1.1754944e-38, %v916
      %v918 = vsel %vm915, %v917, %v913
      %v919 = vmul.f32 1.0, %v918
      %v920 = vrcp.pop %v748
      %v921 = vmul.f32 %v748, %v920
      %v922 = vsub.f32 1.0, %v921
      %v923 = vmul.f32 %v920, %v922
      %v924 = vadd.f32 %v920, %v923
      %vm925 = vweird.f32 %v748
      %vm926 = vweird.f32 %v920
      %vm927 = vmor %vm925, %vm926
      %v928 = vsel %vm927, %v920, %v924
      %v929 = vand.u32 2147483647, %v748
      %vm930 = vcmp.eq.f32.partialorder %v929, 8.507059e+37
      %v931 = vand.u32 %v748, 2147483648
      %v932 = vor.u32 1.1754944e-38, %v931
      %v933 = vsel %vm930, %v932, %v928
      %v934 = vmul.f32 1.0, %v933
      %v935 = vrcp.pop %v749
      %v936 = vmul.f32 %v749, %v935
      %v937 = vsub.f32 1.0, %v936
      %v938 = vmul.f32 %v935, %v937
      %v939 = vadd.f32 %v935, %v938
      %vm940 = vweird.f32 %v749
      %vm941 = vweird.f32 %v935
      %vm942 = vmor %vm940, %vm941
      %v943 = vsel %vm942, %v935, %v939
      %v944 = vand.u32 2147483647, %v749
      %vm945 = vcmp.eq.f32.partialorder %v944, 8.507059e+37
      %v946 = vand.u32 %v749, 2147483648
      %v947 = vor.u32 1.1754944e-38, %v946
      %v948 = vsel %vm945, %v947, %v943
      %v949 = vmul.f32 1.0, %v948
      %v950 = vrcp.pop %v750
      %v951 = vmul.f32 %v750, %v950
      %v952 = vsub.f32 1.0, %v951
      %v953 = vmul.f32 %v950, %v952
      %v954 = vadd.f32 %v950, %v953
      %vm955 = vweird.f32 %v750
      %vm956 = vweird.f32 %v950
      %vm957 = vmor %vm955, %vm956
      %v958 = vsel %vm957, %v950, %v954
      %v959 = vand.u32 2147483647, %v750
      %vm960 = vcmp.eq.f32.partialorder %v959, 8.507059e+37
      %v961 = vand.u32 %v750, 2147483648
      %v962 = vor.u32 1.1754944e-38, %v961
      %v963 = vsel %vm960, %v962, %v958
      %v964 = vmul.f32 1.0, %v963
      %v965 = vrcp.pop %v751
      %v966 = vmul.f32 %v751, %v965
      %v967 = vsub.f32 1.0, %v966
      %v968 = vmul.f32 %v965, %v967
      %v969 = vadd.f32 %v965, %v968
      %vm970 = vweird.f32 %v751
      %vm971 = vweird.f32 %v965
      %vm972 = vmor %vm970, %vm971
      %v973 = vsel %vm972, %v965, %v969
      %v974 = vand.u32 2147483647, %v751
      %vm975 = vcmp.eq.f32.partialorder %v974, 8.507059e+37
      %v976 = vand.u32 %v751, 2147483648
      %v977 = vor.u32 1.1754944e-38, %v976
      %v978 = vsel %vm975, %v977, %v973
      %v979 = vmul.f32 1.0, %v978
      %v980 = vrcp.pop %v752
      %v981 = vmul.f32 %v752, %v980
      %v982 = vsub.f32 1.0, %v981
      %v983 = vmul.f32 %v980, %v982
      %v984 = vadd.f32 %v980, %v983
      %vm985 = vweird.f32 %v752
      %vm986 = vweird.f32 %v980
      %vm987 = vmor %vm985, %vm986
      %v988 = vsel %vm987, %v980, %v984
      %v989 = vand.u32 2147483647, %v752
      %vm990 = vcmp.eq.f32.partialorder %v989, 8.507059e+37
      %v991 = vand.u32 %v752, 2147483648
      %v992 = vor.u32 1.1754944e-38, %v991
      %v993 = vsel %vm990, %v992, %v988
      %v994 = vmul.f32 1.0, %v993
      %v995 = vrcp.pop %v753
      %v996 = vmul.f32 %v753, %v995
      %v997 = vsub.f32 1.0, %v996
      %v998 = vmul.f32 %v995, %v997
      %v999 = vadd.f32 %v995, %v998
      %vm1000 = vweird.f32 %v753
      %vm1001 = vweird.f32 %v995
      %vm1002 = vmor %vm1000, %vm1001
      %v1003 = vsel %vm1002, %v995, %v999
      %v1004 = vand.u32 2147483647, %v753
      %vm1005 = vcmp.eq.f32.partialorder %v1004, 8.507059e+37
      %v1006 = vand.u32 %v753, 2147483648
      %v1007 = vor.u32 1.1754944e-38, %v1006
      %v1008 = vsel %vm1005, %v1007, %v1003
      %v1009 = vmul.f32 1.0, %v1008
      %v1010 = vrcp.pop %v754
      %v1011 = vmul.f32 %v754, %v1010
      %v1012 = vsub.f32 1.0, %v1011
      %v1013 = vmul.f32 %v1010, %v1012
      %v1014 = vadd.f32 %v1010, %v1013
      %vm1015 = vweird.f32 %v754
      %vm1016 = vweird.f32 %v1010
      %vm1017 = vmor %vm1015, %vm1016
      %v1018 = vsel %vm1017, %v1010, %v1014
      %v1019 = vand.u32 2147483647, %v754
      %vm1020 = vcmp.eq.f32.partialorder %v1019, 8.507059e+37
      %v1021 = vand.u32 %v754, 2147483648
      %v1022 = vor.u32 1.1754944e-38, %v1021
      %v1023 = vsel %vm1020, %v1022, %v1018
      %v1024 = vmul.f32 1.0, %v1023
      %v1025 = vrcp.pop %v755
      %v1026 = vmul.f32 %v755, %v1025
      %v1027 = vsub.f32 1.0, %v1026
      %v1028 = vmul.f32 %v1025, %v1027
      %v1029 = vadd.f32 %v1025, %v1028
      %vm1030 = vweird.f32 %v755
      %vm1031 = vweird.f32 %v1025
      %vm1032 = vmor %vm1030, %vm1031
      %v1033 = vsel %vm1032, %v1025, %v1029
      %v1034 = vand.u32 2147483647, %v755
      %vm1035 = vcmp.eq.f32.partialorder %v1034, 8.507059e+37
      %v1036 = vand.u32 %v755, 2147483648
      %v1037 = vor.u32 1.1754944e-38, %v1036
      %v1038 = vsel %vm1035, %v1037, %v1033
      %v1039 = vmul.f32 1.0, %v1038
      %v1040 = vrcp.pop %v756
      %v1041 = vmul.f32 %v756, %v1040
      %v1042 = vsub.f32 1.0, %v1041
      %v1043 = vmul.f32 %v1040, %v1042
      %v1044 = vadd.f32 %v1040, %v1043
      %vm1045 = vweird.f32 %v756
      %vm1046 = vweird.f32 %v1040
      %vm1047 = vmor %vm1045, %vm1046
      %v1048 = vsel %vm1047, %v1040, %v1044
      %v1049 = vand.u32 2147483647, %v756
      %vm1050 = vcmp.eq.f32.partialorder %v1049, 8.507059e+37
      %v1051 = vand.u32 %v756, 2147483648
      %v1052 = vor.u32 1.1754944e-38, %v1051
      %v1053 = vsel %vm1050, %v1052, %v1048
      %v1054 = vmul.f32 1.0, %v1053
      %v1055 = vrcp.pop %v757
      %v1056 = vmul.f32 %v757, %v1055
      %v1057 = vsub.f32 1.0, %v1056
      %v1058 = vmul.f32 %v1055, %v1057
      %v1059 = vadd.f32 %v1055, %v1058
      %vm1060 = vweird.f32 %v757
      %vm1061 = vweird.f32 %v1055
      %vm1062 = vmor %vm1060, %vm1061
      %v1063 = vsel %vm1062, %v1055, %v1059
      %v1064 = vand.u32 2147483647, %v757
      %vm1065 = vcmp.eq.f32.partialorder %v1064, 8.507059e+37
      %v1066 = vand.u32 %v757, 2147483648
      %v1067 = vor.u32 1.1754944e-38, %v1066
      %v1068 = vsel %vm1065, %v1067, %v1063
      %v1069 = vmul.f32 1.0, %v1068
      %v1070 = vrcp.pop %v758
      %v1071 = vmul.f32 %v758, %v1070
      %v1072 = vsub.f32 1.0, %v1071
      %v1073 = vmul.f32 %v1070, %v1072
      %v1074 = vadd.f32 %v1070, %v1073
      %vm1075 = vweird.f32 %v758
      %vm1076 = vweird.f32 %v1070
      %vm1077 = vmor %vm1075, %vm1076
      %v1078 = vsel %vm1077, %v1070, %v1074
      %v1079 = vand.u32 2147483647, %v758
      %vm1080 = vcmp.eq.f32.partialorder %v1079, 8.507059e+37
      %v1081 = vand.u32 %v758, 2147483648
      %v1082 = vor.u32 1.1754944e-38, %v1081
      %v1083 = vsel %vm1080, %v1082, %v1078
      %v1084 = vmul.f32 1.0, %v1083
      %v1085 = vrcp.pop %v759
      %v1086 = vmul.f32 %v759, %v1085
      %v1087 = vsub.f32 1.0, %v1086
      %v1088 = vmul.f32 %v1085, %v1087
      %v1089 = vadd.f32 %v1085, %v1088
      %vm1090 = vweird.f32 %v759
      %vm1091 = vweird.f32 %v1085
      %vm1092 = vmor %vm1090, %vm1091
      %v1093 = vsel %vm1092, %v1085, %v1089
      %v1094 = vand.u32 2147483647, %v759
      %vm1095 = vcmp.eq.f32.partialorder %v1094, 8.507059e+37
      %v1096 = vand.u32 %v759, 2147483648
      %v1097 = vor.u32 1.1754944e-38, %v1096
      %v1098 = vsel %vm1095, %v1097, %v1093
      %v1099 = vmul.f32 1.0, %v1098
      %v1100 = vrcp.pop %v760
      %v1101 = vmul.f32 %v760, %v1100
      %v1102 = vsub.f32 1.0, %v1101
      %v1103 = vmul.f32 %v1100, %v1102
      %v1104 = vadd.f32 %v1100, %v1103
      %vm1105 = vweird.f32 %v760
      %vm1106 = vweird.f32 %v1100
      %vm1107 = vmor %vm1105, %vm1106
      %v1108 = vsel %vm1107, %v1100, %v1104
      %v1109 = vand.u32 2147483647, %v760
      %vm1110 = vcmp.eq.f32.partialorder %v1109, 8.507059e+37
      %v1111 = vand.u32 %v760, 2147483648
      %v1112 = vor.u32 1.1754944e-38, %v1111
      %v1113 = vsel %vm1110, %v1112, %v1108
      %v1114 = vmul.f32 1.0, %v1113
      %v1115 = vrcp.pop %v761
      %v1116 = vmul.f32 %v761, %v1115
      %v1117 = vsub.f32 1.0, %v1116
      %v1118 = vmul.f32 %v1115, %v1117
      %v1119 = vadd.f32 %v1115, %v1118
      %vm1120 = vweird.f32 %v761
      %vm1121 = vweird.f32 %v1115
      %vm1122 = vmor %vm1120, %vm1121
      %v1123 = vsel %vm1122, %v1115, %v1119
      %v1124 = vand.u32 2147483647, %v761
      %vm1125 = vcmp.eq.f32.partialorder %v1124, 8.507059e+37
      %v1126 = vand.u32 %v761, 2147483648
      %v1127 = vor.u32 1.1754944e-38, %v1126
      %v1128 = vsel %vm1125, %v1127, %v1123
      %v1129 = vmul.f32 1.0, %v1128
      %v1130 = vrcp.pop %v762
      %v1131 = vmul.f32 %v762, %v1130
      %v1132 = vsub.f32 1.0, %v1131
      %v1133 = vmul.f32 %v1130, %v1132
      %v1134 = vadd.f32 %v1130, %v1133
      %vm1135 = vweird.f32 %v762
      %vm1136 = vweird.f32 %v1130
      %vm1137 = vmor %vm1135, %vm1136
      %v1138 = vsel %vm1137, %v1130, %v1134
      %v1139 = vand.u32 2147483647, %v762
      %vm1140 = vcmp.eq.f32.partialorder %v1139, 8.507059e+37
      %v1141 = vand.u32 %v762, 2147483648
      %v1142 = vor.u32 1.1754944e-38, %v1141
      %v1143 = vsel %vm1140, %v1142, %v1138
      %v1144 = vmul.f32 1.0, %v1143
      %v1145 = vrcp.pop %v763
      %v1146 = vmul.f32 %v763, %v1145
      %v1147 = vsub.f32 1.0, %v1146
      %v1148 = vmul.f32 %v1145, %v1147
      %v1149 = vadd.f32 %v1145, %v1148
      %vm1150 = vweird.f32 %v763
      %vm1151 = vweird.f32 %v1145
      %vm1152 = vmor %vm1150, %vm1151
      %v1153 = vsel %vm1152, %v1145, %v1149
      %v1154 = vand.u32 2147483647, %v763
      %vm1155 = vcmp.eq.f32.partialorder %v1154, 8.507059e+37
      %v1156 = vand.u32 %v763, 2147483648
      %v1157 = vor.u32 1.1754944e-38, %v1156
      %v1158 = vsel %vm1155, %v1157, %v1153
      %v1159 = vmul.f32 1.0, %v1158
      %v1160 = vrcp.pop %v764
      %v1161 = vmul.f32 %v764, %v1160
      %v1162 = vsub.f32 1.0, %v1161
      %v1163 = vmul.f32 %v1160, %v1162
      %v1164 = vadd.f32 %v1160, %v1163
      %vm1165 = vweird.f32 %v764
      %vm1166 = vweird.f32 %v1160
      %vm1167 = vmor %vm1165, %vm1166
      %v1168 = vsel %vm1167, %v1160, %v1164
      %v1169 = vand.u32 2147483647, %v764
      %vm1170 = vcmp.eq.f32.partialorder %v1169, 8.507059e+37
      %v1171 = vand.u32 %v764, 2147483648
      %v1172 = vor.u32 1.1754944e-38, %v1171
      %v1173 = vsel %vm1170, %v1172, %v1168
      %v1174 = vmul.f32 1.0, %v1173
      %v1175 = vrcp.pop %v765
      %v1176 = vmul.f32 %v765, %v1175
      %v1177 = vsub.f32 1.0, %v1176
      %v1178 = vmul.f32 %v1175, %v1177
      %v1179 = vadd.f32 %v1175, %v1178
      %vm1180 = vweird.f32 %v765
      %vm1181 = vweird.f32 %v1175
      %vm1182 = vmor %vm1180, %vm1181
      %v1183 = vsel %vm1182, %v1175, %v1179
      %v1184 = vand.u32 2147483647, %v765
      %vm1185 = vcmp.eq.f32.partialorder %v1184, 8.507059e+37
      %v1186 = vand.u32 %v765, 2147483648
      %v1187 = vor.u32 1.1754944e-38, %v1186
      %v1188 = vsel %vm1185, %v1187, %v1183
      %v1189 = vmul.f32 1.0, %v1188
      %v1190 = vrcp.pop %v766
      %v1191 = vmul.f32 %v766, %v1190
      %v1192 = vsub.f32 1.0, %v1191
      %v1193 = vmul.f32 %v1190, %v1192
      %v1194 = vadd.f32 %v1190, %v1193
      %vm1195 = vweird.f32 %v766
      %vm1196 = vweird.f32 %v1190
      %vm1197 = vmor %vm1195, %vm1196
      %v1198 = vsel %vm1197, %v1190, %v1194
      %v1199 = vand.u32 2147483647, %v766
      %vm1200 = vcmp.eq.f32.partialorder %v1199, 8.507059e+37
      %v1201 = vand.u32 %v766, 2147483648
      %v1202 = vor.u32 1.1754944e-38, %v1201
      %v1203 = vsel %vm1200, %v1202, %v1198
      %v1204 = vmul.f32 1.0, %v1203
      %v1205 = vrcp.pop %v767
      %v1206 = vmul.f32 %v767, %v1205
      %v1207 = vsub.f32 1.0, %v1206
      %v1208 = vmul.f32 %v1205, %v1207
      %v1209 = vadd.f32 %v1205, %v1208
      %vm1210 = vweird.f32 %v767
      %vm1211 = vweird.f32 %v1205
      %vm1212 = vmor %vm1210, %vm1211
      %v1213 = vsel %vm1212, %v1205, %v1209
      %v1214 = vand.u32 2147483647, %v767
      %vm1215 = vcmp.eq.f32.partialorder %v1214, 8.507059e+37
      %v1216 = vand.u32 %v767, 2147483648
      %v1217 = vor.u32 1.1754944e-38, %v1216
      %v1218 = vsel %vm1215, %v1217, %v1213
      %v1219 = vmul.f32 1.0, %v1218
      %v1220 = vrcp.pop %v768
      %v1221 = vmul.f32 %v768, %v1220
      %v1222 = vsub.f32 1.0, %v1221
      %v1223 = vmul.f32 %v1220, %v1222
      %v1224 = vadd.f32 %v1220, %v1223
      %vm1225 = vweird.f32 %v768
      %vm1226 = vweird.f32 %v1220
      %vm1227 = vmor %vm1225, %vm1226
      %v1228 = vsel %vm1227, %v1220, %v1224
      %v1229 = vand.u32 2147483647, %v768
      %vm1230 = vcmp.eq.f32.partialorder %v1229, 8.507059e+37
      %v1231 = vand.u32 %v768, 2147483648
      %v1232 = vor.u32 1.1754944e-38, %v1231
      %v1233 = vsel %vm1230, %v1232, %v1228
      %v1234 = vmul.f32 1.0, %v1233
      %v1235 = vrcp.pop %v769
      %v1236 = vmul.f32 %v769, %v1235
      %v1237 = vsub.f32 1.0, %v1236
      %v1238 = vmul.f32 %v1235, %v1237
      %v1239 = vadd.f32 %v1235, %v1238
      %vm1240 = vweird.f32 %v769
      %vm1241 = vweird.f32 %v1235
      %vm1242 = vmor %vm1240, %vm1241
      %v1243 = vsel %vm1242, %v1235, %v1239
      %v1244 = vand.u32 2147483647, %v769
      %vm1245 = vcmp.eq.f32.partialorder %v1244, 8.507059e+37
      %v1246 = vand.u32 %v769, 2147483648
      %v1247 = vor.u32 1.1754944e-38, %v1246
      %v1248 = vsel %vm1245, %v1247, %v1243
      %v1249 = vmul.f32 1.0, %v1248
      %v1250 = vmul.f32 %v563, %v784
      %v1251 = vmul.f32 %v565, %v799
      %v1252 = vmul.f32 %v568, %v814
      %v1253 = vmul.f32 %v570, %v829
      %v1254 = vmul.f32 %v573, %v844
      %v1255 = vmul.f32 %v575, %v859
      %v1256 = vmul.f32 %v578, %v874
      %v1257 = vmul.f32 %v580, %v889
      %v1258 = vmul.f32 %v583, %v904
      %v1259 = vmul.f32 %v585, %v919
      %v1260 = vmul.f32 %v588, %v934
      %v1261 = vmul.f32 %v590, %v949
      %v1262 = vmul.f32 %v593, %v964
      %v1263 = vmul.f32 %v595, %v979
      %v1264 = vmul.f32 %v598, %v994
      %v1265 = vmul.f32 %v600, %v1009
      %v1266 = vmul.f32 %v603, %v1024
      %v1267 = vmul.f32 %v605, %v1039
      %v1268 = vmul.f32 %v608, %v1054
      %v1269 = vmul.f32 %v610, %v1069
      %v1270 = vmul.f32 %v613, %v1084
      %v1271 = vmul.f32 %v615, %v1099
      %v1272 = vmul.f32 %v618, %v1114
      %v1273 = vmul.f32 %v620, %v1129
      %v1274 = vmul.f32 %v623, %v1144
      %v1275 = vmul.f32 %v625, %v1159
      %v1276 = vmul.f32 %v628, %v1174
      %v1277 = vmul.f32 %v630, %v1189
      %v1278 = vmul.f32 %v633, %v1204
      %v1279 = vmul.f32 %v635, %v1219
      %v1280 = vmul.f32 %v638, %v1234
      %v1281 = vmul.f32 %v640, %v1249
      %vm1282 = vcmask 60419
      %1283 = vst.msk [vmem:[#allocation2] sm:$0x8] %vm1282, 0
      %1284 = vst.msk [vmem:[#allocation2 + $0x10] sm:$0x8] %vm1282, 0
      %1285 = vst.msk [vmem:[#allocation2 + $0x20] sm:$0x8] %vm1282, 0
      %1286 = vst.msk [vmem:[#allocation2 + $0x30] sm:$0x8] %vm1282, 0
      %1287 = vst.msk [vmem:[#allocation2 + $0x40] sm:$0x8] %vm1282, 0
      %1288 = vst.msk [vmem:[#allocation2 + $0x50] sm:$0x8] %vm1282, 0
      %1289 = vst.msk [vmem:[#allocation2 + $0x60] sm:$0x8] %vm1282, 0
      %1290 = vst.msk [vmem:[#allocation2 + $0x70] sm:$0x8] %vm1282, 0
      %1291 = vst.msk [vmem:[#allocation2 + $0x80] sm:$0x8] %vm1282, 0
      %1292 = vst.msk [vmem:[#allocation2 + $0x90] sm:$0x8] %vm1282, 0
      %1293 = vst.msk [vmem:[#allocation2 + $0xa0] sm:$0x8] %vm1282, 0
      %1294 = vst.msk [vmem:[#allocation2 + $0xb0] sm:$0x8] %vm1282, 0
      %1295 = vst.msk [vmem:[#allocation2 + $0xc0] sm:$0x8] %vm1282, 0
      %1296 = vst.msk [vmem:[#allocation2 + $0xd0] sm:$0x8] %vm1282, 0
      %1297 = vst.msk [vmem:[#allocation2 + $0xe0] sm:$0x8] %vm1282, 0
      %1298 = vst.msk [vmem:[#allocation2 + $0xf0] sm:$0x8] %vm1282, 0
      %1299 = vst.msk [vmem:[#allocation2 + $0x100] sm:$0x8] %vm1282, 0
      %1300 = vst.msk [vmem:[#allocation2 + $0x110] sm:$0x8] %vm1282, 0
      %vm1301 = vcmask 57344
      %1302 = vst.msk [vmem:[#allocation2 + $0xc] sm:$0x1] %vm1301, 0
      %1303 = vst.msk [vmem:[#allocation2 + $0x1c] sm:$0x1] %vm1301, 0
      %1304 = vst.msk [vmem:[#allocation2 + $0x2c] sm:$0x1] %vm1301, 0
      %1305 = vst.msk [vmem:[#allocation2 + $0x3c] sm:$0x1] %vm1301, 0
      %1306 = vst.msk [vmem:[#allocation2 + $0x4c] sm:$0x1] %vm1301, 0
      %1307 = vst.msk [vmem:[#allocation2 + $0x5c] sm:$0x1] %vm1301, 0
      %1308 = vst.msk [vmem:[#allocation2 + $0x6c] sm:$0x1] %vm1301, 0
      %1309 = vst.msk [vmem:[#allocation2 + $0x7c] sm:$0x1] %vm1301, 0
      %1310 = vst.msk [vmem:[#allocation2 + $0x8c] sm:$0x1] %vm1301, 0
      %1311 = vst.msk [vmem:[#allocation2 + $0x9c] sm:$0x1] %vm1301, 0
      %1312 = vst.msk [vmem:[#allocation2 + $0xac] sm:$0x1] %vm1301, 0
      %1313 = vst.msk [vmem:[#allocation2 + $0xbc] sm:$0x1] %vm1301, 0
      %1314 = vst.msk [vmem:[#allocation2 + $0xcc] sm:$0x1] %vm1301, 0
      %1315 = vst.msk [vmem:[#allocation2 + $0xdc] sm:$0x1] %vm1301, 0
      %1316 = vst.msk [vmem:[#allocation2 + $0xec] sm:$0x1] %vm1301, 0
      %1317 = vst.msk [vmem:[#allocation2 + $0xfc] sm:$0x1] %vm1301, 0
      %1318 = vst.msk [vmem:[#allocation2 + $0x10c] sm:$0x1] %vm1301, 0
      %1319 = vst.msk [vmem:[#allocation2 + $0x11c] sm:$0x1] %vm1301, 0
      %v1320 = vpack.c.bf16 %v1250, %v1250
      %v1321 = vpack.c.bf16 %v1251, %v1251
      %v1322 = vpack.c.bf16 %v1252, %v1252
      %v1323 = vpack.c.bf16 %v1253, %v1253
      %v1324 = vpack.c.bf16 %v1254, %v1254
      %v1325 = vpack.c.bf16 %v1255, %v1255
      %v1326 = vpack.c.bf16 %v1256, %v1256
      %v1327 = vpack.c.bf16 %v1257, %v1257
      %v1328 = vpack.c.bf16 %v1258, %v1258
      %v1329 = vpack.c.bf16 %v1259, %v1259
      %v1330 = vpack.c.bf16 %v1260, %v1260
      %v1331 = vpack.c.bf16 %v1261, %v1261
      %v1332 = vpack.c.bf16 %v1262, %v1262
      %v1333 = vpack.c.bf16 %v1263, %v1263
      %v1334 = vpack.c.bf16 %v1264, %v1264
      %v1335 = vpack.c.bf16 %v1265, %v1265
      %v1336 = vpack.c.bf16 %v1266, %v1266
      %v1337 = vpack.c.bf16 %v1267, %v1267
      %v1338 = vpack.c.bf16 %v1268, %v1268
      %v1339 = vpack.c.bf16 %v1269, %v1269
      %v1340 = vpack.c.bf16 %v1270, %v1270
      %v1341 = vpack.c.bf16 %v1271, %v1271
      %v1342 = vpack.c.bf16 %v1272, %v1272
      %v1343 = vpack.c.bf16 %v1273, %v1273
      %v1344 = vpack.c.bf16 %v1274, %v1274
      %v1345 = vpack.c.bf16 %v1275, %v1275
      %v1346 = vpack.c.bf16 %v1276, %v1276
      %v1347 = vpack.c.bf16 %v1277, %v1277
      %v1348 = vpack.c.bf16 %v1278, %v1278
      %v1349 = vpack.c.bf16 %v1279, %v1279
      %v1350 = vpack.c.bf16 %v1280, %v1280
      %v1351 = vpack.c.bf16 %v1281, %v1281
      %s1352 = scalar_lea.vmem [#allocation2], 16
      %vm1353 = vcmask 60416
      %1354 = vst.msk [vmem:[%s1352 + $0x4] sm:$0xf] %vm1353, %v1320
      %1355 = vst.msk [vmem:[%s1352 + $0x8] sm:$0xf] %vm1353, %v1321
      %1356 = vst.msk [vmem:[%s1352 + $0x14] sm:$0xf] %vm1353, %v1322
      %1357 = vst.msk [vmem:[%s1352 + $0x18] sm:$0xf] %vm1353, %v1323
      %1358 = vst.msk [vmem:[%s1352 + $0x24] sm:$0xf] %vm1353, %v1324
      %1359 = vst.msk [vmem:[%s1352 + $0x28] sm:$0xf] %vm1353, %v1325
      %1360 = vst.msk [vmem:[%s1352 + $0x34] sm:$0xf] %vm1353, %v1326
      %1361 = vst.msk [vmem:[%s1352 + $0x38] sm:$0xf] %vm1353, %v1327
      %1362 = vst.msk [vmem:[%s1352 + $0x44] sm:$0xf] %vm1353, %v1328
      %1363 = vst.msk [vmem:[%s1352 + $0x48] sm:$0xf] %vm1353, %v1329
      %1364 = vst.msk [vmem:[%s1352 + $0x54] sm:$0xf] %vm1353, %v1330
      %1365 = vst.msk [vmem:[%s1352 + $0x58] sm:$0xf] %vm1353, %v1331
      %1366 = vst.msk [vmem:[%s1352 + $0x64] sm:$0xf] %vm1353, %v1332
      %1367 = vst.msk [vmem:[%s1352 + $0x68] sm:$0xf] %vm1353, %v1333
      %1368 = vst.msk [vmem:[%s1352 + $0x74] sm:$0xf] %vm1353, %v1334
      %1369 = vst.msk [vmem:[%s1352 + $0x78] sm:$0xf] %vm1353, %v1335
      %1370 = vst.msk [vmem:[%s1352 + $0x84] sm:$0xf] %vm1353, %v1336
      %1371 = vst.msk [vmem:[%s1352 + $0x88] sm:$0xf] %vm1353, %v1337
      %1372 = vst.msk [vmem:[%s1352 + $0x94] sm:$0xf] %vm1353, %v1338
      %1373 = vst.msk [vmem:[%s1352 + $0x98] sm:$0xf] %vm1353, %v1339
      %1374 = vst.msk [vmem:[%s1352 + $0xa4] sm:$0xf] %vm1353, %v1340
      %1375 = vst.msk [vmem:[%s1352 + $0xa8] sm:$0xf] %vm1353, %v1341
      %1376 = vst.msk [vmem:[%s1352 + $0xb4] sm:$0xf] %vm1353, %v1342
      %1377 = vst.msk [vmem:[%s1352 + $0xb8] sm:$0xf] %vm1353, %v1343
      %1378 = vst.msk [vmem:[%s1352 + $0xc4] sm:$0xf] %vm1353, %v1344
      %1379 = vst.msk [vmem:[%s1352 + $0xc8] sm:$0xf] %vm1353, %v1345
      %1380 = vst.msk [vmem:[%s1352 + $0xd4] sm:$0xf] %vm1353, %v1346
      %1381 = vst.msk [vmem:[%s1352 + $0xd8] sm:$0xf] %vm1353, %v1347
      %1382 = vst.msk [vmem:[%s1352 + $0xe4] sm:$0xf] %vm1353, %v1348
      %1383 = vst.msk [vmem:[%s1352 + $0xe8] sm:$0xf] %vm1353, %v1349
      %1384 = vst.msk [vmem:[%s1352 + $0xf4] sm:$0xf] %vm1353, %v1350
      %1385 = vst.msk [vmem:[%s1352 + $0xf8] sm:$0xf] %vm1353, %v1351
      %p1386 = scmp.gt.s32.totalorder %s23, 0
      // Predicated region
      $region49: #{c1_forward.1} parent=47 // pred_check
        %p1387 = pneg %p1386
      $region50: #{c1_forward.1} parent=47 // pred_check_branch
        %1389 = sbr.rel (%p1387) target = $region52
      $region51: #{c1_forward.1} parent=47 // pred_region
        %v1390 = vld [vmem:[%s412] sm:$0xff]
        %v1391 = vld [vmem:[%s412 + $0x8] sm:$0xff]
        %v1392 = vpack.c.bf16 %v1391, %v1390
        %v1394 = vsel %vm500, %v1392, 0
        %1396 = vmatpush.bf16.msra.mxu0 0
        %1397 = vmatpush.bf16.msra.mxu0 0
        %1398 = vmatpush.bf16.msra.mxu0 0
        %1399 = vmatpush.bf16.msra.mxu0 0
        %1400 = vmatpush.bf16.msra.mxu0 0
        %1401 = vmatpush.bf16.msra.mxu0 0
        %1402 = vmatpush.bf16.msra.mxu0 0
        %1403 = vmatpush.bf16.msra.mxu0 %v551
        %1404 = vmatmul.bf16.gmra.mxu0 %v1394
        %v1405 = vpop.f32.mrf.mxu0
        %v1406 = vadd.f32 %v498, %v1405
        %v1407 = vpop.f32.mrf.mxu0
        %v1408 = vadd.f32 %v498, %v1407
        %1409 = vdwg.mxu0
        %v1410 = vxor.u32 %v1406, 2147483648
        %v1411 = vxor.u32 %v1408, 2147483648
        %v1412 = vmul.f32 %v1410, 1.442695
        %v1413 = vpow.pop %v1412
        %v1414 = vmul.f32 %v1411, 1.442695
        %v1415 = vpow.pop %v1414
        %v1416 = vadd.f32 %v1413, 1.0
        %v1417 = vadd.f32 %v1415, 1.0
        %v1418 = vrcp.pop %v1416
        %v1419 = vmul.f32 %v1416, %v1418
        %v1420 = vsub.f32 1.0, %v1419
        %v1421 = vmul.f32 %v1418, %v1420
        %v1422 = vadd.f32 %v1418, %v1421
        %vm1423 = vweird.f32 %v1416
        %vm1424 = vweird.f32 %v1418
        %vm1425 = vmor %vm1423, %vm1424
        %v1426 = vsel %vm1425, %v1418, %v1422
        %v1427 = vand.u32 2147483647, %v1416
        %vm1428 = vcmp.eq.f32.partialorder %v1427, 8.507059e+37
        %v1429 = vand.u32 %v1416, 2147483648
        %v1430 = vor.u32 1.1754944e-38, %v1429
        %v1431 = vsel %vm1428, %v1430, %v1426
        %v1432 = vmul.f32 1.0, %v1431
        %v1433 = vrcp.pop %v1417
        %v1434 = vmul.f32 %v1417, %v1433
        %v1435 = vsub.f32 1.0, %v1434
        %v1436 = vmul.f32 %v1433, %v1435
        %v1437 = vadd.f32 %v1433, %v1436
        %vm1438 = vweird.f32 %v1417
        %vm1439 = vweird.f32 %v1433
        %vm1440 = vmor %vm1438, %vm1439
        %v1441 = vsel %vm1440, %v1433, %v1437
        %v1442 = vand.u32 2147483647, %v1417
        %vm1443 = vcmp.eq.f32.partialorder %v1442, 8.507059e+37
        %v1444 = vand.u32 %v1417, 2147483648
        %v1445 = vor.u32 1.1754944e-38, %v1444
        %v1446 = vsel %vm1443, %v1445, %v1441
        %v1447 = vmul.f32 1.0, %v1446
        %v1448 = vmul.f32 %v1406, %v1432
        %v1449 = vmul.f32 %v1408, %v1447
        %v1450 = vpack.c.bf16 %v1448, %v1448
        %v1451 = vpack.c.bf16 %v1449, %v1449
        %1452 = vst.msk [vmem:[#allocation2 + $0x4] sm:$0xf] %vm1353, %v1450
        %1453 = vst.msk [vmem:[#allocation2 + $0x8] sm:$0xf] %vm1353, %v1451
      $region52: #{c1_forward.1} parent=47 // pred_fallthru
        _
      %p1454 = scmp.eq.s32.totalorder %s23, 0
      // Predicated region
      $region53: #{c1_forward.1} parent=47 // pred_check
        %p1455 = pneg %p1454
      $region54: #{c1_forward.1} parent=47 // pred_check_branch
        %1457 = sbr.rel (%p1455) target = $region56
      $region55: #{c1_forward.1} parent=47 // pred_region
        %1458 = vst.msk [vmem:[#allocation2 + $0x4] sm:$0xf] %vm1353, 0
        %1459 = vst.msk [vmem:[#allocation2 + $0x8] sm:$0xf] %vm1353, 0
      $region56: #{c1_forward.1} parent=47 // pred_fallthru
        _
      %p1460 = scmp.lt.s32.totalorder %s23, 0
      // Predicated region
      $region57: #{c1_forward.1} parent=47 // pred_check
        %p1461 = pneg %p1460
      $region58: #{c1_forward.1} parent=47 // pred_check_branch
        %1463 = sbr.rel (%p1461) target = $region60
      $region59: #{c1_forward.1} parent=47 // pred_region
        %v1464 = vld [vmem:[%s430] sm:$0xff]
        %v1465 = vld [vmem:[%s430 + $0x8] sm:$0xff]
        %v1466 = vpack.c.bf16 %v1465, %v1464
        %v1468 = vsel %vm500, %v1466, 0
        %1470 = vmatpush.bf16.msra.mxu0 0
        %1471 = vmatpush.bf16.msra.mxu0 0
        %1472 = vmatpush.bf16.msra.mxu0 0
        %1473 = vmatpush.bf16.msra.mxu0 0
        %1474 = vmatpush.bf16.msra.mxu0 0
        %1475 = vmatpush.bf16.msra.mxu0 0
        %1476 = vmatpush.bf16.msra.mxu0 0
        %1477 = vmatpush.bf16.msra.mxu0 %v551
        %1478 = vmatmul.bf16.gmra.mxu0 %v1468
        %v1479 = vpop.f32.mrf.mxu0
        %v1480 = vadd.f32 %v498, %v1479
        %v1481 = vpop.f32.mrf.mxu0
        %v1482 = vadd.f32 %v498, %v1481
        %1483 = vdwg.mxu0
        %v1484 = vxor.u32 %v1480, 2147483648
        %v1485 = vxor.u32 %v1482, 2147483648
        %v1486 = vmul.f32 %v1484, 1.442695
        %v1487 = vpow.pop %v1486
        %v1488 = vmul.f32 %v1485, 1.442695
        %v1489 = vpow.pop %v1488
        %v1490 = vadd.f32 %v1487, 1.0
        %v1491 = vadd.f32 %v1489, 1.0
        %v1492 = vrcp.pop %v1490
        %v1493 = vmul.f32 %v1490, %v1492
        %v1494 = vsub.f32 1.0, %v1493
        %v1495 = vmul.f32 %v1492, %v1494
        %v1496 = vadd.f32 %v1492, %v1495
        %vm1497 = vweird.f32 %v1490
        %vm1498 = vweird.f32 %v1492
        %vm1499 = vmor %vm1497, %vm1498
        %v1500 = vsel %vm1499, %v1492, %v1496
        %v1501 = vand.u32 2147483647, %v1490
        %vm1502 = vcmp.eq.f32.partialorder %v1501, 8.507059e+37
        %v1503 = vand.u32 %v1490, 2147483648
        %v1504 = vor.u32 1.1754944e-38, %v1503
        %v1505 = vsel %vm1502, %v1504, %v1500
        %v1506 = vmul.f32 1.0, %v1505
        %v1507 = vrcp.pop %v1491
        %v1508 = vmul.f32 %v1491, %v1507
        %v1509 = vsub.f32 1.0, %v1508
        %v1510 = vmul.f32 %v1507, %v1509
        %v1511 = vadd.f32 %v1507, %v1510
        %vm1512 = vweird.f32 %v1491
        %vm1513 = vweird.f32 %v1507
        %vm1514 = vmor %vm1512, %vm1513
        %v1515 = vsel %vm1514, %v1507, %v1511
        %v1516 = vand.u32 2147483647, %v1491
        %vm1517 = vcmp.eq.f32.partialorder %v1516, 8.507059e+37
        %v1518 = vand.u32 %v1491, 2147483648
        %v1519 = vor.u32 1.1754944e-38, %v1518
        %v1520 = vsel %vm1517, %v1519, %v1515
        %v1521 = vmul.f32 1.0, %v1520
        %v1522 = vmul.f32 %v1480, %v1506
        %v1523 = vmul.f32 %v1482, %v1521
        %v1524 = vpack.c.bf16 %v1522, %v1522
        %v1525 = vpack.c.bf16 %v1523, %v1523
        %s1526 = scalar_lea.vmem [#allocation2], 272
        %1527 = vst.msk [vmem:[%s1526 + $0x4] sm:$0xf] %vm1353, %v1524
        %1528 = vst.msk [vmem:[%s1526 + $0x8] sm:$0xf] %vm1353, %v1525
      $region60: #{c1_forward.1} parent=47 // pred_fallthru
        _
      // Predicated region
      $region61: #{c1_forward.1} parent=47 // pred_check
        %p1529 = pneg %p1454
      $region62: #{c1_forward.1} parent=47 // pred_check_branch
        %1531 = sbr.rel (%p1529) target = $region64
      $region63: #{c1_forward.1} parent=47 // pred_region
        %s1532 = scalar_lea.vmem [#allocation2], 272
        %1533 = vst.msk [vmem:[%s1532 + $0x4] sm:$0xf] %vm1353, 0
        %1534 = vst.msk [vmem:[%s1532 + $0x8] sm:$0xf] %vm1353, 0
      $region64: #{c1_forward.1} parent=47 // pred_fallthru
        _
      %v1535 = vld [vmem:[%s6] sm:$0x1]
      %v1536 = vld [vmem:[#allocation2] sm:$0x8]
      %v1537 = vld [vmem:[#allocation2 + $0x4] sm:$0xf]
      %v1538 = vld [vmem:[#allocation2 + $0x8] sm:$0xf]
      %v1539 = vld [vmem:[#allocation2 + $0x10] sm:$0x8]
      %v1540 = vld [vmem:[#allocation2 + $0x14] sm:$0xf]
      %v1541 = vld [vmem:[#allocation2 + $0x18] sm:$0xf]
      %v1542 = vld [vmem:[#allocation2 + $0x20] sm:$0x8]
      %v1543 = vld [vmem:[#allocation2 + $0x24] sm:$0xf]
      %v1544 = vld [vmem:[#allocation2 + $0x28] sm:$0xf]
      %v1545 = vld [vmem:[#allocation2 + $0x30] sm:$0x8]
      %v1546 = vld [vmem:[#allocation2 + $0x34] sm:$0xf]
      %v1547 = vld [vmem:[#allocation2 + $0x38] sm:$0xf]
      %v1548 = vld [vmem:[#allocation2 + $0x40] sm:$0x8]
      %v1549 = vld [vmem:[#allocation2 + $0x44] sm:$0xf]
      %v1550 = vld [vmem:[#allocation2 + $0x48] sm:$0xf]
      %v1551 = vld [vmem:[#allocation2 + $0x50] sm:$0x8]
      %v1552 = vld [vmem:[#allocation2 + $0x54] sm:$0xf]
      %v1553 = vld [vmem:[#allocation2 + $0x58] sm:$0xf]
      %v1554 = vld [vmem:[#allocation2 + $0x60] sm:$0x8]
      %v1555 = vld [vmem:[#allocation2 + $0x64] sm:$0xf]
      %v1556 = vld [vmem:[#allocation2 + $0x68] sm:$0xf]
      %v1557 = vld [vmem:[#allocation2 + $0x70] sm:$0x8]
      %v1558 = vld [vmem:[#allocation2 + $0x74] sm:$0xf]
      %v1559 = vld [vmem:[#allocation2 + $0x78] sm:$0xf]
      %v1560 = vld [vmem:[#allocation2 + $0x80] sm:$0x8]
      %v1561 = vld [vmem:[#allocation2 + $0x84] sm:$0xf]
      %v1562 = vld [vmem:[#allocation2 + $0x88] sm:$0xf]
      %v1563 = vld [vmem:[#allocation2 + $0x90] sm:$0x8]
      %v1564 = vld [vmem:[#allocation2 + $0x94] sm:$0xf]
      %v1565 = vld [vmem:[#allocation2 + $0x98] sm:$0xf]
      %v1566 = vld [vmem:[#allocation2 + $0xa0] sm:$0x8]
      %v1567 = vld [vmem:[#allocation2 + $0xa4] sm:$0xf]
      %v1568 = vld [vmem:[#allocation2 + $0xa8] sm:$0xf]
      %v1569 = vld [vmem:[#allocation2 + $0xb0] sm:$0x8]
      %v1570 = vld [vmem:[#allocation2 + $0xb4] sm:$0xf]
      %v1571 = vld [vmem:[#allocation2 + $0xb8] sm:$0xf]
      %v1572 = vld [vmem:[#allocation2 + $0xc0] sm:$0x8]
      %v1573 = vld [vmem:[#allocation2 + $0xc4] sm:$0xf]
      %v1574 = vld [vmem:[#allocation2 + $0xc8] sm:$0xf]
      %v1575 = vld [vmem:[#allocation2 + $0xd0] sm:$0x8]
      %v1576 = vld [vmem:[#allocation2 + $0xd4] sm:$0xf]
      %v1577 = vld [vmem:[#allocation2 + $0xd8] sm:$0xf]
      %v1578 = vld [vmem:[#allocation2 + $0xe0] sm:$0x8]
      %v1579 = vld [vmem:[#allocation2 + $0xe4] sm:$0xf]
      %v1580 = vld [vmem:[#allocation2 + $0xe8] sm:$0xf]
      %v1581 = vld [vmem:[#allocation2 + $0xf0] sm:$0x8]
      %v1582 = vld [vmem:[#allocation2 + $0xf4] sm:$0xf]
      %v1583 = vld [vmem:[#allocation2 + $0xf8] sm:$0xf]
      %vm1584 = vsmask.f32 256
      %vm1585 = vsmask.f32 4368
      %vm1586 = vmor %vm1584, %vm1585
      %v1588 = vshrl.u32 %v1536, 16
      %v1590 = vrot.slane %v1588, 7
      %v1591 = vrot.slane %v1590, 4
      %v1593 = vshrl.u32 %v1537, 16
      %v1595 = vrot.slane %v1593, 7
      %v1596 = vshll.u32 %v1537, 16
      %v1598 = vor.u32 %v1595, %v1596
      %v1599 = vsel %vm1586, %v1591, %v1598
      %v1600 = vrot.slane %v1595, 4
      %v1602 = vshrl.u32 %v1538, 16
      %v1604 = vrot.slane %v1602, 7
      %v1605 = vshll.u32 %v1538, 16
      %v1607 = vor.u32 %v1604, %v1605
      %v1608 = vsel %vm1586, %v1600, %v1607
      %v1610 = vshrl.u32 %v1539, 16
      %v1612 = vrot.slane %v1610, 7
      %v1613 = vrot.slane %v1612, 4
      %v1615 = vshrl.u32 %v1540, 16
      %v1617 = vrot.slane %v1615, 7
      %v1618 = vshll.u32 %v1540, 16
      %v1620 = vor.u32 %v1617, %v1618
      %v1621 = vsel %vm1586, %v1613, %v1620
      %v1622 = vrot.slane %v1617, 4
      %v1624 = vshrl.u32 %v1541, 16
      %v1626 = vrot.slane %v1624, 7
      %v1627 = vshll.u32 %v1541, 16
      %v1629 = vor.u32 %v1626, %v1627
      %v1630 = vsel %vm1586, %v1622, %v1629
      %v1632 = vshrl.u32 %v1542, 16
      %v1634 = vrot.slane %v1632, 7
      %v1635 = vrot.slane %v1634, 4
      %v1637 = vshrl.u32 %v1543, 16
      %v1639 = vrot.slane %v1637, 7
      %v1640 = vshll.u32 %v1543, 16
      %v1642 = vor.u32 %v1639, %v1640
      %v1643 = vsel %vm1586, %v1635, %v1642
      %v1644 = vrot.slane %v1639, 4
      %v1646 = vshrl.u32 %v1544, 16
      %v1648 = vrot.slane %v1646, 7
      %v1649 = vshll.u32 %v1544, 16
      %v1651 = vor.u32 %v1648, %v1649
      %v1652 = vsel %vm1586, %v1644, %v1651
      %v1654 = vshrl.u32 %v1545, 16
      %v1656 = vrot.slane %v1654, 7
      %v1657 = vrot.slane %v1656, 4
      %v1659 = vshrl.u32 %v1546, 16
      %v1661 = vrot.slane %v1659, 7
      %v1662 = vshll.u32 %v1546, 16
      %v1664 = vor.u32 %v1661, %v1662
      %v1665 = vsel %vm1586, %v1657, %v1664
      %v1666 = vrot.slane %v1661, 4
      %v1668 = vshrl.u32 %v1547, 16
      %v1670 = vrot.slane %v1668, 7
      %v1671 = vshll.u32 %v1547, 16
      %v1673 = vor.u32 %v1670, %v1671
      %v1674 = vsel %vm1586, %v1666, %v1673
      %v1676 = vshrl.u32 %v1548, 16
      %v1678 = vrot.slane %v1676, 7
      %v1679 = vrot.slane %v1678, 4
      %v1681 = vshrl.u32 %v1549, 16
      %v1683 = vrot.slane %v1681, 7
      %v1684 = vshll.u32 %v1549, 16
      %v1686 = vor.u32 %v1683, %v1684
      %v1687 = vsel %vm1586, %v1679, %v1686
      %v1688 = vrot.slane %v1683, 4
      %v1690 = vshrl.u32 %v1550, 16
      %v1692 = vrot.slane %v1690, 7
      %v1693 = vshll.u32 %v1550, 16
      %v1695 = vor.u32 %v1692, %v1693
      %v1696 = vsel %vm1586, %v1688, %v1695
      %v1698 = vshrl.u32 %v1551, 16
      %v1700 = vrot.slane %v1698, 7
      %v1701 = vrot.slane %v1700, 4
      %v1703 = vshrl.u32 %v1552, 16
      %v1705 = vrot.slane %v1703, 7
      %v1706 = vshll.u32 %v1552, 16
      %v1708 = vor.u32 %v1705, %v1706
      %v1709 = vsel %vm1586, %v1701, %v1708
      %v1710 = vrot.slane %v1705, 4
      %v1712 = vshrl.u32 %v1553, 16
      %v1714 = vrot.slane %v1712, 7
      %v1715 = vshll.u32 %v1553, 16
      %v1717 = vor.u32 %v1714, %v1715
      %v1718 = vsel %vm1586, %v1710, %v1717
      %v1720 = vshrl.u32 %v1554, 16
      %v1722 = vrot.slane %v1720, 7
      %v1723 = vrot.slane %v1722, 4
      %v1725 = vshrl.u32 %v1555, 16
      %v1727 = vrot.slane %v1725, 7
      %v1728 = vshll.u32 %v1555, 16
      %v1730 = vor.u32 %v1727, %v1728
      %v1731 = vsel %vm1586, %v1723, %v1730
      %v1732 = vrot.slane %v1727, 4
      %v1734 = vshrl.u32 %v1556, 16
      %v1736 = vrot.slane %v1734, 7
      %v1737 = vshll.u32 %v1556, 16
      %v1739 = vor.u32 %v1736, %v1737
      %v1740 = vsel %vm1586, %v1732, %v1739
      %v1742 = vshrl.u32 %v1557, 16
      %v1744 = vrot.slane %v1742, 7
      %v1745 = vrot.slane %v1744, 4
      %v1747 = vshrl.u32 %v1558, 16
      %v1749 = vrot.slane %v1747, 7
      %v1750 = vshll.u32 %v1558, 16
      %v1752 = vor.u32 %v1749, %v1750
      %v1753 = vsel %vm1586, %v1745, %v1752
      %v1754 = vrot.slane %v1749, 4
      %v1756 = vshrl.u32 %v1559, 16
      %v1758 = vrot.slane %v1756, 7
      %v1759 = vshll.u32 %v1559, 16
      %v1761 = vor.u32 %v1758, %v1759
      %v1762 = vsel %vm1586, %v1754, %v1761
      %v1764 = vshrl.u32 %v1560, 16
      %v1766 = vrot.slane %v1764, 7
      %v1767 = vrot.slane %v1766, 4
      %v1769 = vshrl.u32 %v1561, 16
      %v1771 = vrot.slane %v1769, 7
      %v1772 = vshll.u32 %v1561, 16
      %v1774 = vor.u32 %v1771, %v1772
      %v1775 = vsel %vm1586, %v1767, %v1774
      %v1776 = vrot.slane %v1771, 4
      %v1778 = vshrl.u32 %v1562, 16
      %v1780 = vrot.slane %v1778, 7
      %v1781 = vshll.u32 %v1562, 16
      %v1783 = vor.u32 %v1780, %v1781
      %v1784 = vsel %vm1586, %v1776, %v1783
      %v1786 = vshrl.u32 %v1563, 16
      %v1788 = vrot.slane %v1786, 7
      %v1789 = vrot.slane %v1788, 4
      %v1791 = vshrl.u32 %v1564, 16
      %v1793 = vrot.slane %v1791, 7
      %v1794 = vshll.u32 %v1564, 16
      %v1796 = vor.u32 %v1793, %v1794
      %v1797 = vsel %vm1586, %v1789, %v1796
      %v1798 = vrot.slane %v1793, 4
      %v1800 = vshrl.u32 %v1565, 16
      %v1802 = vrot.slane %v1800, 7
      %v1803 = vshll.u32 %v1565, 16
      %v1805 = vor.u32 %v1802, %v1803
      %v1806 = vsel %vm1586, %v1798, %v1805
      %v1808 = vshrl.u32 %v1566, 16
      %v1810 = vrot.slane %v1808, 7
      %v1811 = vrot.slane %v1810, 4
      %v1813 = vshrl.u32 %v1567, 16
      %v1815 = vrot.slane %v1813, 7
      %v1816 = vshll.u32 %v1567, 16
      %v1818 = vor.u32 %v1815, %v1816
      %v1819 = vsel %vm1586, %v1811, %v1818
      %v1820 = vrot.slane %v1815, 4
      %v1822 = vshrl.u32 %v1568, 16
      %v1824 = vrot.slane %v1822, 7
      %v1825 = vshll.u32 %v1568, 16
      %v1827 = vor.u32 %v1824, %v1825
      %v1828 = vsel %vm1586, %v1820, %v1827
      %v1830 = vshrl.u32 %v1569, 16
      %v1832 = vrot.slane %v1830, 7
      %v1833 = vrot.slane %v1832, 4
      %v1835 = vshrl.u32 %v1570, 16
      %v1837 = vrot.slane %v1835, 7
      %v1838 = vshll.u32 %v1570, 16
      %v1840 = vor.u32 %v1837, %v1838
      %v1841 = vsel %vm1586, %v1833, %v1840
      %v1842 = vrot.slane %v1837, 4
      %v1844 = vshrl.u32 %v1571, 16
      %v1846 = vrot.slane %v1844, 7
      %v1847 = vshll.u32 %v1571, 16
      %v1849 = vor.u32 %v1846, %v1847
      %v1850 = vsel %vm1586, %v1842, %v1849
      %v1852 = vshrl.u32 %v1572, 16
      %v1854 = vrot.slane %v1852, 7
      %v1855 = vrot.slane %v1854, 4
      %v1857 = vshrl.u32 %v1573, 16
      %v1859 = vrot.slane %v1857, 7
      %v1860 = vshll.u32 %v1573, 16
      %v1862 = vor.u32 %v1859, %v1860
      %v1863 = vsel %vm1586, %v1855, %v1862
      %v1864 = vrot.slane %v1859, 4
      %v1866 = vshrl.u32 %v1574, 16
      %v1868 = vrot.slane %v1866, 7
      %v1869 = vshll.u32 %v1574, 16
      %v1871 = vor.u32 %v1868, %v1869
      %v1872 = vsel %vm1586, %v1864, %v1871
      %v1874 = vshrl.u32 %v1575, 16
      %v1876 = vrot.slane %v1874, 7
      %v1877 = vrot.slane %v1876, 4
      %v1879 = vshrl.u32 %v1576, 16
      %v1881 = vrot.slane %v1879, 7
      %v1882 = vshll.u32 %v1576, 16
      %v1884 = vor.u32 %v1881, %v1882
      %v1885 = vsel %vm1586, %v1877, %v1884
      %v1886 = vrot.slane %v1881, 4
      %v1888 = vshrl.u32 %v1577, 16
      %v1890 = vrot.slane %v1888, 7
      %v1891 = vshll.u32 %v1577, 16
      %v1893 = vor.u32 %v1890, %v1891
      %v1894 = vsel %vm1586, %v1886, %v1893
      %v1896 = vshrl.u32 %v1578, 16
      %v1898 = vrot.slane %v1896, 7
      %v1899 = vrot.slane %v1898, 4
      %v1901 = vshrl.u32 %v1579, 16
      %v1903 = vrot.slane %v1901, 7
      %v1904 = vshll.u32 %v1579, 16
      %v1906 = vor.u32 %v1903, %v1904
      %v1907 = vsel %vm1586, %v1899, %v1906
      %v1908 = vrot.slane %v1903, 4
      %v1910 = vshrl.u32 %v1580, 16
      %v1912 = vrot.slane %v1910, 7
      %v1913 = vshll.u32 %v1580, 16
      %v1915 = vor.u32 %v1912, %v1913
      %v1916 = vsel %vm1586, %v1908, %v1915
      %v1918 = vshrl.u32 %v1581, 16
      %v1920 = vrot.slane %v1918, 7
      %v1921 = vrot.slane %v1920, 4
      %v1923 = vshrl.u32 %v1582, 16
      %v1925 = vrot.slane %v1923, 7
      %v1926 = vshll.u32 %v1582, 16
      %v1928 = vor.u32 %v1925, %v1926
      %v1929 = vsel %vm1586, %v1921, %v1928
      %v1930 = vrot.slane %v1925, 4
      %v1932 = vshrl.u32 %v1583, 16
      %v1934 = vrot.slane %v1932, 7
      %v1935 = vshll.u32 %v1583, 16
      %v1937 = vor.u32 %v1934, %v1935
      %v1938 = vsel %vm1586, %v1930, %v1937
      %v1939 = vld [vmem:[%s5] sm:$0xf]
      %v1940 = vunpack.c.l.b16 %v1599
      %v1941 = vunpack.c.l.b16 %v1608
      %v1942 = vunpack.c.l.b16 %v1621
      %v1943 = vunpack.c.l.b16 %v1630
      %v1944 = vunpack.c.l.b16 %v1643
      %v1945 = vunpack.c.l.b16 %v1652
      %v1946 = vunpack.c.l.b16 %v1665
      %v1947 = vunpack.c.l.b16 %v1674
      %v1948 = vunpack.c.l.b16 %v1687
      %v1949 = vunpack.c.l.b16 %v1696
      %v1950 = vunpack.c.l.b16 %v1709
      %v1951 = vunpack.c.l.b16 %v1718
      %v1952 = vunpack.c.l.b16 %v1731
      %v1953 = vunpack.c.l.b16 %v1740
      %v1954 = vunpack.c.l.b16 %v1753
      %v1955 = vunpack.c.l.b16 %v1762
      %v1956 = vunpack.c.l.b16 %v1775
      %v1957 = vunpack.c.l.b16 %v1784
      %v1958 = vunpack.c.l.b16 %v1797
      %v1959 = vunpack.c.l.b16 %v1806
      %v1960 = vunpack.c.l.b16 %v1819
      %v1961 = vunpack.c.l.b16 %v1828
      %v1962 = vunpack.c.l.b16 %v1841
      %v1963 = vunpack.c.l.b16 %v1850
      %v1964 = vunpack.c.l.b16 %v1863
      %v1965 = vunpack.c.l.b16 %v1872
      %v1966 = vunpack.c.l.b16 %v1885
      %v1967 = vunpack.c.l.b16 %v1894
      %v1968 = vunpack.c.l.b16 %v1907
      %v1969 = vunpack.c.l.b16 %v1916
      %v1970 = vunpack.c.l.b16 %v1929
      %v1971 = vunpack.c.l.b16 %v1938
      %v1972 = vpack.c.b16 %v1941, %v1940
      %v1973 = vpack.c.b16 %v1943, %v1942
      %v1974 = vpack.c.b16 %v1945, %v1944
      %v1975 = vpack.c.b16 %v1947, %v1946
      %v1976 = vpack.c.b16 %v1949, %v1948
      %v1977 = vpack.c.b16 %v1951, %v1950
      %v1978 = vpack.c.b16 %v1953, %v1952
      %v1979 = vpack.c.b16 %v1955, %v1954
      %v1980 = vpack.c.b16 %v1957, %v1956
      %v1981 = vpack.c.b16 %v1959, %v1958
      %v1982 = vpack.c.b16 %v1961, %v1960
      %v1983 = vpack.c.b16 %v1963, %v1962
      %v1984 = vpack.c.b16 %v1965, %v1964
      %v1985 = vpack.c.b16 %v1967, %v1966
      %v1986 = vpack.c.b16 %v1969, %v1968
      %v1987 = vpack.c.b16 %v1971, %v1970
      %vm1988 = vcmask 64512
      %v1990 = vsel %vm1988, %v1972, 0
      %v1993 = vsel %vm1988, %v1973, 0
      %v1996 = vsel %vm1988, %v1974, 0
      %v1999 = vsel %vm1988, %v1975, 0
      %v2002 = vsel %vm1988, %v1976, 0
      %v2005 = vsel %vm1988, %v1977, 0
      %v2008 = vsel %vm1988, %v1978, 0
      %v2011 = vsel %vm1988, %v1979, 0
      %v2014 = vsel %vm1988, %v1980, 0
      %v2017 = vsel %vm1988, %v1981, 0
      %v2020 = vsel %vm1988, %v1982, 0
      %v2023 = vsel %vm1988, %v1983, 0
      %v2026 = vsel %vm1988, %v1984, 0
      %v2029 = vsel %vm1988, %v1985, 0
      %v2032 = vsel %vm1988, %v1986, 0
      %v2035 = vsel %vm1988, %v1987, 0
      %vm2037 = vcmask 1043456
      %v2039 = vsel %vm2037, %v1939, 0
      %2041 = vmatpush.bf16.msra.mxu0 0
      %2042 = vmatpush.bf16.msra.mxu0 0
      %2043 = vmatpush.bf16.msra.mxu0 0
      %2044 = vmatpush.bf16.msra.mxu0 0
      %2045 = vmatpush.bf16.msra.mxu0 0
      %2046 = vmatpush.bf16.msra.mxu0 0
      %2047 = vmatpush.bf16.msra.mxu0 0
      %2048 = vmatpush.bf16.msra.mxu0 %v2039
      %2049 = vmatmul.bf16.gmra.mxu0 %v1990
      %v2050 = vpop.f32.mrf.mxu0
      %v2051 = vadd.f32 0.0, %v2050
      %v2052 = vpop.f32.mrf.mxu0
      %v2053 = vadd.f32 0.0, %v2052
      %2054 = vmatmul.bf16.gmra.mxu0 %v1993
      %v2055 = vpop.f32.mrf.mxu0
      %v2056 = vadd.f32 0.0, %v2055
      %v2057 = vpop.f32.mrf.mxu0
      %v2058 = vadd.f32 0.0, %v2057
      %2059 = vmatmul.bf16.gmra.mxu0 %v1996
      %v2060 = vpop.f32.mrf.mxu0
      %v2061 = vadd.f32 0.0, %v2060
      %v2062 = vpop.f32.mrf.mxu0
      %v2063 = vadd.f32 0.0, %v2062
      %2064 = vmatmul.bf16.gmra.mxu0 %v1999
      %v2065 = vpop.f32.mrf.mxu0
      %v2066 = vadd.f32 0.0, %v2065
      %v2067 = vpop.f32.mrf.mxu0
      %v2068 = vadd.f32 0.0, %v2067
      %2069 = vmatmul.bf16.gmra.mxu0 %v2002
      %v2070 = vpop.f32.mrf.mxu0
      %v2071 = vadd.f32 0.0, %v2070
      %v2072 = vpop.f32.mrf.mxu0
      %v2073 = vadd.f32 0.0, %v2072
      %2074 = vmatmul.bf16.gmra.mxu0 %v2005
      %v2075 = vpop.f32.mrf.mxu0
      %v2076 = vadd.f32 0.0, %v2075
      %v2077 = vpop.f32.mrf.mxu0
      %v2078 = vadd.f32 0.0, %v2077
      %2079 = vmatmul.bf16.gmra.mxu0 %v2008
      %v2080 = vpop.f32.mrf.mxu0
      %v2081 = vadd.f32 0.0, %v2080
      %v2082 = vpop.f32.mrf.mxu0
      %v2083 = vadd.f32 0.0, %v2082
      %2084 = vmatmul.bf16.gmra.mxu0 %v2011
      %v2085 = vpop.f32.mrf.mxu0
      %v2086 = vadd.f32 0.0, %v2085
      %v2087 = vpop.f32.mrf.mxu0
      %v2088 = vadd.f32 0.0, %v2087
      %2089 = vmatmul.bf16.gmra.mxu0 %v2014
      %v2090 = vpop.f32.mrf.mxu0
      %v2091 = vadd.f32 0.0, %v2090
      %v2092 = vpop.f32.mrf.mxu0
      %v2093 = vadd.f32 0.0, %v2092
      %2094 = vmatmul.bf16.gmra.mxu0 %v2017
      %v2095 = vpop.f32.mrf.mxu0
      %v2096 = vadd.f32 0.0, %v2095
      %v2097 = vpop.f32.mrf.mxu0
      %v2098 = vadd.f32 0.0, %v2097
      %2099 = vmatmul.bf16.gmra.mxu0 %v2020
      %v2100 = vpop.f32.mrf.mxu0
      %v2101 = vadd.f32 0.0, %v2100
      %v2102 = vpop.f32.mrf.mxu0
      %v2103 = vadd.f32 0.0, %v2102
      %2104 = vmatmul.bf16.gmra.mxu0 %v2023
      %v2105 = vpop.f32.mrf.mxu0
      %v2106 = vadd.f32 0.0, %v2105
      %v2107 = vpop.f32.mrf.mxu0
      %v2108 = vadd.f32 0.0, %v2107
      %2109 = vmatmul.bf16.gmra.mxu0 %v2026
      %v2110 = vpop.f32.mrf.mxu0
      %v2111 = vadd.f32 0.0, %v2110
      %v2112 = vpop.f32.mrf.mxu0
      %v2113 = vadd.f32 0.0, %v2112
      %2114 = vmatmul.bf16.gmra.mxu0 %v2029
      %v2115 = vpop.f32.mrf.mxu0
      %v2116 = vadd.f32 0.0, %v2115
      %v2117 = vpop.f32.mrf.mxu0
      %v2118 = vadd.f32 0.0, %v2117
      %2119 = vmatmul.bf16.gmra.mxu0 %v2032
      %v2120 = vpop.f32.mrf.mxu0
      %v2121 = vadd.f32 0.0, %v2120
      %v2122 = vpop.f32.mrf.mxu0
      %v2123 = vadd.f32 0.0, %v2122
      %2124 = vmatmul.bf16.gmra.mxu0 %v2035
      %v2125 = vpop.f32.mrf.mxu0
      %v2126 = vadd.f32 0.0, %v2125
      %v2127 = vpop.f32.mrf.mxu0
      %v2128 = vadd.f32 0.0, %v2127
      %2129 = vdwg.mxu0
      %v2131 = vperm.slane %v1535, 0
      %v2133 = vadd.f32 %v2131, %v2051
      %v2134 = vadd.f32 %v2131, %v2053
      %v2135 = vadd.f32 %v2131, %v2056
      %v2136 = vadd.f32 %v2131, %v2058
      %v2137 = vadd.f32 %v2131, %v2061
      %v2138 = vadd.f32 %v2131, %v2063
      %v2139 = vadd.f32 %v2131, %v2066
      %v2140 = vadd.f32 %v2131, %v2068
      %v2141 = vadd.f32 %v2131, %v2071
      %v2142 = vadd.f32 %v2131, %v2073
      %v2143 = vadd.f32 %v2131, %v2076
      %v2144 = vadd.f32 %v2131, %v2078
      %v2145 = vadd.f32 %v2131, %v2081
      %v2146 = vadd.f32 %v2131, %v2083
      %v2147 = vadd.f32 %v2131, %v2086
      %v2148 = vadd.f32 %v2131, %v2088
      %v2149 = vadd.f32 %v2131, %v2091
      %v2150 = vadd.f32 %v2131, %v2093
      %v2151 = vadd.f32 %v2131, %v2096
      %v2152 = vadd.f32 %v2131, %v2098
      %v2153 = vadd.f32 %v2131, %v2101
      %v2154 = vadd.f32 %v2131, %v2103
      %v2155 = vadd.f32 %v2131, %v2106
      %v2156 = vadd.f32 %v2131, %v2108
      %v2157 = vadd.f32 %v2131, %v2111
      %v2158 = vadd.f32 %v2131, %v2113
      %v2159 = vadd.f32 %v2131, %v2116
      %v2160 = vadd.f32 %v2131, %v2118
      %v2161 = vadd.f32 %v2131, %v2121
      %v2162 = vadd.f32 %v2131, %v2123
      %v2163 = vadd.f32 %v2131, %v2126
      %v2164 = vadd.f32 %v2131, %v2128
      %s2165 = scalar_lea.vmem %s5, 4
      %v2166 = vld [vmem:[%s2165] sm:$0xf]
      %v2199 = vunpack.c.l.b16 %v1537
      %v2200 = vunpack.c.l.b16 %v1538
      %v2201 = vunpack.c.l.b16 %v1540
      %v2202 = vunpack.c.l.b16 %v1541
      %v2203 = vunpack.c.l.b16 %v1543
      %v2204 = vunpack.c.l.b16 %v1544
      %v2205 = vunpack.c.l.b16 %v1546
      %v2206 = vunpack.c.l.b16 %v1547
      %v2207 = vunpack.c.l.b16 %v1549
      %v2208 = vunpack.c.l.b16 %v1550
      %v2209 = vunpack.c.l.b16 %v1552
      %v2210 = vunpack.c.l.b16 %v1553
      %v2211 = vunpack.c.l.b16 %v1555
      %v2212 = vunpack.c.l.b16 %v1556
      %v2213 = vunpack.c.l.b16 %v1558
      %v2214 = vunpack.c.l.b16 %v1559
      %v2215 = vunpack.c.l.b16 %v1561
      %v2216 = vunpack.c.l.b16 %v1562
      %v2217 = vunpack.c.l.b16 %v1564
      %v2218 = vunpack.c.l.b16 %v1565
      %v2219 = vunpack.c.l.b16 %v1567
      %v2220 = vunpack.c.l.b16 %v1568
      %v2221 = vunpack.c.l.b16 %v1570
      %v2222 = vunpack.c.l.b16 %v1571
      %v2223 = vunpack.c.l.b16 %v1573
      %v2224 = vunpack.c.l.b16 %v1574
      %v2225 = vunpack.c.l.b16 %v1576
      %v2226 = vunpack.c.l.b16 %v1577
      %v2227 = vunpack.c.l.b16 %v1579
      %v2228 = vunpack.c.l.b16 %v1580
      %v2229 = vunpack.c.l.b16 %v1582
      %v2230 = vunpack.c.l.b16 %v1583
      %v2231 = vpack.c.b16 %v2200, %v2199
      %v2232 = vpack.c.b16 %v2202, %v2201
      %v2233 = vpack.c.b16 %v2204, %v2203
      %v2234 = vpack.c.b16 %v2206, %v2205
      %v2235 = vpack.c.b16 %v2208, %v2207
      %v2236 = vpack.c.b16 %v2210, %v2209
      %v2237 = vpack.c.b16 %v2212, %v2211
      %v2238 = vpack.c.b16 %v2214, %v2213
      %v2239 = vpack.c.b16 %v2216, %v2215
      %v2240 = vpack.c.b16 %v2218, %v2217
      %v2241 = vpack.c.b16 %v2220, %v2219
      %v2242 = vpack.c.b16 %v2222, %v2221
      %v2243 = vpack.c.b16 %v2224, %v2223
      %v2244 = vpack.c.b16 %v2226, %v2225
      %v2245 = vpack.c.b16 %v2228, %v2227
      %v2246 = vpack.c.b16 %v2230, %v2229
      %v2248 = vsel %vm1988, %v2231, 0
      %v2251 = vsel %vm1988, %v2232, 0
      %v2254 = vsel %vm1988, %v2233, 0
      %v2257 = vsel %vm1988, %v2234, 0
      %v2260 = vsel %vm1988, %v2235, 0
      %v2263 = vsel %vm1988, %v2236, 0
      %v2266 = vsel %vm1988, %v2237, 0
      %v2269 = vsel %vm1988, %v2238, 0
      %v2272 = vsel %vm1988, %v2239, 0
      %v2275 = vsel %vm1988, %v2240, 0
      %v2278 = vsel %vm1988, %v2241, 0
      %v2281 = vsel %vm1988, %v2242, 0
      %v2284 = vsel %vm1988, %v2243, 0
      %v2287 = vsel %vm1988, %v2244, 0
      %v2290 = vsel %vm1988, %v2245, 0
      %v2293 = vsel %vm1988, %v2246, 0
      %v2296 = vsel %vm2037, %v2166, 0
      %2298 = vmatpush.bf16.msra.mxu0 0
      %2299 = vmatpush.bf16.msra.mxu0 0
      %2300 = vmatpush.bf16.msra.mxu0 0
      %2301 = vmatpush.bf16.msra.mxu0 0
      %2302 = vmatpush.bf16.msra.mxu0 0
      %2303 = vmatpush.bf16.msra.mxu0 0
      %2304 = vmatpush.bf16.msra.mxu0 0
      %2305 = vmatpush.bf16.msra.mxu0 %v2296
      %2306 = vmatmul.bf16.gmra.mxu0 %v2248
      %v2307 = vpop.f32.mrf.mxu0
      %v2308 = vadd.f32 0.0, %v2307
      %v2309 = vpop.f32.mrf.mxu0
      %v2310 = vadd.f32 0.0, %v2309
      %2311 = vmatmul.bf16.gmra.mxu0 %v2251
      %v2312 = vpop.f32.mrf.mxu0
      %v2313 = vadd.f32 0.0, %v2312
      %v2314 = vpop.f32.mrf.mxu0
      %v2315 = vadd.f32 0.0, %v2314
      %2316 = vmatmul.bf16.gmra.mxu0 %v2254
      %v2317 = vpop.f32.mrf.mxu0
      %v2318 = vadd.f32 0.0, %v2317
      %v2319 = vpop.f32.mrf.mxu0
      %v2320 = vadd.f32 0.0, %v2319
      %2321 = vmatmul.bf16.gmra.mxu0 %v2257
      %v2322 = vpop.f32.mrf.mxu0
      %v2323 = vadd.f32 0.0, %v2322
      %v2324 = vpop.f32.mrf.mxu0
      %v2325 = vadd.f32 0.0, %v2324
      %2326 = vmatmul.bf16.gmra.mxu0 %v2260
      %v2327 = vpop.f32.mrf.mxu0
      %v2328 = vadd.f32 0.0, %v2327
      %v2329 = vpop.f32.mrf.mxu0
      %v2330 = vadd.f32 0.0, %v2329
      %2331 = vmatmul.bf16.gmra.mxu0 %v2263
      %v2332 = vpop.f32.mrf.mxu0
      %v2333 = vadd.f32 0.0, %v2332
      %v2334 = vpop.f32.mrf.mxu0
      %v2335 = vadd.f32 0.0, %v2334
      %2336 = vmatmul.bf16.gmra.mxu0 %v2266
      %v2337 = vpop.f32.mrf.mxu0
      %v2338 = vadd.f32 0.0, %v2337
      %v2339 = vpop.f32.mrf.mxu0
      %v2340 = vadd.f32 0.0, %v2339
      %2341 = vmatmul.bf16.gmra.mxu0 %v2269
      %v2342 = vpop.f32.mrf.mxu0
      %v2343 = vadd.f32 0.0, %v2342
      %v2344 = vpop.f32.mrf.mxu0
      %v2345 = vadd.f32 0.0, %v2344
      %2346 = vmatmul.bf16.gmra.mxu0 %v2272
      %v2347 = vpop.f32.mrf.mxu0
      %v2348 = vadd.f32 0.0, %v2347
      %v2349 = vpop.f32.mrf.mxu0
      %v2350 = vadd.f32 0.0, %v2349
      %2351 = vmatmul.bf16.gmra.mxu0 %v2275
      %v2352 = vpop.f32.mrf.mxu0
      %v2353 = vadd.f32 0.0, %v2352
      %v2354 = vpop.f32.mrf.mxu0
      %v2355 = vadd.f32 0.0, %v2354
      %2356 = vmatmul.bf16.gmra.mxu0 %v2278
      %v2357 = vpop.f32.mrf.mxu0
      %v2358 = vadd.f32 0.0, %v2357
      %v2359 = vpop.f32.mrf.mxu0
      %v2360 = vadd.f32 0.0, %v2359
      %2361 = vmatmul.bf16.gmra.mxu0 %v2281
      %v2362 = vpop.f32.mrf.mxu0
      %v2363 = vadd.f32 0.0, %v2362
      %v2364 = vpop.f32.mrf.mxu0
      %v2365 = vadd.f32 0.0, %v2364
      %2366 = vmatmul.bf16.gmra.mxu0 %v2284
      %v2367 = vpop.f32.mrf.mxu0
      %v2368 = vadd.f32 0.0, %v2367
      %v2369 = vpop.f32.mrf.mxu0
      %v2370 = vadd.f32 0.0, %v2369
      %2371 = vmatmul.bf16.gmra.mxu0 %v2287
      %v2372 = vpop.f32.mrf.mxu0
      %v2373 = vadd.f32 0.0, %v2372
      %v2374 = vpop.f32.mrf.mxu0
      %v2375 = vadd.f32 0.0, %v2374
      %2376 = vmatmul.bf16.gmra.mxu0 %v2290
      %v2377 = vpop.f32.mrf.mxu0
      %v2378 = vadd.f32 0.0, %v2377
      %v2379 = vpop.f32.mrf.mxu0
      %v2380 = vadd.f32 0.0, %v2379
      %2381 = vmatmul.bf16.gmra.mxu0 %v2293
      %v2382 = vpop.f32.mrf.mxu0
      %v2383 = vadd.f32 0.0, %v2382
      %v2384 = vpop.f32.mrf.mxu0
      %v2385 = vadd.f32 0.0, %v2384
      %2386 = vdwg.mxu0
      %v2387 = vadd.f32 %v2133, %v2308
      %v2388 = vadd.f32 %v2134, %v2310
      %v2389 = vadd.f32 %v2135, %v2313
      %v2390 = vadd.f32 %v2136, %v2315
      %v2391 = vadd.f32 %v2137, %v2318
      %v2392 = vadd.f32 %v2138, %v2320
      %v2393 = vadd.f32 %v2139, %v2323
      %v2394 = vadd.f32 %v2140, %v2325
      %v2395 = vadd.f32 %v2141, %v2328
      %v2396 = vadd.f32 %v2142, %v2330
      %v2397 = vadd.f32 %v2143, %v2333
      %v2398 = vadd.f32 %v2144, %v2335
      %v2399 = vadd.f32 %v2145, %v2338
      %v2400 = vadd.f32 %v2146, %v2340
      %v2401 = vadd.f32 %v2147, %v2343
      %v2402 = vadd.f32 %v2148, %v2345
      %v2403 = vadd.f32 %v2149, %v2348
      %v2404 = vadd.f32 %v2150, %v2350
      %v2405 = vadd.f32 %v2151, %v2353
      %v2406 = vadd.f32 %v2152, %v2355
      %v2407 = vadd.f32 %v2153, %v2358
      %v2408 = vadd.f32 %v2154, %v2360
      %v2409 = vadd.f32 %v2155, %v2363
      %v2410 = vadd.f32 %v2156, %v2365
      %v2411 = vadd.f32 %v2157, %v2368
      %v2412 = vadd.f32 %v2158, %v2370
      %v2413 = vadd.f32 %v2159, %v2373
      %v2414 = vadd.f32 %v2160, %v2375
      %v2415 = vadd.f32 %v2161, %v2378
      %v2416 = vadd.f32 %v2162, %v2380
      %v2417 = vadd.f32 %v2163, %v2383
      %v2418 = vadd.f32 %v2164, %v2385
      %v2419 = vld [vmem:[#allocation2 + $0x4] sm:$0xf]
      %v2420 = vld [vmem:[#allocation2 + $0x8] sm:$0xf]
      %v2421 = vld [vmem:[#allocation2 + $0xc] sm:$0x1]
      %v2422 = vld [vmem:[#allocation2 + $0x14] sm:$0xf]
      %v2423 = vld [vmem:[#allocation2 + $0x18] sm:$0xf]
      %v2424 = vld [vmem:[#allocation2 + $0x1c] sm:$0x1]
      %v2425 = vld [vmem:[#allocation2 + $0x24] sm:$0xf]
      %v2426 = vld [vmem:[#allocation2 + $0x28] sm:$0xf]
      %v2427 = vld [vmem:[#allocation2 + $0x2c] sm:$0x1]
      %v2428 = vld [vmem:[#allocation2 + $0x34] sm:$0xf]
      %v2429 = vld [vmem:[#allocation2 + $0x38] sm:$0xf]
      %v2430 = vld [vmem:[#allocation2 + $0x3c] sm:$0x1]
      %v2431 = vld [vmem:[#allocation2 + $0x44] sm:$0xf]
      %v2432 = vld [vmem:[#allocation2 + $0x48] sm:$0xf]
      %v2433 = vld [vmem:[#allocation2 + $0x4c] sm:$0x1]
      %v2434 = vld [vmem:[#allocation2 + $0x54] sm:$0xf]
      %v2435 = vld [vmem:[#allocation2 + $0x58] sm:$0xf]
      %v2436 = vld [vmem:[#allocation2 + $0x5c] sm:$0x1]
      %v2437 = vld [vmem:[#allocation2 + $0x64] sm:$0xf]
      %v2438 = vld [vmem:[#allocation2 + $0x68] sm:$0xf]
      %v2439 = vld [vmem:[#allocation2 + $0x6c] sm:$0x1]
      %v2440 = vld [vmem:[#allocation2 + $0x74] sm:$0xf]
      %v2441 = vld [vmem:[#allocation2 + $0x78] sm:$0xf]
      %v2442 = vld [vmem:[#allocation2 + $0x7c] sm:$0x1]
      %v2443 = vld [vmem:[#allocation2 + $0x84] sm:$0xf]
      %v2444 = vld [vmem:[#allocation2 + $0x88] sm:$0xf]
      %v2445 = vld [vmem:[#allocation2 + $0x8c] sm:$0x1]
      %v2446 = vld [vmem:[#allocation2 + $0x94] sm:$0xf]
      %v2447 = vld [vmem:[#allocation2 + $0x98] sm:$0xf]
      %v2448 = vld [vmem:[#allocation2 + $0x9c] sm:$0x1]
      %v2449 = vld [vmem:[#allocation2 + $0xa4] sm:$0xf]
      %v2450 = vld [vmem:[#allocation2 + $0xa8] sm:$0xf]
      %v2451 = vld [vmem:[#allocation2 + $0xac] sm:$0x1]
      %v2452 = vld [vmem:[#allocation2 + $0xb4] sm:$0xf]
      %v2453 = vld [vmem:[#allocation2 + $0xb8] sm:$0xf]
      %v2454 = vld [vmem:[#allocation2 + $0xbc] sm:$0x1]
      %v2455 = vld [vmem:[#allocation2 + $0xc4] sm:$0xf]
      %v2456 = vld [vmem:[#allocation2 + $0xc8] sm:$0xf]
      %v2457 = vld [vmem:[#allocation2 + $0xcc] sm:$0x1]
      %v2458 = vld [vmem:[#allocation2 + $0xd4] sm:$0xf]
      %v2459 = vld [vmem:[#allocation2 + $0xd8] sm:$0xf]
      %v2460 = vld [vmem:[#allocation2 + $0xdc] sm:$0x1]
      %v2461 = vld [vmem:[#allocation2 + $0xe4] sm:$0xf]
      %v2462 = vld [vmem:[#allocation2 + $0xe8] sm:$0xf]
      %v2463 = vld [vmem:[#allocation2 + $0xec] sm:$0x1]
      %v2464 = vld [vmem:[#allocation2 + $0xf4] sm:$0xf]
      %v2465 = vld [vmem:[#allocation2 + $0xf8] sm:$0xf]
      %v2466 = vld [vmem:[#allocation2 + $0xfc] sm:$0x1]
      %vm2467 = vsmask.f32 3328
      %vm2468 = vsmask.f32 7440
      %vm2469 = vmor %vm2467, %vm2468
      %v2471 = vshrl.u32 %v2419, 16
      %v2473 = vrot.slane %v2471, 4
      %v2474 = vshll.u32 %v2419, 16
      %v2476 = vrot.slane %v2474, 5
      %v2477 = vor.u32 %v2473, %v2476
      %v2478 = vrot.slane %v2477, 4
      %v2480 = vshll.u32 %v2420, 16
      %v2482 = vrot.slane %v2480, 5
      %v2483 = vsel %vm2469, %v2478, %v2482
      %v2484 = vshrl.u32 %v2420, 16
      %v2486 = vrot.slane %v2484, 4
      %v2487 = vor.u32 %v2486, %v2482
      %v2488 = vrot.slane %v2487, 4
      %v2490 = vshll.u32 %v2421, 16
      %v2492 = vrot.slane %v2490, 5
      %v2493 = vsel %vm2469, %v2488, %v2492
      %v2495 = vshrl.u32 %v2422, 16
      %v2497 = vrot.slane %v2495, 4
      %v2498 = vshll.u32 %v2422, 16
      %v2500 = vrot.slane %v2498, 5
      %v2501 = vor.u32 %v2497, %v2500
      %v2502 = vrot.slane %v2501, 4
      %v2504 = vshll.u32 %v2423, 16
      %v2506 = vrot.slane %v2504, 5
      %v2507 = vsel %vm2469, %v2502, %v2506
      %v2508 = vshrl.u32 %v2423, 16
      %v2510 = vrot.slane %v2508, 4
      %v2511 = vor.u32 %v2510, %v2506
      %v2512 = vrot.slane %v2511, 4
      %v2514 = vshll.u32 %v2424, 16
      %v2516 = vrot.slane %v2514, 5
      %v2517 = vsel %vm2469, %v2512, %v2516
      %v2519 = vshrl.u32 %v2425, 16
      %v2521 = vrot.slane %v2519, 4
      %v2522 = vshll.u32 %v2425, 16
      %v2524 = vrot.slane %v2522, 5
      %v2525 = vor.u32 %v2521, %v2524
      %v2526 = vrot.slane %v2525, 4
      %v2528 = vshll.u32 %v2426, 16
      %v2530 = vrot.slane %v2528, 5
      %v2531 = vsel %vm2469, %v2526, %v2530
      %v2532 = vshrl.u32 %v2426, 16
      %v2534 = vrot.slane %v2532, 4
      %v2535 = vor.u32 %v2534, %v2530
      %v2536 = vrot.slane %v2535, 4
      %v2538 = vshll.u32 %v2427, 16
      %v2540 = vrot.slane %v2538, 5
      %v2541 = vsel %vm2469, %v2536, %v2540
      %v2543 = vshrl.u32 %v2428, 16
      %v2545 = vrot.slane %v2543, 4
      %v2546 = vshll.u32 %v2428, 16
      %v2548 = vrot.slane %v2546, 5
      %v2549 = vor.u32 %v2545, %v2548
      %v2550 = vrot.slane %v2549, 4
      %v2552 = vshll.u32 %v2429, 16
      %v2554 = vrot.slane %v2552, 5
      %v2555 = vsel %vm2469, %v2550, %v2554
      %v2556 = vshrl.u32 %v2429, 16
      %v2558 = vrot.slane %v2556, 4
      %v2559 = vor.u32 %v2558, %v2554
      %v2560 = vrot.slane %v2559, 4
      %v2562 = vshll.u32 %v2430, 16
      %v2564 = vrot.slane %v2562, 5
      %v2565 = vsel %vm2469, %v2560, %v2564
      %v2567 = vshrl.u32 %v2431, 16
      %v2569 = vrot.slane %v2567, 4
      %v2570 = vshll.u32 %v2431, 16
      %v2572 = vrot.slane %v2570, 5
      %v2573 = vor.u32 %v2569, %v2572
      %v2574 = vrot.slane %v2573, 4
      %v2576 = vshll.u32 %v2432, 16
      %v2578 = vrot.slane %v2576, 5
      %v2579 = vsel %vm2469, %v2574, %v2578
      %v2580 = vshrl.u32 %v2432, 16
      %v2582 = vrot.slane %v2580, 4
      %v2583 = vor.u32 %v2582, %v2578
      %v2584 = vrot.slane %v2583, 4
      %v2586 = vshll.u32 %v2433, 16
      %v2588 = vrot.slane %v2586, 5
      %v2589 = vsel %vm2469, %v2584, %v2588
      %v2591 = vshrl.u32 %v2434, 16
      %v2593 = vrot.slane %v2591, 4
      %v2594 = vshll.u32 %v2434, 16
      %v2596 = vrot.slane %v2594, 5
      %v2597 = vor.u32 %v2593, %v2596
      %v2598 = vrot.slane %v2597, 4
      %v2600 = vshll.u32 %v2435, 16
      %v2602 = vrot.slane %v2600, 5
      %v2603 = vsel %vm2469, %v2598, %v2602
      %v2604 = vshrl.u32 %v2435, 16
      %v2606 = vrot.slane %v2604, 4
      %v2607 = vor.u32 %v2606, %v2602
      %v2608 = vrot.slane %v2607, 4
      %v2610 = vshll.u32 %v2436, 16
      %v2612 = vrot.slane %v2610, 5
      %v2613 = vsel %vm2469, %v2608, %v2612
      %v2615 = vshrl.u32 %v2437, 16
      %v2617 = vrot.slane %v2615, 4
      %v2618 = vshll.u32 %v2437, 16
      %v2620 = vrot.slane %v2618, 5
      %v2621 = vor.u32 %v2617, %v2620
      %v2622 = vrot.slane %v2621, 4
      %v2624 = vshll.u32 %v2438, 16
      %v2626 = vrot.slane %v2624, 5
      %v2627 = vsel %vm2469, %v2622, %v2626
      %v2628 = vshrl.u32 %v2438, 16
      %v2630 = vrot.slane %v2628, 4
      %v2631 = vor.u32 %v2630, %v2626
      %v2632 = vrot.slane %v2631, 4
      %v2634 = vshll.u32 %v2439, 16
      %v2636 = vrot.slane %v2634, 5
      %v2637 = vsel %vm2469, %v2632, %v2636
      %v2639 = vshrl.u32 %v2440, 16
      %v2641 = vrot.slane %v2639, 4
      %v2642 = vshll.u32 %v2440, 16
      %v2644 = vrot.slane %v2642, 5
      %v2645 = vor.u32 %v2641, %v2644
      %v2646 = vrot.slane %v2645, 4
      %v2648 = vshll.u32 %v2441, 16
      %v2650 = vrot.slane %v2648, 5
      %v2651 = vsel %vm2469, %v2646, %v2650
      %v2652 = vshrl.u32 %v2441, 16
      %v2654 = vrot.slane %v2652, 4
      %v2655 = vor.u32 %v2654, %v2650
      %v2656 = vrot.slane %v2655, 4
      %v2658 = vshll.u32 %v2442, 16
      %v2660 = vrot.slane %v2658, 5
      %v2661 = vsel %vm2469, %v2656, %v2660
      %v2663 = vshrl.u32 %v2443, 16
      %v2665 = vrot.slane %v2663, 4
      %v2666 = vshll.u32 %v2443, 16
      %v2668 = vrot.slane %v2666, 5
      %v2669 = vor.u32 %v2665, %v2668
      %v2670 = vrot.slane %v2669, 4
      %v2672 = vshll.u32 %v2444, 16
      %v2674 = vrot.slane %v2672, 5
      %v2675 = vsel %vm2469, %v2670, %v2674
      %v2676 = vshrl.u32 %v2444, 16
      %v2678 = vrot.slane %v2676, 4
      %v2679 = vor.u32 %v2678, %v2674
      %v2680 = vrot.slane %v2679, 4
      %v2682 = vshll.u32 %v2445, 16
      %v2684 = vrot.slane %v2682, 5
      %v2685 = vsel %vm2469, %v2680, %v2684
      %v2687 = vshrl.u32 %v2446, 16
      %v2689 = vrot.slane %v2687, 4
      %v2690 = vshll.u32 %v2446, 16
      %v2692 = vrot.slane %v2690, 5
      %v2693 = vor.u32 %v2689, %v2692
      %v2694 = vrot.slane %v2693, 4
      %v2696 = vshll.u32 %v2447, 16
      %v2698 = vrot.slane %v2696, 5
      %v2699 = vsel %vm2469, %v2694, %v2698
      %v2700 = vshrl.u32 %v2447, 16
      %v2702 = vrot.slane %v2700, 4
      %v2703 = vor.u32 %v2702, %v2698
      %v2704 = vrot.slane %v2703, 4
      %v2706 = vshll.u32 %v2448, 16
      %v2708 = vrot.slane %v2706, 5
      %v2709 = vsel %vm2469, %v2704, %v2708
      %v2711 = vshrl.u32 %v2449, 16
      %v2713 = vrot.slane %v2711, 4
      %v2714 = vshll.u32 %v2449, 16
      %v2716 = vrot.slane %v2714, 5
      %v2717 = vor.u32 %v2713, %v2716
      %v2718 = vrot.slane %v2717, 4
      %v2720 = vshll.u32 %v2450, 16
      %v2722 = vrot.slane %v2720, 5
      %v2723 = vsel %vm2469, %v2718, %v2722
      %v2724 = vshrl.u32 %v2450, 16
      %v2726 = vrot.slane %v2724, 4
      %v2727 = vor.u32 %v2726, %v2722
      %v2728 = vrot.slane %v2727, 4
      %v2730 = vshll.u32 %v2451, 16
      %v2732 = vrot.slane %v2730, 5
      %v2733 = vsel %vm2469, %v2728, %v2732
      %v2735 = vshrl.u32 %v2452, 16
      %v2737 = vrot.slane %v2735, 4
      %v2738 = vshll.u32 %v2452, 16
      %v2740 = vrot.slane %v2738, 5
      %v2741 = vor.u32 %v2737, %v2740
      %v2742 = vrot.slane %v2741, 4
      %v2744 = vshll.u32 %v2453, 16
      %v2746 = vrot.slane %v2744, 5
      %v2747 = vsel %vm2469, %v2742, %v2746
      %v2748 = vshrl.u32 %v2453, 16
      %v2750 = vrot.slane %v2748, 4
      %v2751 = vor.u32 %v2750, %v2746
      %v2752 = vrot.slane %v2751, 4
      %v2754 = vshll.u32 %v2454, 16
      %v2756 = vrot.slane %v2754, 5
      %v2757 = vsel %vm2469, %v2752, %v2756
      %v2759 = vshrl.u32 %v2455, 16
      %v2761 = vrot.slane %v2759, 4
      %v2762 = vshll.u32 %v2455, 16
      %v2764 = vrot.slane %v2762, 5
      %v2765 = vor.u32 %v2761, %v2764
      %v2766 = vrot.slane %v2765, 4
      %v2768 = vshll.u32 %v2456, 16
      %v2770 = vrot.slane %v2768, 5
      %v2771 = vsel %vm2469, %v2766, %v2770
      %v2772 = vshrl.u32 %v2456, 16
      %v2774 = vrot.slane %v2772, 4
      %v2775 = vor.u32 %v2774, %v2770
      %v2776 = vrot.slane %v2775, 4
      %v2778 = vshll.u32 %v2457, 16
      %v2780 = vrot.slane %v2778, 5
      %v2781 = vsel %vm2469, %v2776, %v2780
      %v2783 = vshrl.u32 %v2458, 16
      %v2785 = vrot.slane %v2783, 4
      %v2786 = vshll.u32 %v2458, 16
      %v2788 = vrot.slane %v2786, 5
      %v2789 = vor.u32 %v2785, %v2788
      %v2790 = vrot.slane %v2789, 4
      %v2792 = vshll.u32 %v2459, 16
      %v2794 = vrot.slane %v2792, 5
      %v2795 = vsel %vm2469, %v2790, %v2794
      %v2796 = vshrl.u32 %v2459, 16
      %v2798 = vrot.slane %v2796, 4
      %v2799 = vor.u32 %v2798, %v2794
      %v2800 = vrot.slane %v2799, 4
      %v2802 = vshll.u32 %v2460, 16
      %v2804 = vrot.slane %v2802, 5
      %v2805 = vsel %vm2469, %v2800, %v2804
      %v2807 = vshrl.u32 %v2461, 16
      %v2809 = vrot.slane %v2807, 4
      %v2810 = vshll.u32 %v2461, 16
      %v2812 = vrot.slane %v2810, 5
      %v2813 = vor.u32 %v2809, %v2812
      %v2814 = vrot.slane %v2813, 4
      %v2816 = vshll.u32 %v2462, 16
      %v2818 = vrot.slane %v2816, 5
      %v2819 = vsel %vm2469, %v2814, %v2818
      %v2820 = vshrl.u32 %v2462, 16
      %v2822 = vrot.slane %v2820, 4
      %v2823 = vor.u32 %v2822, %v2818
      %v2824 = vrot.slane %v2823, 4
      %v2826 = vshll.u32 %v2463, 16
      %v2828 = vrot.slane %v2826, 5
      %v2829 = vsel %vm2469, %v2824, %v2828
      %v2831 = vshrl.u32 %v2464, 16
      %v2833 = vrot.slane %v2831, 4
      %v2834 = vshll.u32 %v2464, 16
      %v2836 = vrot.slane %v2834, 5
      %v2837 = vor.u32 %v2833, %v2836
      %v2838 = vrot.slane %v2837, 4
      %v2840 = vshll.u32 %v2465, 16
      %v2842 = vrot.slane %v2840, 5
      %v2843 = vsel %vm2469, %v2838, %v2842
      %v2844 = vshrl.u32 %v2465, 16
      %v2846 = vrot.slane %v2844, 4
      %v2847 = vor.u32 %v2846, %v2842
      %v2848 = vrot.slane %v2847, 4
      %v2850 = vshll.u32 %v2466, 16
      %v2852 = vrot.slane %v2850, 5
      %v2853 = vsel %vm2469, %v2848, %v2852
      %s2854 = scalar_lea.vmem %s5, 8
      %v2855 = vld [vmem:[%s2854] sm:$0xf]
      %v2856 = vunpack.c.l.b16 %v2483
      %v2857 = vunpack.c.l.b16 %v2493
      %v2858 = vunpack.c.l.b16 %v2507
      %v2859 = vunpack.c.l.b16 %v2517
      %v2860 = vunpack.c.l.b16 %v2531
      %v2861 = vunpack.c.l.b16 %v2541
      %v2862 = vunpack.c.l.b16 %v2555
      %v2863 = vunpack.c.l.b16 %v2565
      %v2864 = vunpack.c.l.b16 %v2579
      %v2865 = vunpack.c.l.b16 %v2589
      %v2866 = vunpack.c.l.b16 %v2603
      %v2867 = vunpack.c.l.b16 %v2613
      %v2868 = vunpack.c.l.b16 %v2627
      %v2869 = vunpack.c.l.b16 %v2637
      %v2870 = vunpack.c.l.b16 %v2651
      %v2871 = vunpack.c.l.b16 %v2661
      %v2872 = vunpack.c.l.b16 %v2675
      %v2873 = vunpack.c.l.b16 %v2685
      %v2874 = vunpack.c.l.b16 %v2699
      %v2875 = vunpack.c.l.b16 %v2709
      %v2876 = vunpack.c.l.b16 %v2723
      %v2877 = vunpack.c.l.b16 %v2733
      %v2878 = vunpack.c.l.b16 %v2747
      %v2879 = vunpack.c.l.b16 %v2757
      %v2880 = vunpack.c.l.b16 %v2771
      %v2881 = vunpack.c.l.b16 %v2781
      %v2882 = vunpack.c.l.b16 %v2795
      %v2883 = vunpack.c.l.b16 %v2805
      %v2884 = vunpack.c.l.b16 %v2819
      %v2885 = vunpack.c.l.b16 %v2829
      %v2886 = vunpack.c.l.b16 %v2843
      %v2887 = vunpack.c.l.b16 %v2853
      %v2888 = vpack.c.b16 %v2857, %v2856
      %v2889 = vpack.c.b16 %v2859, %v2858
      %v2890 = vpack.c.b16 %v2861, %v2860
      %v2891 = vpack.c.b16 %v2863, %v2862
      %v2892 = vpack.c.b16 %v2865, %v2864
      %v2893 = vpack.c.b16 %v2867, %v2866
      %v2894 = vpack.c.b16 %v2869, %v2868
      %v2895 = vpack.c.b16 %v2871, %v2870
      %v2896 = vpack.c.b16 %v2873, %v2872
      %v2897 = vpack.c.b16 %v2875, %v2874
      %v2898 = vpack.c.b16 %v2877, %v2876
      %v2899 = vpack.c.b16 %v2879, %v2878
      %v2900 = vpack.c.b16 %v2881, %v2880
      %v2901 = vpack.c.b16 %v2883, %v2882
      %v2902 = vpack.c.b16 %v2885, %v2884
      %v2903 = vpack.c.b16 %v2887, %v2886
      %v2905 = vsel %vm1988, %v2888, 0
      %v2908 = vsel %vm1988, %v2889, 0
      %v2911 = vsel %vm1988, %v2890, 0
      %v2914 = vsel %vm1988, %v2891, 0
      %v2917 = vsel %vm1988, %v2892, 0
      %v2920 = vsel %vm1988, %v2893, 0
      %v2923 = vsel %vm1988, %v2894, 0
      %v2926 = vsel %vm1988, %v2895, 0
      %v2929 = vsel %vm1988, %v2896, 0
      %v2932 = vsel %vm1988, %v2897, 0
      %v2935 = vsel %vm1988, %v2898, 0
      %v2938 = vsel %vm1988, %v2899, 0
      %v2941 = vsel %vm1988, %v2900, 0
      %v2944 = vsel %vm1988, %v2901, 0
      %v2947 = vsel %vm1988, %v2902, 0
      %v2950 = vsel %vm1988, %v2903, 0
      %v2953 = vsel %vm2037, %v2855, 0
      %2955 = vmatpush.bf16.msra.mxu0 0
      %2956 = vmatpush.bf16.msra.mxu0 0
      %2957 = vmatpush.bf16.msra.mxu0 0
      %2958 = vmatpush.bf16.msra.mxu0 0
      %2959 = vmatpush.bf16.msra.mxu0 0
      %2960 = vmatpush.bf16.msra.mxu0 0
      %2961 = vmatpush.bf16.msra.mxu0 0
      %2962 = vmatpush.bf16.msra.mxu0 %v2953
      %2963 = vmatmul.bf16.gmra.mxu0 %v2905
      %v2964 = vpop.f32.mrf.mxu0
      %v2965 = vadd.f32 0.0, %v2964
      %v2966 = vpop.f32.mrf.mxu0
      %v2967 = vadd.f32 0.0, %v2966
      %2968 = vmatmul.bf16.gmra.mxu0 %v2908
      %v2969 = vpop.f32.mrf.mxu0
      %v2970 = vadd.f32 0.0, %v2969
      %v2971 = vpop.f32.mrf.mxu0
      %v2972 = vadd.f32 0.0, %v2971
      %2973 = vmatmul.bf16.gmra.mxu0 %v2911
      %v2974 = vpop.f32.mrf.mxu0
      %v2975 = vadd.f32 0.0, %v2974
      %v2976 = vpop.f32.mrf.mxu0
      %v2977 = vadd.f32 0.0, %v2976
      %2978 = vmatmul.bf16.gmra.mxu0 %v2914
      %v2979 = vpop.f32.mrf.mxu0
      %v2980 = vadd.f32 0.0, %v2979
      %v2981 = vpop.f32.mrf.mxu0
      %v2982 = vadd.f32 0.0, %v2981
      %2983 = vmatmul.bf16.gmra.mxu0 %v2917
      %v2984 = vpop.f32.mrf.mxu0
      %v2985 = vadd.f32 0.0, %v2984
      %v2986 = vpop.f32.mrf.mxu0
      %v2987 = vadd.f32 0.0, %v2986
      %2988 = vmatmul.bf16.gmra.mxu0 %v2920
      %v2989 = vpop.f32.mrf.mxu0
      %v2990 = vadd.f32 0.0, %v2989
      %v2991 = vpop.f32.mrf.mxu0
      %v2992 = vadd.f32 0.0, %v2991
      %2993 = vmatmul.bf16.gmra.mxu0 %v2923
      %v2994 = vpop.f32.mrf.mxu0
      %v2995 = vadd.f32 0.0, %v2994
      %v2996 = vpop.f32.mrf.mxu0
      %v2997 = vadd.f32 0.0, %v2996
      %2998 = vmatmul.bf16.gmra.mxu0 %v2926
      %v2999 = vpop.f32.mrf.mxu0
      %v3000 = vadd.f32 0.0, %v2999
      %v3001 = vpop.f32.mrf.mxu0
      %v3002 = vadd.f32 0.0, %v3001
      %3003 = vmatmul.bf16.gmra.mxu0 %v2929
      %v3004 = vpop.f32.mrf.mxu0
      %v3005 = vadd.f32 0.0, %v3004
      %v3006 = vpop.f32.mrf.mxu0
      %v3007 = vadd.f32 0.0, %v3006
      %3008 = vmatmul.bf16.gmra.mxu0 %v2932
      %v3009 = vpop.f32.mrf.mxu0
      %v3010 = vadd.f32 0.0, %v3009
      %v3011 = vpop.f32.mrf.mxu0
      %v3012 = vadd.f32 0.0, %v3011
      %3013 = vmatmul.bf16.gmra.mxu0 %v2935
      %v3014 = vpop.f32.mrf.mxu0
      %v3015 = vadd.f32 0.0, %v3014
      %v3016 = vpop.f32.mrf.mxu0
      %v3017 = vadd.f32 0.0, %v3016
      %3018 = vmatmul.bf16.gmra.mxu0 %v2938
      %v3019 = vpop.f32.mrf.mxu0
      %v3020 = vadd.f32 0.0, %v3019
      %v3021 = vpop.f32.mrf.mxu0
      %v3022 = vadd.f32 0.0, %v3021
      %3023 = vmatmul.bf16.gmra.mxu0 %v2941
      %v3024 = vpop.f32.mrf.mxu0
      %v3025 = vadd.f32 0.0, %v3024
      %v3026 = vpop.f32.mrf.mxu0
      %v3027 = vadd.f32 0.0, %v3026
      %3028 = vmatmul.bf16.gmra.mxu0 %v2944
      %v3029 = vpop.f32.mrf.mxu0
      %v3030 = vadd.f32 0.0, %v3029
      %v3031 = vpop.f32.mrf.mxu0
      %v3032 = vadd.f32 0.0, %v3031
      %3033 = vmatmul.bf16.gmra.mxu0 %v2947
      %v3034 = vpop.f32.mrf.mxu0
      %v3035 = vadd.f32 0.0, %v3034
      %v3036 = vpop.f32.mrf.mxu0
      %v3037 = vadd.f32 0.0, %v3036
      %3038 = vmatmul.bf16.gmra.mxu0 %v2950
      %v3039 = vpop.f32.mrf.mxu0
      %v3040 = vadd.f32 0.0, %v3039
      %v3041 = vpop.f32.mrf.mxu0
      %v3042 = vadd.f32 0.0, %v3041
      %3043 = vdwg.mxu0
      %v3044 = vadd.f32 %v2387, %v2965
      %v3045 = vadd.f32 %v2388, %v2967
      %v3046 = vadd.f32 %v2389, %v2970
      %v3047 = vadd.f32 %v2390, %v2972
      %v3048 = vadd.f32 %v2391, %v2975
      %v3049 = vadd.f32 %v2392, %v2977
      %v3050 = vadd.f32 %v2393, %v2980
      %v3051 = vadd.f32 %v2394, %v2982
      %v3052 = vadd.f32 %v2395, %v2985
      %v3053 = vadd.f32 %v2396, %v2987
      %v3054 = vadd.f32 %v2397, %v2990
      %v3055 = vadd.f32 %v2398, %v2992
      %v3056 = vadd.f32 %v2399, %v2995
      %v3057 = vadd.f32 %v2400, %v2997
      %v3058 = vadd.f32 %v2401, %v3000
      %v3059 = vadd.f32 %v2402, %v3002
      %v3060 = vadd.f32 %v2403, %v3005
      %v3061 = vadd.f32 %v2404, %v3007
      %v3062 = vadd.f32 %v2405, %v3010
      %v3063 = vadd.f32 %v2406, %v3012
      %v3064 = vadd.f32 %v2407, %v3015
      %v3065 = vadd.f32 %v2408, %v3017
      %v3066 = vadd.f32 %v2409, %v3020
      %v3067 = vadd.f32 %v2410, %v3022
      %v3068 = vadd.f32 %v2411, %v3025
      %v3069 = vadd.f32 %v2412, %v3027
      %v3070 = vadd.f32 %v2413, %v3030
      %v3071 = vadd.f32 %v2414, %v3032
      %v3072 = vadd.f32 %v2415, %v3035
      %v3073 = vadd.f32 %v2416, %v3037
      %v3074 = vadd.f32 %v2417, %v3040
      %v3075 = vadd.f32 %v2418, %v3042
      %v3076 = vld [vmem:[%s1352] sm:$0x8]
      %v3077 = vld [vmem:[%s1352 + $0x4] sm:$0xf]
      %v3078 = vld [vmem:[%s1352 + $0x8] sm:$0xf]
      %v3079 = vld [vmem:[%s1352 + $0x10] sm:$0x8]
      %v3080 = vld [vmem:[%s1352 + $0x14] sm:$0xf]
      %v3081 = vld [vmem:[%s1352 + $0x18] sm:$0xf]
      %v3082 = vld [vmem:[%s1352 + $0x20] sm:$0x8]
      %v3083 = vld [vmem:[%s1352 + $0x24] sm:$0xf]
      %v3084 = vld [vmem:[%s1352 + $0x28] sm:$0xf]
      %v3085 = vld [vmem:[%s1352 + $0x30] sm:$0x8]
      %v3086 = vld [vmem:[%s1352 + $0x34] sm:$0xf]
      %v3087 = vld [vmem:[%s1352 + $0x38] sm:$0xf]
      %v3088 = vld [vmem:[%s1352 + $0x40] sm:$0x8]
      %v3089 = vld [vmem:[%s1352 + $0x44] sm:$0xf]
      %v3090 = vld [vmem:[%s1352 + $0x48] sm:$0xf]
      %v3091 = vld [vmem:[%s1352 + $0x50] sm:$0x8]
      %v3092 = vld [vmem:[%s1352 + $0x54] sm:$0xf]
      %v3093 = vld [vmem:[%s1352 + $0x58] sm:$0xf]
      %v3094 = vld [vmem:[%s1352 + $0x60] sm:$0x8]
      %v3095 = vld [vmem:[%s1352 + $0x64] sm:$0xf]
      %v3096 = vld [vmem:[%s1352 + $0x68] sm:$0xf]
      %v3097 = vld [vmem:[%s1352 + $0x70] sm:$0x8]
      %v3098 = vld [vmem:[%s1352 + $0x74] sm:$0xf]
      %v3099 = vld [vmem:[%s1352 + $0x78] sm:$0xf]
      %v3100 = vld [vmem:[%s1352 + $0x80] sm:$0x8]
      %v3101 = vld [vmem:[%s1352 + $0x84] sm:$0xf]
      %v3102 = vld [vmem:[%s1352 + $0x88] sm:$0xf]
      %v3103 = vld [vmem:[%s1352 + $0x90] sm:$0x8]
      %v3104 = vld [vmem:[%s1352 + $0x94] sm:$0xf]
      %v3105 = vld [vmem:[%s1352 + $0x98] sm:$0xf]
      %v3106 = vld [vmem:[%s1352 + $0xa0] sm:$0x8]
      %v3107 = vld [vmem:[%s1352 + $0xa4] sm:$0xf]
      %v3108 = vld [vmem:[%s1352 + $0xa8] sm:$0xf]
      %v3109 = vld [vmem:[%s1352 + $0xb0] sm:$0x8]
      %v3110 = vld [vmem:[%s1352 + $0xb4] sm:$0xf]
      %v3111 = vld [vmem:[%s1352 + $0xb8] sm:$0xf]
      %v3112 = vld [vmem:[%s1352 + $0xc0] sm:$0x8]
      %v3113 = vld [vmem:[%s1352 + $0xc4] sm:$0xf]
      %v3114 = vld [vmem:[%s1352 + $0xc8] sm:$0xf]
      %v3115 = vld [vmem:[%s1352 + $0xd0] sm:$0x8]
      %v3116 = vld [vmem:[%s1352 + $0xd4] sm:$0xf]
      %v3117 = vld [vmem:[%s1352 + $0xd8] sm:$0xf]
      %v3118 = vld [vmem:[%s1352 + $0xe0] sm:$0x8]
      %v3119 = vld [vmem:[%s1352 + $0xe4] sm:$0xf]
      %v3120 = vld [vmem:[%s1352 + $0xe8] sm:$0xf]
      %v3121 = vld [vmem:[%s1352 + $0xf0] sm:$0x8]
      %v3122 = vld [vmem:[%s1352 + $0xf4] sm:$0xf]
      %v3123 = vld [vmem:[%s1352 + $0xf8] sm:$0xf]
      %v3125 = vshrl.u32 %v3076, 16
      %v3127 = vrot.slane %v3125, 7
      %v3128 = vrot.slane %v3127, 4
      %v3130 = vshrl.u32 %v3077, 16
      %v3132 = vrot.slane %v3130, 7
      %v3133 = vshll.u32 %v3077, 16
      %v3135 = vor.u32 %v3132, %v3133
      %v3136 = vsel %vm1586, %v3128, %v3135
      %v3137 = vrot.slane %v3132, 4
      %v3139 = vshrl.u32 %v3078, 16
      %v3141 = vrot.slane %v3139, 7
      %v3142 = vshll.u32 %v3078, 16
      %v3144 = vor.u32 %v3141, %v3142
      %v3145 = vsel %vm1586, %v3137, %v3144
      %v3147 = vshrl.u32 %v3079, 16
      %v3149 = vrot.slane %v3147, 7
      %v3150 = vrot.slane %v3149, 4
      %v3152 = vshrl.u32 %v3080, 16
      %v3154 = vrot.slane %v3152, 7
      %v3155 = vshll.u32 %v3080, 16
      %v3157 = vor.u32 %v3154, %v3155
      %v3158 = vsel %vm1586, %v3150, %v3157
      %v3159 = vrot.slane %v3154, 4
      %v3161 = vshrl.u32 %v3081, 16
      %v3163 = vrot.slane %v3161, 7
      %v3164 = vshll.u32 %v3081, 16
      %v3166 = vor.u32 %v3163, %v3164
      %v3167 = vsel %vm1586, %v3159, %v3166
      %v3169 = vshrl.u32 %v3082, 16
      %v3171 = vrot.slane %v3169, 7
      %v3172 = vrot.slane %v3171, 4
      %v3174 = vshrl.u32 %v3083, 16
      %v3176 = vrot.slane %v3174, 7
      %v3177 = vshll.u32 %v3083, 16
      %v3179 = vor.u32 %v3176, %v3177
      %v3180 = vsel %vm1586, %v3172, %v3179
      %v3181 = vrot.slane %v3176, 4
      %v3183 = vshrl.u32 %v3084, 16
      %v3185 = vrot.slane %v3183, 7
      %v3186 = vshll.u32 %v3084, 16
      %v3188 = vor.u32 %v3185, %v3186
      %v3189 = vsel %vm1586, %v3181, %v3188
      %v3191 = vshrl.u32 %v3085, 16
      %v3193 = vrot.slane %v3191, 7
      %v3194 = vrot.slane %v3193, 4
      %v3196 = vshrl.u32 %v3086, 16
      %v3198 = vrot.slane %v3196, 7
      %v3199 = vshll.u32 %v3086, 16
      %v3201 = vor.u32 %v3198, %v3199
      %v3202 = vsel %vm1586, %v3194, %v3201
      %v3203 = vrot.slane %v3198, 4
      %v3205 = vshrl.u32 %v3087, 16
      %v3207 = vrot.slane %v3205, 7
      %v3208 = vshll.u32 %v3087, 16
      %v3210 = vor.u32 %v3207, %v3208
      %v3211 = vsel %vm1586, %v3203, %v3210
      %v3213 = vshrl.u32 %v3088, 16
      %v3215 = vrot.slane %v3213, 7
      %v3216 = vrot.slane %v3215, 4
      %v3218 = vshrl.u32 %v3089, 16
      %v3220 = vrot.slane %v3218, 7
      %v3221 = vshll.u32 %v3089, 16
      %v3223 = vor.u32 %v3220, %v3221
      %v3224 = vsel %vm1586, %v3216, %v3223
      %v3225 = vrot.slane %v3220, 4
      %v3227 = vshrl.u32 %v3090, 16
      %v3229 = vrot.slane %v3227, 7
      %v3230 = vshll.u32 %v3090, 16
      %v3232 = vor.u32 %v3229, %v3230
      %v3233 = vsel %vm1586, %v3225, %v3232
      %v3235 = vshrl.u32 %v3091, 16
      %v3237 = vrot.slane %v3235, 7
      %v3238 = vrot.slane %v3237, 4
      %v3240 = vshrl.u32 %v3092, 16
      %v3242 = vrot.slane %v3240, 7
      %v3243 = vshll.u32 %v3092, 16
      %v3245 = vor.u32 %v3242, %v3243
      %v3246 = vsel %vm1586, %v3238, %v3245
      %v3247 = vrot.slane %v3242, 4
      %v3249 = vshrl.u32 %v3093, 16
      %v3251 = vrot.slane %v3249, 7
      %v3252 = vshll.u32 %v3093, 16
      %v3254 = vor.u32 %v3251, %v3252
      %v3255 = vsel %vm1586, %v3247, %v3254
      %v3257 = vshrl.u32 %v3094, 16
      %v3259 = vrot.slane %v3257, 7
      %v3260 = vrot.slane %v3259, 4
      %v3262 = vshrl.u32 %v3095, 16
      %v3264 = vrot.slane %v3262, 7
      %v3265 = vshll.u32 %v3095, 16
      %v3267 = vor.u32 %v3264, %v3265
      %v3268 = vsel %vm1586, %v3260, %v3267
      %v3269 = vrot.slane %v3264, 4
      %v3271 = vshrl.u32 %v3096, 16
      %v3273 = vrot.slane %v3271, 7
      %v3274 = vshll.u32 %v3096, 16
      %v3276 = vor.u32 %v3273, %v3274
      %v3277 = vsel %vm1586, %v3269, %v3276
      %v3279 = vshrl.u32 %v3097, 16
      %v3281 = vrot.slane %v3279, 7
      %v3282 = vrot.slane %v3281, 4
      %v3284 = vshrl.u32 %v3098, 16
      %v3286 = vrot.slane %v3284, 7
      %v3287 = vshll.u32 %v3098, 16
      %v3289 = vor.u32 %v3286, %v3287
      %v3290 = vsel %vm1586, %v3282, %v3289
      %v3291 = vrot.slane %v3286, 4
      %v3293 = vshrl.u32 %v3099, 16
      %v3295 = vrot.slane %v3293, 7
      %v3296 = vshll.u32 %v3099, 16
      %v3298 = vor.u32 %v3295, %v3296
      %v3299 = vsel %vm1586, %v3291, %v3298
      %v3301 = vshrl.u32 %v3100, 16
      %v3303 = vrot.slane %v3301, 7
      %v3304 = vrot.slane %v3303, 4
      %v3306 = vshrl.u32 %v3101, 16
      %v3308 = vrot.slane %v3306, 7
      %v3309 = vshll.u32 %v3101, 16
      %v3311 = vor.u32 %v3308, %v3309
      %v3312 = vsel %vm1586, %v3304, %v3311
      %v3313 = vrot.slane %v3308, 4
      %v3315 = vshrl.u32 %v3102, 16
      %v3317 = vrot.slane %v3315, 7
      %v3318 = vshll.u32 %v3102, 16
      %v3320 = vor.u32 %v3317, %v3318
      %v3321 = vsel %vm1586, %v3313, %v3320
      %v3323 = vshrl.u32 %v3103, 16
      %v3325 = vrot.slane %v3323, 7
      %v3326 = vrot.slane %v3325, 4
      %v3328 = vshrl.u32 %v3104, 16
      %v3330 = vrot.slane %v3328, 7
      %v3331 = vshll.u32 %v3104, 16
      %v3333 = vor.u32 %v3330, %v3331
      %v3334 = vsel %vm1586, %v3326, %v3333
      %v3335 = vrot.slane %v3330, 4
      %v3337 = vshrl.u32 %v3105, 16
      %v3339 = vrot.slane %v3337, 7
      %v3340 = vshll.u32 %v3105, 16
      %v3342 = vor.u32 %v3339, %v3340
      %v3343 = vsel %vm1586, %v3335, %v3342
      %v3345 = vshrl.u32 %v3106, 16
      %v3347 = vrot.slane %v3345, 7
      %v3348 = vrot.slane %v3347, 4
      %v3350 = vshrl.u32 %v3107, 16
      %v3352 = vrot.slane %v3350, 7
      %v3353 = vshll.u32 %v3107, 16
      %v3355 = vor.u32 %v3352, %v3353
      %v3356 = vsel %vm1586, %v3348, %v3355
      %v3357 = vrot.slane %v3352, 4
      %v3359 = vshrl.u32 %v3108, 16
      %v3361 = vrot.slane %v3359, 7
      %v3362 = vshll.u32 %v3108, 16
      %v3364 = vor.u32 %v3361, %v3362
      %v3365 = vsel %vm1586, %v3357, %v3364
      %v3367 = vshrl.u32 %v3109, 16
      %v3369 = vrot.slane %v3367, 7
      %v3370 = vrot.slane %v3369, 4
      %v3372 = vshrl.u32 %v3110, 16
      %v3374 = vrot.slane %v3372, 7
      %v3375 = vshll.u32 %v3110, 16
      %v3377 = vor.u32 %v3374, %v3375
      %v3378 = vsel %vm1586, %v3370, %v3377
      %v3379 = vrot.slane %v3374, 4
      %v3381 = vshrl.u32 %v3111, 16
      %v3383 = vrot.slane %v3381, 7
      %v3384 = vshll.u32 %v3111, 16
      %v3386 = vor.u32 %v3383, %v3384
      %v3387 = vsel %vm1586, %v3379, %v3386
      %v3389 = vshrl.u32 %v3112, 16
      %v3391 = vrot.slane %v3389, 7
      %v3392 = vrot.slane %v3391, 4
      %v3394 = vshrl.u32 %v3113, 16
      %v3396 = vrot.slane %v3394, 7
      %v3397 = vshll.u32 %v3113, 16
      %v3399 = vor.u32 %v3396, %v3397
      %v3400 = vsel %vm1586, %v3392, %v3399
      %v3401 = vrot.slane %v3396, 4
      %v3403 = vshrl.u32 %v3114, 16
      %v3405 = vrot.slane %v3403, 7
      %v3406 = vshll.u32 %v3114, 16
      %v3408 = vor.u32 %v3405, %v3406
      %v3409 = vsel %vm1586, %v3401, %v3408
      %v3411 = vshrl.u32 %v3115, 16
      %v3413 = vrot.slane %v3411, 7
      %v3414 = vrot.slane %v3413, 4
      %v3416 = vshrl.u32 %v3116, 16
      %v3418 = vrot.slane %v3416, 7
      %v3419 = vshll.u32 %v3116, 16
      %v3421 = vor.u32 %v3418, %v3419
      %v3422 = vsel %vm1586, %v3414, %v3421
      %v3423 = vrot.slane %v3418, 4
      %v3425 = vshrl.u32 %v3117, 16
      %v3427 = vrot.slane %v3425, 7
      %v3428 = vshll.u32 %v3117, 16
      %v3430 = vor.u32 %v3427, %v3428
      %v3431 = vsel %vm1586, %v3423, %v3430
      %v3433 = vshrl.u32 %v3118, 16
      %v3435 = vrot.slane %v3433, 7
      %v3436 = vrot.slane %v3435, 4
      %v3438 = vshrl.u32 %v3119, 16
      %v3440 = vrot.slane %v3438, 7
      %v3441 = vshll.u32 %v3119, 16
      %v3443 = vor.u32 %v3440, %v3441
      %v3444 = vsel %vm1586, %v3436, %v3443
      %v3445 = vrot.slane %v3440, 4
      %v3447 = vshrl.u32 %v3120, 16
      %v3449 = vrot.slane %v3447, 7
      %v3450 = vshll.u32 %v3120, 16
      %v3452 = vor.u32 %v3449, %v3450
      %v3453 = vsel %vm1586, %v3445, %v3452
      %v3455 = vshrl.u32 %v3121, 16
      %v3457 = vrot.slane %v3455, 7
      %v3458 = vrot.slane %v3457, 4
      %v3460 = vshrl.u32 %v3122, 16
      %v3462 = vrot.slane %v3460, 7
      %v3463 = vshll.u32 %v3122, 16
      %v3465 = vor.u32 %v3462, %v3463
      %v3466 = vsel %vm1586, %v3458, %v3465
      %v3467 = vrot.slane %v3462, 4
      %v3469 = vshrl.u32 %v3123, 16
      %v3471 = vrot.slane %v3469, 7
      %v3472 = vshll.u32 %v3123, 16
      %v3474 = vor.u32 %v3471, %v3472
      %v3475 = vsel %vm1586, %v3467, %v3474
      %s3476 = scalar_lea.vmem %s5, 12
      %v3477 = vld [vmem:[%s3476] sm:$0xf]
      %v3478 = vunpack.c.l.b16 %v3136
      %v3479 = vunpack.c.l.b16 %v3145
      %v3480 = vunpack.c.l.b16 %v3158
      %v3481 = vunpack.c.l.b16 %v3167
      %v3482 = vunpack.c.l.b16 %v3180
      %v3483 = vunpack.c.l.b16 %v3189
      %v3484 = vunpack.c.l.b16 %v3202
      %v3485 = vunpack.c.l.b16 %v3211
      %v3486 = vunpack.c.l.b16 %v3224
      %v3487 = vunpack.c.l.b16 %v3233
      %v3488 = vunpack.c.l.b16 %v3246
      %v3489 = vunpack.c.l.b16 %v3255
      %v3490 = vunpack.c.l.b16 %v3268
      %v3491 = vunpack.c.l.b16 %v3277
      %v3492 = vunpack.c.l.b16 %v3290
      %v3493 = vunpack.c.l.b16 %v3299
      %v3494 = vunpack.c.l.b16 %v3312
      %v3495 = vunpack.c.l.b16 %v3321
      %v3496 = vunpack.c.l.b16 %v3334
      %v3497 = vunpack.c.l.b16 %v3343
      %v3498 = vunpack.c.l.b16 %v3356
      %v3499 = vunpack.c.l.b16 %v3365
      %v3500 = vunpack.c.l.b16 %v3378
      %v3501 = vunpack.c.l.b16 %v3387
      %v3502 = vunpack.c.l.b16 %v3400
      %v3503 = vunpack.c.l.b16 %v3409
      %v3504 = vunpack.c.l.b16 %v3422
      %v3505 = vunpack.c.l.b16 %v3431
      %v3506 = vunpack.c.l.b16 %v3444
      %v3507 = vunpack.c.l.b16 %v3453
      %v3508 = vunpack.c.l.b16 %v3466
      %v3509 = vunpack.c.l.b16 %v3475
      %v3510 = vpack.c.b16 %v3479, %v3478
      %v3511 = vpack.c.b16 %v3481, %v3480
      %v3512 = vpack.c.b16 %v3483, %v3482
      %v3513 = vpack.c.b16 %v3485, %v3484
      %v3514 = vpack.c.b16 %v3487, %v3486
      %v3515 = vpack.c.b16 %v3489, %v3488
      %v3516 = vpack.c.b16 %v3491, %v3490
      %v3517 = vpack.c.b16 %v3493, %v3492
      %v3518 = vpack.c.b16 %v3495, %v3494
      %v3519 = vpack.c.b16 %v3497, %v3496
      %v3520 = vpack.c.b16 %v3499, %v3498
      %v3521 = vpack.c.b16 %v3501, %v3500
      %v3522 = vpack.c.b16 %v3503, %v3502
      %v3523 = vpack.c.b16 %v3505, %v3504
      %v3524 = vpack.c.b16 %v3507, %v3506
      %v3525 = vpack.c.b16 %v3509, %v3508
      %v3527 = vsel %vm1988, %v3510, 0
      %v3530 = vsel %vm1988, %v3511, 0
      %v3533 = vsel %vm1988, %v3512, 0
      %v3536 = vsel %vm1988, %v3513, 0
      %v3539 = vsel %vm1988, %v3514, 0
      %v3542 = vsel %vm1988, %v3515, 0
      %v3545 = vsel %vm1988, %v3516, 0
      %v3548 = vsel %vm1988, %v3517, 0
      %v3551 = vsel %vm1988, %v3518, 0
      %v3554 = vsel %vm1988, %v3519, 0
      %v3557 = vsel %vm1988, %v3520, 0
      %v3560 = vsel %vm1988, %v3521, 0
      %v3563 = vsel %vm1988, %v3522, 0
      %v3566 = vsel %vm1988, %v3523, 0
      %v3569 = vsel %vm1988, %v3524, 0
      %v3572 = vsel %vm1988, %v3525, 0
      %v3575 = vsel %vm2037, %v3477, 0
      %3577 = vmatpush.bf16.msra.mxu0 0
      %3578 = vmatpush.bf16.msra.mxu0 0
      %3579 = vmatpush.bf16.msra.mxu0 0
      %3580 = vmatpush.bf16.msra.mxu0 0
      %3581 = vmatpush.bf16.msra.mxu0 0
      %3582 = vmatpush.bf16.msra.mxu0 0
      %3583 = vmatpush.bf16.msra.mxu0 0
      %3584 = vmatpush.bf16.msra.mxu0 %v3575
      %3585 = vmatmul.bf16.gmra.mxu0 %v3527
      %v3586 = vpop.f32.mrf.mxu0
      %v3587 = vadd.f32 0.0, %v3586
      %v3588 = vpop.f32.mrf.mxu0
      %v3589 = vadd.f32 0.0, %v3588
      %3590 = vmatmul.bf16.gmra.mxu0 %v3530
      %v3591 = vpop.f32.mrf.mxu0
      %v3592 = vadd.f32 0.0, %v3591
      %v3593 = vpop.f32.mrf.mxu0
      %v3594 = vadd.f32 0.0, %v3593
      %3595 = vmatmul.bf16.gmra.mxu0 %v3533
      %v3596 = vpop.f32.mrf.mxu0
      %v3597 = vadd.f32 0.0, %v3596
      %v3598 = vpop.f32.mrf.mxu0
      %v3599 = vadd.f32 0.0, %v3598
      %3600 = vmatmul.bf16.gmra.mxu0 %v3536
      %v3601 = vpop.f32.mrf.mxu0
      %v3602 = vadd.f32 0.0, %v3601
      %v3603 = vpop.f32.mrf.mxu0
      %v3604 = vadd.f32 0.0, %v3603
      %3605 = vmatmul.bf16.gmra.mxu0 %v3539
      %v3606 = vpop.f32.mrf.mxu0
      %v3607 = vadd.f32 0.0, %v3606
      %v3608 = vpop.f32.mrf.mxu0
      %v3609 = vadd.f32 0.0, %v3608
      %3610 = vmatmul.bf16.gmra.mxu0 %v3542
      %v3611 = vpop.f32.mrf.mxu0
      %v3612 = vadd.f32 0.0, %v3611
      %v3613 = vpop.f32.mrf.mxu0
      %v3614 = vadd.f32 0.0, %v3613
      %3615 = vmatmul.bf16.gmra.mxu0 %v3545
      %v3616 = vpop.f32.mrf.mxu0
      %v3617 = vadd.f32 0.0, %v3616
      %v3618 = vpop.f32.mrf.mxu0
      %v3619 = vadd.f32 0.0, %v3618
      %3620 = vmatmul.bf16.gmra.mxu0 %v3548
      %v3621 = vpop.f32.mrf.mxu0
      %v3622 = vadd.f32 0.0, %v3621
      %v3623 = vpop.f32.mrf.mxu0
      %v3624 = vadd.f32 0.0, %v3623
      %3625 = vmatmul.bf16.gmra.mxu0 %v3551
      %v3626 = vpop.f32.mrf.mxu0
      %v3627 = vadd.f32 0.0, %v3626
      %v3628 = vpop.f32.mrf.mxu0
      %v3629 = vadd.f32 0.0, %v3628
      %3630 = vmatmul.bf16.gmra.mxu0 %v3554
      %v3631 = vpop.f32.mrf.mxu0
      %v3632 = vadd.f32 0.0, %v3631
      %v3633 = vpop.f32.mrf.mxu0
      %v3634 = vadd.f32 0.0, %v3633
      %3635 = vmatmul.bf16.gmra.mxu0 %v3557
      %v3636 = vpop.f32.mrf.mxu0
      %v3637 = vadd.f32 0.0, %v3636
      %v3638 = vpop.f32.mrf.mxu0
      %v3639 = vadd.f32 0.0, %v3638
      %3640 = vmatmul.bf16.gmra.mxu0 %v3560
      %v3641 = vpop.f32.mrf.mxu0
      %v3642 = vadd.f32 0.0, %v3641
      %v3643 = vpop.f32.mrf.mxu0
      %v3644 = vadd.f32 0.0, %v3643
      %3645 = vmatmul.bf16.gmra.mxu0 %v3563
      %v3646 = vpop.f32.mrf.mxu0
      %v3647 = vadd.f32 0.0, %v3646
      %v3648 = vpop.f32.mrf.mxu0
      %v3649 = vadd.f32 0.0, %v3648
      %3650 = vmatmul.bf16.gmra.mxu0 %v3566
      %v3651 = vpop.f32.mrf.mxu0
      %v3652 = vadd.f32 0.0, %v3651
      %v3653 = vpop.f32.mrf.mxu0
      %v3654 = vadd.f32 0.0, %v3653
      %3655 = vmatmul.bf16.gmra.mxu0 %v3569
      %v3656 = vpop.f32.mrf.mxu0
      %v3657 = vadd.f32 0.0, %v3656
      %v3658 = vpop.f32.mrf.mxu0
      %v3659 = vadd.f32 0.0, %v3658
      %3660 = vmatmul.bf16.gmra.mxu0 %v3572
      %v3661 = vpop.f32.mrf.mxu0
      %v3662 = vadd.f32 0.0, %v3661
      %v3663 = vpop.f32.mrf.mxu0
      %v3664 = vadd.f32 0.0, %v3663
      %3665 = vdwg.mxu0
      %v3666 = vadd.f32 %v3044, %v3587
      %v3667 = vadd.f32 %v3045, %v3589
      %v3668 = vadd.f32 %v3046, %v3592
      %v3669 = vadd.f32 %v3047, %v3594
      %v3670 = vadd.f32 %v3048, %v3597
      %v3671 = vadd.f32 %v3049, %v3599
      %v3672 = vadd.f32 %v3050, %v3602
      %v3673 = vadd.f32 %v3051, %v3604
      %v3674 = vadd.f32 %v3052, %v3607
      %v3675 = vadd.f32 %v3053, %v3609
      %v3676 = vadd.f32 %v3054, %v3612
      %v3677 = vadd.f32 %v3055, %v3614
      %v3678 = vadd.f32 %v3056, %v3617
      %v3679 = vadd.f32 %v3057, %v3619
      %v3680 = vadd.f32 %v3058, %v3622
      %v3681 = vadd.f32 %v3059, %v3624
      %v3682 = vadd.f32 %v3060, %v3627
      %v3683 = vadd.f32 %v3061, %v3629
      %v3684 = vadd.f32 %v3062, %v3632
      %v3685 = vadd.f32 %v3063, %v3634
      %v3686 = vadd.f32 %v3064, %v3637
      %v3687 = vadd.f32 %v3065, %v3639
      %v3688 = vadd.f32 %v3066, %v3642
      %v3689 = vadd.f32 %v3067, %v3644
      %v3690 = vadd.f32 %v3068, %v3647
      %v3691 = vadd.f32 %v3069, %v3649
      %v3692 = vadd.f32 %v3070, %v3652
      %v3693 = vadd.f32 %v3071, %v3654
      %v3694 = vadd.f32 %v3072, %v3657
      %v3695 = vadd.f32 %v3073, %v3659
      %v3696 = vadd.f32 %v3074, %v3662
      %v3697 = vadd.f32 %v3075, %v3664
      %s3698 = scalar_lea.vmem %s5, 16
      %v3699 = vld [vmem:[%s3698] sm:$0xf]
      %v3732 = vunpack.c.l.b16 %v3077
      %v3733 = vunpack.c.l.b16 %v3078
      %v3734 = vunpack.c.l.b16 %v3080
      %v3735 = vunpack.c.l.b16 %v3081
      %v3736 = vunpack.c.l.b16 %v3083
      %v3737 = vunpack.c.l.b16 %v3084
      %v3738 = vunpack.c.l.b16 %v3086
      %v3739 = vunpack.c.l.b16 %v3087
      %v3740 = vunpack.c.l.b16 %v3089
      %v3741 = vunpack.c.l.b16 %v3090
      %v3742 = vunpack.c.l.b16 %v3092
      %v3743 = vunpack.c.l.b16 %v3093
      %v3744 = vunpack.c.l.b16 %v3095
      %v3745 = vunpack.c.l.b16 %v3096
      %v3746 = vunpack.c.l.b16 %v3098
      %v3747 = vunpack.c.l.b16 %v3099
      %v3748 = vunpack.c.l.b16 %v3101
      %v3749 = vunpack.c.l.b16 %v3102
      %v3750 = vunpack.c.l.b16 %v3104
      %v3751 = vunpack.c.l.b16 %v3105
      %v3752 = vunpack.c.l.b16 %v3107
      %v3753 = vunpack.c.l.b16 %v3108
      %v3754 = vunpack.c.l.b16 %v3110
      %v3755 = vunpack.c.l.b16 %v3111
      %v3756 = vunpack.c.l.b16 %v3113
      %v3757 = vunpack.c.l.b16 %v3114
      %v3758 = vunpack.c.l.b16 %v3116
      %v3759 = vunpack.c.l.b16 %v3117
      %v3760 = vunpack.c.l.b16 %v3119
      %v3761 = vunpack.c.l.b16 %v3120
      %v3762 = vunpack.c.l.b16 %v3122
      %v3763 = vunpack.c.l.b16 %v3123
      %v3764 = vpack.c.b16 %v3733, %v3732
      %v3765 = vpack.c.b16 %v3735, %v3734
      %v3766 = vpack.c.b16 %v3737, %v3736
      %v3767 = vpack.c.b16 %v3739, %v3738
      %v3768 = vpack.c.b16 %v3741, %v3740
      %v3769 = vpack.c.b16 %v3743, %v3742
      %v3770 = vpack.c.b16 %v3745, %v3744
      %v3771 = vpack.c.b16 %v3747, %v3746
      %v3772 = vpack.c.b16 %v3749, %v3748
      %v3773 = vpack.c.b16 %v3751, %v3750
      %v3774 = vpack.c.b16 %v3753, %v3752
      %v3775 = vpack.c.b16 %v3755, %v3754
      %v3776 = vpack.c.b16 %v3757, %v3756
      %v3777 = vpack.c.b16 %v3759, %v3758
      %v3778 = vpack.c.b16 %v3761, %v3760
      %v3779 = vpack.c.b16 %v3763, %v3762
      %v3781 = vsel %vm1988, %v3764, 0
      %v3784 = vsel %vm1988, %v3765, 0
      %v3787 = vsel %vm1988, %v3766, 0
      %v3790 = vsel %vm1988, %v3767, 0
      %v3793 = vsel %vm1988, %v3768, 0
      %v3796 = vsel %vm1988, %v3769, 0
      %v3799 = vsel %vm1988, %v3770, 0
      %v3802 = vsel %vm1988, %v3771, 0
      %v3805 = vsel %vm1988, %v3772, 0
      %v3808 = vsel %vm1988, %v3773, 0
      %v3811 = vsel %vm1988, %v3774, 0
      %v3814 = vsel %vm1988, %v3775, 0
      %v3817 = vsel %vm1988, %v3776, 0
      %v3820 = vsel %vm1988, %v3777, 0
      %v3823 = vsel %vm1988, %v3778, 0
      %v3826 = vsel %vm1988, %v3779, 0
      %v3829 = vsel %vm2037, %v3699, 0
      %3831 = vmatpush.bf16.msra.mxu0 0
      %3832 = vmatpush.bf16.msra.mxu0 0
      %3833 = vmatpush.bf16.msra.mxu0 0
      %3834 = vmatpush.bf16.msra.mxu0 0
      %3835 = vmatpush.bf16.msra.mxu0 0
      %3836 = vmatpush.bf16.msra.mxu0 0
      %3837 = vmatpush.bf16.msra.mxu0 0
      %3838 = vmatpush.bf16.msra.mxu0 %v3829
      %3839 = vmatmul.bf16.gmra.mxu0 %v3781
      %v3840 = vpop.f32.mrf.mxu0
      %v3841 = vadd.f32 0.0, %v3840
      %v3842 = vpop.f32.mrf.mxu0
      %v3843 = vadd.f32 0.0, %v3842
      %3844 = vmatmul.bf16.gmra.mxu0 %v3784
      %v3845 = vpop.f32.mrf.mxu0
      %v3846 = vadd.f32 0.0, %v3845
      %v3847 = vpop.f32.mrf.mxu0
      %v3848 = vadd.f32 0.0, %v3847
      %3849 = vmatmul.bf16.gmra.mxu0 %v3787
      %v3850 = vpop.f32.mrf.mxu0
      %v3851 = vadd.f32 0.0, %v3850
      %v3852 = vpop.f32.mrf.mxu0
      %v3853 = vadd.f32 0.0, %v3852
      %3854 = vmatmul.bf16.gmra.mxu0 %v3790
      %v3855 = vpop.f32.mrf.mxu0
      %v3856 = vadd.f32 0.0, %v3855
      %v3857 = vpop.f32.mrf.mxu0
      %v3858 = vadd.f32 0.0, %v3857
      %3859 = vmatmul.bf16.gmra.mxu0 %v3793
      %v3860 = vpop.f32.mrf.mxu0
      %v3861 = vadd.f32 0.0, %v3860
      %v3862 = vpop.f32.mrf.mxu0
      %v3863 = vadd.f32 0.0, %v3862
      %3864 = vmatmul.bf16.gmra.mxu0 %v3796
      %v3865 = vpop.f32.mrf.mxu0
      %v3866 = vadd.f32 0.0, %v3865
      %v3867 = vpop.f32.mrf.mxu0
      %v3868 = vadd.f32 0.0, %v3867
      %3869 = vmatmul.bf16.gmra.mxu0 %v3799
      %v3870 = vpop.f32.mrf.mxu0
      %v3871 = vadd.f32 0.0, %v3870
      %v3872 = vpop.f32.mrf.mxu0
      %v3873 = vadd.f32 0.0, %v3872
      %3874 = vmatmul.bf16.gmra.mxu0 %v3802
      %v3875 = vpop.f32.mrf.mxu0
      %v3876 = vadd.f32 0.0, %v3875
      %v3877 = vpop.f32.mrf.mxu0
      %v3878 = vadd.f32 0.0, %v3877
      %3879 = vmatmul.bf16.gmra.mxu0 %v3805
      %v3880 = vpop.f32.mrf.mxu0
      %v3881 = vadd.f32 0.0, %v3880
      %v3882 = vpop.f32.mrf.mxu0
      %v3883 = vadd.f32 0.0, %v3882
      %3884 = vmatmul.bf16.gmra.mxu0 %v3808
      %v3885 = vpop.f32.mrf.mxu0
      %v3886 = vadd.f32 0.0, %v3885
      %v3887 = vpop.f32.mrf.mxu0
      %v3888 = vadd.f32 0.0, %v3887
      %3889 = vmatmul.bf16.gmra.mxu0 %v3811
      %v3890 = vpop.f32.mrf.mxu0
      %v3891 = vadd.f32 0.0, %v3890
      %v3892 = vpop.f32.mrf.mxu0
      %v3893 = vadd.f32 0.0, %v3892
      %3894 = vmatmul.bf16.gmra.mxu0 %v3814
      %v3895 = vpop.f32.mrf.mxu0
      %v3896 = vadd.f32 0.0, %v3895
      %v3897 = vpop.f32.mrf.mxu0
      %v3898 = vadd.f32 0.0, %v3897
      %3899 = vmatmul.bf16.gmra.mxu0 %v3817
      %v3900 = vpop.f32.mrf.mxu0
      %v3901 = vadd.f32 0.0, %v3900
      %v3902 = vpop.f32.mrf.mxu0
      %v3903 = vadd.f32 0.0, %v3902
      %3904 = vmatmul.bf16.gmra.mxu0 %v3820
      %v3905 = vpop.f32.mrf.mxu0
      %v3906 = vadd.f32 0.0, %v3905
      %v3907 = vpop.f32.mrf.mxu0
      %v3908 = vadd.f32 0.0, %v3907
      %3909 = vmatmul.bf16.gmra.mxu0 %v3823
      %v3910 = vpop.f32.mrf.mxu0
      %v3911 = vadd.f32 0.0, %v3910
      %v3912 = vpop.f32.mrf.mxu0
      %v3913 = vadd.f32 0.0, %v3912
      %3914 = vmatmul.bf16.gmra.mxu0 %v3826
      %v3915 = vpop.f32.mrf.mxu0
      %v3916 = vadd.f32 0.0, %v3915
      %v3917 = vpop.f32.mrf.mxu0
      %v3918 = vadd.f32 0.0, %v3917
      %3919 = vdwg.mxu0
      %v3920 = vadd.f32 %v3666, %v3841
      %v3921 = vadd.f32 %v3667, %v3843
      %v3922 = vadd.f32 %v3668, %v3846
      %v3923 = vadd.f32 %v3669, %v3848
      %v3924 = vadd.f32 %v3670, %v3851
      %v3925 = vadd.f32 %v3671, %v3853
      %v3926 = vadd.f32 %v3672, %v3856
      %v3927 = vadd.f32 %v3673, %v3858
      %v3928 = vadd.f32 %v3674, %v3861
      %v3929 = vadd.f32 %v3675, %v3863
      %v3930 = vadd.f32 %v3676, %v3866
      %v3931 = vadd.f32 %v3677, %v3868
      %v3932 = vadd.f32 %v3678, %v3871
      %v3933 = vadd.f32 %v3679, %v3873
      %v3934 = vadd.f32 %v3680, %v3876
      %v3935 = vadd.f32 %v3681, %v3878
      %v3936 = vadd.f32 %v3682, %v3881
      %v3937 = vadd.f32 %v3683, %v3883
      %v3938 = vadd.f32 %v3684, %v3886
      %v3939 = vadd.f32 %v3685, %v3888
      %v3940 = vadd.f32 %v3686, %v3891
      %v3941 = vadd.f32 %v3687, %v3893
      %v3942 = vadd.f32 %v3688, %v3896
      %v3943 = vadd.f32 %v3689, %v3898
      %v3944 = vadd.f32 %v3690, %v3901
      %v3945 = vadd.f32 %v3691, %v3903
      %v3946 = vadd.f32 %v3692, %v3906
      %v3947 = vadd.f32 %v3693, %v3908
      %v3948 = vadd.f32 %v3694, %v3911
      %v3949 = vadd.f32 %v3695, %v3913
      %v3950 = vadd.f32 %v3696, %v3916
      %v3951 = vadd.f32 %v3697, %v3918
      %v3952 = vld [vmem:[%s1352 + $0x4] sm:$0xf]
      %v3953 = vld [vmem:[%s1352 + $0x8] sm:$0xf]
      %v3954 = vld [vmem:[%s1352 + $0xc] sm:$0x1]
      %v3955 = vld [vmem:[%s1352 + $0x14] sm:$0xf]
      %v3956 = vld [vmem:[%s1352 + $0x18] sm:$0xf]
      %v3957 = vld [vmem:[%s1352 + $0x1c] sm:$0x1]
      %v3958 = vld [vmem:[%s1352 + $0x24] sm:$0xf]
      %v3959 = vld [vmem:[%s1352 + $0x28] sm:$0xf]
      %v3960 = vld [vmem:[%s1352 + $0x2c] sm:$0x1]
      %v3961 = vld [vmem:[%s1352 + $0x34] sm:$0xf]
      %v3962 = vld [vmem:[%s1352 + $0x38] sm:$0xf]
      %v3963 = vld [vmem:[%s1352 + $0x3c] sm:$0x1]
      %v3964 = vld [vmem:[%s1352 + $0x44] sm:$0xf]
      %v3965 = vld [vmem:[%s1352 + $0x48] sm:$0xf]
      %v3966 = vld [vmem:[%s1352 + $0x4c] sm:$0x1]
      %v3967 = vld [vmem:[%s1352 + $0x54] sm:$0xf]
      %v3968 = vld [vmem:[%s1352 + $0x58] sm:$0xf]
      %v3969 = vld [vmem:[%s1352 + $0x5c] sm:$0x1]
      %v3970 = vld [vmem:[%s1352 + $0x64] sm:$0xf]
      %v3971 = vld [vmem:[%s1352 + $0x68] sm:$0xf]
      %v3972 = vld [vmem:[%s1352 + $0x6c] sm:$0x1]
      %v3973 = vld [vmem:[%s1352 + $0x74] sm:$0xf]
      %v3974 = vld [vmem:[%s1352 + $0x78] sm:$0xf]
      %v3975 = vld [vmem:[%s1352 + $0x7c] sm:$0x1]
      %v3976 = vld [vmem:[%s1352 + $0x84] sm:$0xf]
      %v3977 = vld [vmem:[%s1352 + $0x88] sm:$0xf]
      %v3978 = vld [vmem:[%s1352 + $0x8c] sm:$0x1]
      %v3979 = vld [vmem:[%s1352 + $0x94] sm:$0xf]
      %v3980 = vld [vmem:[%s1352 + $0x98] sm:$0xf]
      %v3981 = vld [vmem:[%s1352 + $0x9c] sm:$0x1]
      %v3982 = vld [vmem:[%s1352 + $0xa4] sm:$0xf]
      %v3983 = vld [vmem:[%s1352 + $0xa8] sm:$0xf]
      %v3984 = vld [vmem:[%s1352 + $0xac] sm:$0x1]
      %v3985 = vld [vmem:[%s1352 + $0xb4] sm:$0xf]
      %v3986 = vld [vmem:[%s1352 + $0xb8] sm:$0xf]
      %v3987 = vld [vmem:[%s1352 + $0xbc] sm:$0x1]
      %v3988 = vld [vmem:[%s1352 + $0xc4] sm:$0xf]
      %v3989 = vld [vmem:[%s1352 + $0xc8] sm:$0xf]
      %v3990 = vld [vmem:[%s1352 + $0xcc] sm:$0x1]
      %v3991 = vld [vmem:[%s1352 + $0xd4] sm:$0xf]
      %v3992 = vld [vmem:[%s1352 + $0xd8] sm:$0xf]
      %v3993 = vld [vmem:[%s1352 + $0xdc] sm:$0x1]
      %v3994 = vld [vmem:[%s1352 + $0xe4] sm:$0xf]
      %v3995 = vld [vmem:[%s1352 + $0xe8] sm:$0xf]
      %v3996 = vld [vmem:[%s1352 + $0xec] sm:$0x1]
      %v3997 = vld [vmem:[%s1352 + $0xf4] sm:$0xf]
      %v3998 = vld [vmem:[%s1352 + $0xf8] sm:$0xf]
      %v3999 = vld [vmem:[%s1352 + $0xfc] sm:$0x1]
      %v4001 = vshrl.u32 %v3952, 16
      %v4003 = vrot.slane %v4001, 4
      %v4004 = vshll.u32 %v3952, 16
      %v4006 = vrot.slane %v4004, 5
      %v4007 = vor.u32 %v4003, %v4006
      %v4008 = vrot.slane %v4007, 4
      %v4010 = vshll.u32 %v3953, 16
      %v4012 = vrot.slane %v4010, 5
      %v4013 = vsel %vm2469, %v4008, %v4012
      %v4014 = vshrl.u32 %v3953, 16
      %v4016 = vrot.slane %v4014, 4
      %v4017 = vor.u32 %v4016, %v4012
      %v4018 = vrot.slane %v4017, 4
      %v4020 = vshll.u32 %v3954, 16
      %v4022 = vrot.slane %v4020, 5
      %v4023 = vsel %vm2469, %v4018, %v4022
      %v4025 = vshrl.u32 %v3955, 16
      %v4027 = vrot.slane %v4025, 4
      %v4028 = vshll.u32 %v3955, 16
      %v4030 = vrot.slane %v4028, 5
      %v4031 = vor.u32 %v4027, %v4030
      %v4032 = vrot.slane %v4031, 4
      %v4034 = vshll.u32 %v3956, 16
      %v4036 = vrot.slane %v4034, 5
      %v4037 = vsel %vm2469, %v4032, %v4036
      %v4038 = vshrl.u32 %v3956, 16
      %v4040 = vrot.slane %v4038, 4
      %v4041 = vor.u32 %v4040, %v4036
      %v4042 = vrot.slane %v4041, 4
      %v4044 = vshll.u32 %v3957, 16
      %v4046 = vrot.slane %v4044, 5
      %v4047 = vsel %vm2469, %v4042, %v4046
      %v4049 = vshrl.u32 %v3958, 16
      %v4051 = vrot.slane %v4049, 4
      %v4052 = vshll.u32 %v3958, 16
      %v4054 = vrot.slane %v4052, 5
      %v4055 = vor.u32 %v4051, %v4054
      %v4056 = vrot.slane %v4055, 4
      %v4058 = vshll.u32 %v3959, 16
      %v4060 = vrot.slane %v4058, 5
      %v4061 = vsel %vm2469, %v4056, %v4060
      %v4062 = vshrl.u32 %v3959, 16
      %v4064 = vrot.slane %v4062, 4
      %v4065 = vor.u32 %v4064, %v4060
      %v4066 = vrot.slane %v4065, 4
      %v4068 = vshll.u32 %v3960, 16
      %v4070 = vrot.slane %v4068, 5
      %v4071 = vsel %vm2469, %v4066, %v4070
      %v4073 = vshrl.u32 %v3961, 16
      %v4075 = vrot.slane %v4073, 4
      %v4076 = vshll.u32 %v3961, 16
      %v4078 = vrot.slane %v4076, 5
      %v4079 = vor.u32 %v4075, %v4078
      %v4080 = vrot.slane %v4079, 4
      %v4082 = vshll.u32 %v3962, 16
      %v4084 = vrot.slane %v4082, 5
      %v4085 = vsel %vm2469, %v4080, %v4084
      %v4086 = vshrl.u32 %v3962, 16
      %v4088 = vrot.slane %v4086, 4
      %v4089 = vor.u32 %v4088, %v4084
      %v4090 = vrot.slane %v4089, 4
      %v4092 = vshll.u32 %v3963, 16
      %v4094 = vrot.slane %v4092, 5
      %v4095 = vsel %vm2469, %v4090, %v4094
      %v4097 = vshrl.u32 %v3964, 16
      %v4099 = vrot.slane %v4097, 4
      %v4100 = vshll.u32 %v3964, 16
      %v4102 = vrot.slane %v4100, 5
      %v4103 = vor.u32 %v4099, %v4102
      %v4104 = vrot.slane %v4103, 4
      %v4106 = vshll.u32 %v3965, 16
      %v4108 = vrot.slane %v4106, 5
      %v4109 = vsel %vm2469, %v4104, %v4108
      %v4110 = vshrl.u32 %v3965, 16
      %v4112 = vrot.slane %v4110, 4
      %v4113 = vor.u32 %v4112, %v4108
      %v4114 = vrot.slane %v4113, 4
      %v4116 = vshll.u32 %v3966, 16
      %v4118 = vrot.slane %v4116, 5
      %v4119 = vsel %vm2469, %v4114, %v4118
      %v4121 = vshrl.u32 %v3967, 16
      %v4123 = vrot.slane %v4121, 4
      %v4124 = vshll.u32 %v3967, 16
      %v4126 = vrot.slane %v4124, 5
      %v4127 = vor.u32 %v4123, %v4126
      %v4128 = vrot.slane %v4127, 4
      %v4130 = vshll.u32 %v3968, 16
      %v4132 = vrot.slane %v4130, 5
      %v4133 = vsel %vm2469, %v4128, %v4132
      %v4134 = vshrl.u32 %v3968, 16
      %v4136 = vrot.slane %v4134, 4
      %v4137 = vor.u32 %v4136, %v4132
      %v4138 = vrot.slane %v4137, 4
      %v4140 = vshll.u32 %v3969, 16
      %v4142 = vrot.slane %v4140, 5
      %v4143 = vsel %vm2469, %v4138, %v4142
      %v4145 = vshrl.u32 %v3970, 16
      %v4147 = vrot.slane %v4145, 4
      %v4148 = vshll.u32 %v3970, 16
      %v4150 = vrot.slane %v4148, 5
      %v4151 = vor.u32 %v4147, %v4150
      %v4152 = vrot.slane %v4151, 4
      %v4154 = vshll.u32 %v3971, 16
      %v4156 = vrot.slane %v4154, 5
      %v4157 = vsel %vm2469, %v4152, %v4156
      %v4158 = vshrl.u32 %v3971, 16
      %v4160 = vrot.slane %v4158, 4
      %v4161 = vor.u32 %v4160, %v4156
      %v4162 = vrot.slane %v4161, 4
      %v4164 = vshll.u32 %v3972, 16
      %v4166 = vrot.slane %v4164, 5
      %v4167 = vsel %vm2469, %v4162, %v4166
      %v4169 = vshrl.u32 %v3973, 16
      %v4171 = vrot.slane %v4169, 4
      %v4172 = vshll.u32 %v3973, 16
      %v4174 = vrot.slane %v4172, 5
      %v4175 = vor.u32 %v4171, %v4174
      %v4176 = vrot.slane %v4175, 4
      %v4178 = vshll.u32 %v3974, 16
      %v4180 = vrot.slane %v4178, 5
      %v4181 = vsel %vm2469, %v4176, %v4180
      %v4182 = vshrl.u32 %v3974, 16
      %v4184 = vrot.slane %v4182, 4
      %v4185 = vor.u32 %v4184, %v4180
      %v4186 = vrot.slane %v4185, 4
      %v4188 = vshll.u32 %v3975, 16
      %v4190 = vrot.slane %v4188, 5
      %v4191 = vsel %vm2469, %v4186, %v4190
      %v4193 = vshrl.u32 %v3976, 16
      %v4195 = vrot.slane %v4193, 4
      %v4196 = vshll.u32 %v3976, 16
      %v4198 = vrot.slane %v4196, 5
      %v4199 = vor.u32 %v4195, %v4198
      %v4200 = vrot.slane %v4199, 4
      %v4202 = vshll.u32 %v3977, 16
      %v4204 = vrot.slane %v4202, 5
      %v4205 = vsel %vm2469, %v4200, %v4204
      %v4206 = vshrl.u32 %v3977, 16
      %v4208 = vrot.slane %v4206, 4
      %v4209 = vor.u32 %v4208, %v4204
      %v4210 = vrot.slane %v4209, 4
      %v4212 = vshll.u32 %v3978, 16
      %v4214 = vrot.slane %v4212, 5
      %v4215 = vsel %vm2469, %v4210, %v4214
      %v4217 = vshrl.u32 %v3979, 16
      %v4219 = vrot.slane %v4217, 4
      %v4220 = vshll.u32 %v3979, 16
      %v4222 = vrot.slane %v4220, 5
      %v4223 = vor.u32 %v4219, %v4222
      %v4224 = vrot.slane %v4223, 4
      %v4226 = vshll.u32 %v3980, 16
      %v4228 = vrot.slane %v4226, 5
      %v4229 = vsel %vm2469, %v4224, %v4228
      %v4230 = vshrl.u32 %v3980, 16
      %v4232 = vrot.slane %v4230, 4
      %v4233 = vor.u32 %v4232, %v4228
      %v4234 = vrot.slane %v4233, 4
      %v4236 = vshll.u32 %v3981, 16
      %v4238 = vrot.slane %v4236, 5
      %v4239 = vsel %vm2469, %v4234, %v4238
      %v4241 = vshrl.u32 %v3982, 16
      %v4243 = vrot.slane %v4241, 4
      %v4244 = vshll.u32 %v3982, 16
      %v4246 = vrot.slane %v4244, 5
      %v4247 = vor.u32 %v4243, %v4246
      %v4248 = vrot.slane %v4247, 4
      %v4250 = vshll.u32 %v3983, 16
      %v4252 = vrot.slane %v4250, 5
      %v4253 = vsel %vm2469, %v4248, %v4252
      %v4254 = vshrl.u32 %v3983, 16
      %v4256 = vrot.slane %v4254, 4
      %v4257 = vor.u32 %v4256, %v4252
      %v4258 = vrot.slane %v4257, 4
      %v4260 = vshll.u32 %v3984, 16
      %v4262 = vrot.slane %v4260, 5
      %v4263 = vsel %vm2469, %v4258, %v4262
      %v4265 = vshrl.u32 %v3985, 16
      %v4267 = vrot.slane %v4265, 4
      %v4268 = vshll.u32 %v3985, 16
      %v4270 = vrot.slane %v4268, 5
      %v4271 = vor.u32 %v4267, %v4270
      %v4272 = vrot.slane %v4271, 4
      %v4274 = vshll.u32 %v3986, 16
      %v4276 = vrot.slane %v4274, 5
      %v4277 = vsel %vm2469, %v4272, %v4276
      %v4278 = vshrl.u32 %v3986, 16
      %v4280 = vrot.slane %v4278, 4
      %v4281 = vor.u32 %v4280, %v4276
      %v4282 = vrot.slane %v4281, 4
      %v4284 = vshll.u32 %v3987, 16
      %v4286 = vrot.slane %v4284, 5
      %v4287 = vsel %vm2469, %v4282, %v4286
      %v4289 = vshrl.u32 %v3988, 16
      %v4291 = vrot.slane %v4289, 4
      %v4292 = vshll.u32 %v3988, 16
      %v4294 = vrot.slane %v4292, 5
      %v4295 = vor.u32 %v4291, %v4294
      %v4296 = vrot.slane %v4295, 4
      %v4298 = vshll.u32 %v3989, 16
      %v4300 = vrot.slane %v4298, 5
      %v4301 = vsel %vm2469, %v4296, %v4300
      %v4302 = vshrl.u32 %v3989, 16
      %v4304 = vrot.slane %v4302, 4
      %v4305 = vor.u32 %v4304, %v4300
      %v4306 = vrot.slane %v4305, 4
      %v4308 = vshll.u32 %v3990, 16
      %v4310 = vrot.slane %v4308, 5
      %v4311 = vsel %vm2469, %v4306, %v4310
      %v4313 = vshrl.u32 %v3991, 16
      %v4315 = vrot.slane %v4313, 4
      %v4316 = vshll.u32 %v3991, 16
      %v4318 = vrot.slane %v4316, 5
      %v4319 = vor.u32 %v4315, %v4318
      %v4320 = vrot.slane %v4319, 4
      %v4322 = vshll.u32 %v3992, 16
      %v4324 = vrot.slane %v4322, 5
      %v4325 = vsel %vm2469, %v4320, %v4324
      %v4326 = vshrl.u32 %v3992, 16
      %v4328 = vrot.slane %v4326, 4
      %v4329 = vor.u32 %v4328, %v4324
      %v4330 = vrot.slane %v4329, 4
      %v4332 = vshll.u32 %v3993, 16
      %v4334 = vrot.slane %v4332, 5
      %v4335 = vsel %vm2469, %v4330, %v4334
      %v4337 = vshrl.u32 %v3994, 16
      %v4339 = vrot.slane %v4337, 4
      %v4340 = vshll.u32 %v3994, 16
      %v4342 = vrot.slane %v4340, 5
      %v4343 = vor.u32 %v4339, %v4342
      %v4344 = vrot.slane %v4343, 4
      %v4346 = vshll.u32 %v3995, 16
      %v4348 = vrot.slane %v4346, 5
      %v4349 = vsel %vm2469, %v4344, %v4348
      %v4350 = vshrl.u32 %v3995, 16
      %v4352 = vrot.slane %v4350, 4
      %v4353 = vor.u32 %v4352, %v4348
      %v4354 = vrot.slane %v4353, 4
      %v4356 = vshll.u32 %v3996, 16
      %v4358 = vrot.slane %v4356, 5
      %v4359 = vsel %vm2469, %v4354, %v4358
      %v4361 = vshrl.u32 %v3997, 16
      %v4363 = vrot.slane %v4361, 4
      %v4364 = vshll.u32 %v3997, 16
      %v4366 = vrot.slane %v4364, 5
      %v4367 = vor.u32 %v4363, %v4366
      %v4368 = vrot.slane %v4367, 4
      %v4370 = vshll.u32 %v3998, 16
      %v4372 = vrot.slane %v4370, 5
      %v4373 = vsel %vm2469, %v4368, %v4372
      %v4374 = vshrl.u32 %v3998, 16
      %v4376 = vrot.slane %v4374, 4
      %v4377 = vor.u32 %v4376, %v4372
      %v4378 = vrot.slane %v4377, 4
      %v4380 = vshll.u32 %v3999, 16
      %v4382 = vrot.slane %v4380, 5
      %v4383 = vsel %vm2469, %v4378, %v4382
      %s4384 = scalar_lea.vmem %s5, 20
      %v4385 = vld [vmem:[%s4384] sm:$0xf]
      %v4386 = vunpack.c.l.b16 %v4013
      %v4387 = vunpack.c.l.b16 %v4023
      %v4388 = vunpack.c.l.b16 %v4037
      %v4389 = vunpack.c.l.b16 %v4047
      %v4390 = vunpack.c.l.b16 %v4061
      %v4391 = vunpack.c.l.b16 %v4071
      %v4392 = vunpack.c.l.b16 %v4085
      %v4393 = vunpack.c.l.b16 %v4095
      %v4394 = vunpack.c.l.b16 %v4109
      %v4395 = vunpack.c.l.b16 %v4119
      %v4396 = vunpack.c.l.b16 %v4133
      %v4397 = vunpack.c.l.b16 %v4143
      %v4398 = vunpack.c.l.b16 %v4157
      %v4399 = vunpack.c.l.b16 %v4167
      %v4400 = vunpack.c.l.b16 %v4181
      %v4401 = vunpack.c.l.b16 %v4191
      %v4402 = vunpack.c.l.b16 %v4205
      %v4403 = vunpack.c.l.b16 %v4215
      %v4404 = vunpack.c.l.b16 %v4229
      %v4405 = vunpack.c.l.b16 %v4239
      %v4406 = vunpack.c.l.b16 %v4253
      %v4407 = vunpack.c.l.b16 %v4263
      %v4408 = vunpack.c.l.b16 %v4277
      %v4409 = vunpack.c.l.b16 %v4287
      %v4410 = vunpack.c.l.b16 %v4301
      %v4411 = vunpack.c.l.b16 %v4311
      %v4412 = vunpack.c.l.b16 %v4325
      %v4413 = vunpack.c.l.b16 %v4335
      %v4414 = vunpack.c.l.b16 %v4349
      %v4415 = vunpack.c.l.b16 %v4359
      %v4416 = vunpack.c.l.b16 %v4373
      %v4417 = vunpack.c.l.b16 %v4383
      %v4418 = vpack.c.b16 %v4387, %v4386
      %v4419 = vpack.c.b16 %v4389, %v4388
      %v4420 = vpack.c.b16 %v4391, %v4390
      %v4421 = vpack.c.b16 %v4393, %v4392
      %v4422 = vpack.c.b16 %v4395, %v4394
      %v4423 = vpack.c.b16 %v4397, %v4396
      %v4424 = vpack.c.b16 %v4399, %v4398
      %v4425 = vpack.c.b16 %v4401, %v4400
      %v4426 = vpack.c.b16 %v4403, %v4402
      %v4427 = vpack.c.b16 %v4405, %v4404
      %v4428 = vpack.c.b16 %v4407, %v4406
      %v4429 = vpack.c.b16 %v4409, %v4408
      %v4430 = vpack.c.b16 %v4411, %v4410
      %v4431 = vpack.c.b16 %v4413, %v4412
      %v4432 = vpack.c.b16 %v4415, %v4414
      %v4433 = vpack.c.b16 %v4417, %v4416
      %v4435 = vsel %vm1988, %v4418, 0
      %v4438 = vsel %vm1988, %v4419, 0
      %v4441 = vsel %vm1988, %v4420, 0
      %v4444 = vsel %vm1988, %v4421, 0
      %v4447 = vsel %vm1988, %v4422, 0
      %v4450 = vsel %vm1988, %v4423, 0
      %v4453 = vsel %vm1988, %v4424, 0
      %v4456 = vsel %vm1988, %v4425, 0
      %v4459 = vsel %vm1988, %v4426, 0
      %v4462 = vsel %vm1988, %v4427, 0
      %v4465 = vsel %vm1988, %v4428, 0
      %v4468 = vsel %vm1988, %v4429, 0
      %v4471 = vsel %vm1988, %v4430, 0
      %v4474 = vsel %vm1988, %v4431, 0
      %v4477 = vsel %vm1988, %v4432, 0
      %v4480 = vsel %vm1988, %v4433, 0
      %v4483 = vsel %vm2037, %v4385, 0
      %4485 = vmatpush.bf16.msra.mxu0 0
      %4486 = vmatpush.bf16.msra.mxu0 0
      %4487 = vmatpush.bf16.msra.mxu0 0
      %4488 = vmatpush.bf16.msra.mxu0 0
      %4489 = vmatpush.bf16.msra.mxu0 0
      %4490 = vmatpush.bf16.msra.mxu0 0
      %4491 = vmatpush.bf16.msra.mxu0 0
      %4492 = vmatpush.bf16.msra.mxu0 %v4483
      %4493 = vmatmul.bf16.gmra.mxu0 %v4435
      %v4494 = vpop.f32.mrf.mxu0
      %v4495 = vadd.f32 0.0, %v4494
      %v4496 = vpop.f32.mrf.mxu0
      %v4497 = vadd.f32 0.0, %v4496
      %4498 = vmatmul.bf16.gmra.mxu0 %v4438
      %v4499 = vpop.f32.mrf.mxu0
      %v4500 = vadd.f32 0.0, %v4499
      %v4501 = vpop.f32.mrf.mxu0
      %v4502 = vadd.f32 0.0, %v4501
      %4503 = vmatmul.bf16.gmra.mxu0 %v4441
      %v4504 = vpop.f32.mrf.mxu0
      %v4505 = vadd.f32 0.0, %v4504
      %v4506 = vpop.f32.mrf.mxu0
      %v4507 = vadd.f32 0.0, %v4506
      %4508 = vmatmul.bf16.gmra.mxu0 %v4444
      %v4509 = vpop.f32.mrf.mxu0
      %v4510 = vadd.f32 0.0, %v4509
      %v4511 = vpop.f32.mrf.mxu0
      %v4512 = vadd.f32 0.0, %v4511
      %4513 = vmatmul.bf16.gmra.mxu0 %v4447
      %v4514 = vpop.f32.mrf.mxu0
      %v4515 = vadd.f32 0.0, %v4514
      %v4516 = vpop.f32.mrf.mxu0
      %v4517 = vadd.f32 0.0, %v4516
      %4518 = vmatmul.bf16.gmra.mxu0 %v4450
      %v4519 = vpop.f32.mrf.mxu0
      %v4520 = vadd.f32 0.0, %v4519
      %v4521 = vpop.f32.mrf.mxu0
      %v4522 = vadd.f32 0.0, %v4521
      %4523 = vmatmul.bf16.gmra.mxu0 %v4453
      %v4524 = vpop.f32.mrf.mxu0
      %v4525 = vadd.f32 0.0, %v4524
      %v4526 = vpop.f32.mrf.mxu0
      %v4527 = vadd.f32 0.0, %v4526
      %4528 = vmatmul.bf16.gmra.mxu0 %v4456
      %v4529 = vpop.f32.mrf.mxu0
      %v4530 = vadd.f32 0.0, %v4529
      %v4531 = vpop.f32.mrf.mxu0
      %v4532 = vadd.f32 0.0, %v4531
      %4533 = vmatmul.bf16.gmra.mxu0 %v4459
      %v4534 = vpop.f32.mrf.mxu0
      %v4535 = vadd.f32 0.0, %v4534
      %v4536 = vpop.f32.mrf.mxu0
      %v4537 = vadd.f32 0.0, %v4536
      %4538 = vmatmul.bf16.gmra.mxu0 %v4462
      %v4539 = vpop.f32.mrf.mxu0
      %v4540 = vadd.f32 0.0, %v4539
      %v4541 = vpop.f32.mrf.mxu0
      %v4542 = vadd.f32 0.0, %v4541
      %4543 = vmatmul.bf16.gmra.mxu0 %v4465
      %v4544 = vpop.f32.mrf.mxu0
      %v4545 = vadd.f32 0.0, %v4544
      %v4546 = vpop.f32.mrf.mxu0
      %v4547 = vadd.f32 0.0, %v4546
      %4548 = vmatmul.bf16.gmra.mxu0 %v4468
      %v4549 = vpop.f32.mrf.mxu0
      %v4550 = vadd.f32 0.0, %v4549
      %v4551 = vpop.f32.mrf.mxu0
      %v4552 = vadd.f32 0.0, %v4551
      %4553 = vmatmul.bf16.gmra.mxu0 %v4471
      %v4554 = vpop.f32.mrf.mxu0
      %v4555 = vadd.f32 0.0, %v4554
      %v4556 = vpop.f32.mrf.mxu0
      %v4557 = vadd.f32 0.0, %v4556
      %4558 = vmatmul.bf16.gmra.mxu0 %v4474
      %v4559 = vpop.f32.mrf.mxu0
      %v4560 = vadd.f32 0.0, %v4559
      %v4561 = vpop.f32.mrf.mxu0
      %v4562 = vadd.f32 0.0, %v4561
      %4563 = vmatmul.bf16.gmra.mxu0 %v4477
      %v4564 = vpop.f32.mrf.mxu0
      %v4565 = vadd.f32 0.0, %v4564
      %v4566 = vpop.f32.mrf.mxu0
      %v4567 = vadd.f32 0.0, %v4566
      %4568 = vmatmul.bf16.gmra.mxu0 %v4480
      %v4569 = vpop.f32.mrf.mxu0
      %v4570 = vadd.f32 0.0, %v4569
      %v4571 = vpop.f32.mrf.mxu0
      %v4572 = vadd.f32 0.0, %v4571
      %4573 = vdwg.mxu0
      %v4574 = vadd.f32 %v3920, %v4495
      %v4575 = vadd.f32 %v3921, %v4497
      %v4576 = vadd.f32 %v3922, %v4500
      %v4577 = vadd.f32 %v3923, %v4502
      %v4578 = vadd.f32 %v3924, %v4505
      %v4579 = vadd.f32 %v3925, %v4507
      %v4580 = vadd.f32 %v3926, %v4510
      %v4581 = vadd.f32 %v3927, %v4512
      %v4582 = vadd.f32 %v3928, %v4515
      %v4583 = vadd.f32 %v3929, %v4517
      %v4584 = vadd.f32 %v3930, %v4520
      %v4585 = vadd.f32 %v3931, %v4522
      %v4586 = vadd.f32 %v3932, %v4525
      %v4587 = vadd.f32 %v3933, %v4527
      %v4588 = vadd.f32 %v3934, %v4530
      %v4589 = vadd.f32 %v3935, %v4532
      %v4590 = vadd.f32 %v3936, %v4535
      %v4591 = vadd.f32 %v3937, %v4537
      %v4592 = vadd.f32 %v3938, %v4540
      %v4593 = vadd.f32 %v3939, %v4542
      %v4594 = vadd.f32 %v3940, %v4545
      %v4595 = vadd.f32 %v3941, %v4547
      %v4596 = vadd.f32 %v3942, %v4550
      %v4597 = vadd.f32 %v3943, %v4552
      %v4598 = vadd.f32 %v3944, %v4555
      %v4599 = vadd.f32 %v3945, %v4557
      %v4600 = vadd.f32 %v3946, %v4560
      %v4601 = vadd.f32 %v3947, %v4562
      %v4602 = vadd.f32 %v3948, %v4565
      %v4603 = vadd.f32 %v3949, %v4567
      %v4604 = vadd.f32 %v3950, %v4570
      %v4605 = vadd.f32 %v3951, %v4572
      %s4606 = scalar_lea.vmem [#allocation2], 32
      %v4607 = vld [vmem:[%s4606] sm:$0x8]
      %v4608 = vld [vmem:[%s4606 + $0x4] sm:$0xf]
      %v4609 = vld [vmem:[%s4606 + $0x8] sm:$0xf]
      %v4610 = vld [vmem:[%s4606 + $0x10] sm:$0x8]
      %v4611 = vld [vmem:[%s4606 + $0x14] sm:$0xf]
      %v4612 = vld [vmem:[%s4606 + $0x18] sm:$0xf]
      %v4613 = vld [vmem:[%s4606 + $0x20] sm:$0x8]
      %v4614 = vld [vmem:[%s4606 + $0x24] sm:$0xf]
      %v4615 = vld [vmem:[%s4606 + $0x28] sm:$0xf]
      %v4616 = vld [vmem:[%s4606 + $0x30] sm:$0x8]
      %v4617 = vld [vmem:[%s4606 + $0x34] sm:$0xf]
      %v4618 = vld [vmem:[%s4606 + $0x38] sm:$0xf]
      %v4619 = vld [vmem:[%s4606 + $0x40] sm:$0x8]
      %v4620 = vld [vmem:[%s4606 + $0x44] sm:$0xf]
      %v4621 = vld [vmem:[%s4606 + $0x48] sm:$0xf]
      %v4622 = vld [vmem:[%s4606 + $0x50] sm:$0x8]
      %v4623 = vld [vmem:[%s4606 + $0x54] sm:$0xf]
      %v4624 = vld [vmem:[%s4606 + $0x58] sm:$0xf]
      %v4625 = vld [vmem:[%s4606 + $0x60] sm:$0x8]
      %v4626 = vld [vmem:[%s4606 + $0x64] sm:$0xf]
      %v4627 = vld [vmem:[%s4606 + $0x68] sm:$0xf]
      %v4628 = vld [vmem:[%s4606 + $0x70] sm:$0x8]
      %v4629 = vld [vmem:[%s4606 + $0x74] sm:$0xf]
      %v4630 = vld [vmem:[%s4606 + $0x78] sm:$0xf]
      %v4631 = vld [vmem:[%s4606 + $0x80] sm:$0x8]
      %v4632 = vld [vmem:[%s4606 + $0x84] sm:$0xf]
      %v4633 = vld [vmem:[%s4606 + $0x88] sm:$0xf]
      %v4634 = vld [vmem:[%s4606 + $0x90] sm:$0x8]
      %v4635 = vld [vmem:[%s4606 + $0x94] sm:$0xf]
      %v4636 = vld [vmem:[%s4606 + $0x98] sm:$0xf]
      %v4637 = vld [vmem:[%s4606 + $0xa0] sm:$0x8]
      %v4638 = vld [vmem:[%s4606 + $0xa4] sm:$0xf]
      %v4639 = vld [vmem:[%s4606 + $0xa8] sm:$0xf]
      %v4640 = vld [vmem:[%s4606 + $0xb0] sm:$0x8]
      %v4641 = vld [vmem:[%s4606 + $0xb4] sm:$0xf]
      %v4642 = vld [vmem:[%s4606 + $0xb8] sm:$0xf]
      %v4643 = vld [vmem:[%s4606 + $0xc0] sm:$0x8]
      %v4644 = vld [vmem:[%s4606 + $0xc4] sm:$0xf]
      %v4645 = vld [vmem:[%s4606 + $0xc8] sm:$0xf]
      %v4646 = vld [vmem:[%s4606 + $0xd0] sm:$0x8]
      %v4647 = vld [vmem:[%s4606 + $0xd4] sm:$0xf]
      %v4648 = vld [vmem:[%s4606 + $0xd8] sm:$0xf]
      %v4649 = vld [vmem:[%s4606 + $0xe0] sm:$0x8]
      %v4650 = vld [vmem:[%s4606 + $0xe4] sm:$0xf]
      %v4651 = vld [vmem:[%s4606 + $0xe8] sm:$0xf]
      %v4652 = vld [vmem:[%s4606 + $0xf0] sm:$0x8]
      %v4653 = vld [vmem:[%s4606 + $0xf4] sm:$0xf]
      %v4654 = vld [vmem:[%s4606 + $0xf8] sm:$0xf]
      %v4656 = vshrl.u32 %v4607, 16
      %v4658 = vrot.slane %v4656, 7
      %v4659 = vrot.slane %v4658, 4
      %v4661 = vshrl.u32 %v4608, 16
      %v4663 = vrot.slane %v4661, 7
      %v4664 = vshll.u32 %v4608, 16
      %v4666 = vor.u32 %v4663, %v4664
      %v4667 = vsel %vm1586, %v4659, %v4666
      %v4668 = vrot.slane %v4663, 4
      %v4670 = vshrl.u32 %v4609, 16
      %v4672 = vrot.slane %v4670, 7
      %v4673 = vshll.u32 %v4609, 16
      %v4675 = vor.u32 %v4672, %v4673
      %v4676 = vsel %vm1586, %v4668, %v4675
      %v4678 = vshrl.u32 %v4610, 16
      %v4680 = vrot.slane %v4678, 7
      %v4681 = vrot.slane %v4680, 4
      %v4683 = vshrl.u32 %v4611, 16
      %v4685 = vrot.slane %v4683, 7
      %v4686 = vshll.u32 %v4611, 16
      %v4688 = vor.u32 %v4685, %v4686
      %v4689 = vsel %vm1586, %v4681, %v4688
      %v4690 = vrot.slane %v4685, 4
      %v4692 = vshrl.u32 %v4612, 16
      %v4694 = vrot.slane %v4692, 7
      %v4695 = vshll.u32 %v4612, 16
      %v4697 = vor.u32 %v4694, %v4695
      %v4698 = vsel %vm1586, %v4690, %v4697
      %v4700 = vshrl.u32 %v4613, 16
      %v4702 = vrot.slane %v4700, 7
      %v4703 = vrot.slane %v4702, 4
      %v4705 = vshrl.u32 %v4614, 16
      %v4707 = vrot.slane %v4705, 7
      %v4708 = vshll.u32 %v4614, 16
      %v4710 = vor.u32 %v4707, %v4708
      %v4711 = vsel %vm1586, %v4703, %v4710
      %v4712 = vrot.slane %v4707, 4
      %v4714 = vshrl.u32 %v4615, 16
      %v4716 = vrot.slane %v4714, 7
      %v4717 = vshll.u32 %v4615, 16
      %v4719 = vor.u32 %v4716, %v4717
      %v4720 = vsel %vm1586, %v4712, %v4719
      %v4722 = vshrl.u32 %v4616, 16
      %v4724 = vrot.slane %v4722, 7
      %v4725 = vrot.slane %v4724, 4
      %v4727 = vshrl.u32 %v4617, 16
      %v4729 = vrot.slane %v4727, 7
      %v4730 = vshll.u32 %v4617, 16
      %v4732 = vor.u32 %v4729, %v4730
      %v4733 = vsel %vm1586, %v4725, %v4732
      %v4734 = vrot.slane %v4729, 4
      %v4736 = vshrl.u32 %v4618, 16
      %v4738 = vrot.slane %v4736, 7
      %v4739 = vshll.u32 %v4618, 16
      %v4741 = vor.u32 %v4738, %v4739
      %v4742 = vsel %vm1586, %v4734, %v4741
      %v4744 = vshrl.u32 %v4619, 16
      %v4746 = vrot.slane %v4744, 7
      %v4747 = vrot.slane %v4746, 4
      %v4749 = vshrl.u32 %v4620, 16
      %v4751 = vrot.slane %v4749, 7
      %v4752 = vshll.u32 %v4620, 16
      %v4754 = vor.u32 %v4751, %v4752
      %v4755 = vsel %vm1586, %v4747, %v4754
      %v4756 = vrot.slane %v4751, 4
      %v4758 = vshrl.u32 %v4621, 16
      %v4760 = vrot.slane %v4758, 7
      %v4761 = vshll.u32 %v4621, 16
      %v4763 = vor.u32 %v4760, %v4761
      %v4764 = vsel %vm1586, %v4756, %v4763
      %v4766 = vshrl.u32 %v4622, 16
      %v4768 = vrot.slane %v4766, 7
      %v4769 = vrot.slane %v4768, 4
      %v4771 = vshrl.u32 %v4623, 16
      %v4773 = vrot.slane %v4771, 7
      %v4774 = vshll.u32 %v4623, 16
      %v4776 = vor.u32 %v4773, %v4774
      %v4777 = vsel %vm1586, %v4769, %v4776
      %v4778 = vrot.slane %v4773, 4
      %v4780 = vshrl.u32 %v4624, 16
      %v4782 = vrot.slane %v4780, 7
      %v4783 = vshll.u32 %v4624, 16
      %v4785 = vor.u32 %v4782, %v4783
      %v4786 = vsel %vm1586, %v4778, %v4785
      %v4788 = vshrl.u32 %v4625, 16
      %v4790 = vrot.slane %v4788, 7
      %v4791 = vrot.slane %v4790, 4
      %v4793 = vshrl.u32 %v4626, 16
      %v4795 = vrot.slane %v4793, 7
      %v4796 = vshll.u32 %v4626, 16
      %v4798 = vor.u32 %v4795, %v4796
      %v4799 = vsel %vm1586, %v4791, %v4798
      %v4800 = vrot.slane %v4795, 4
      %v4802 = vshrl.u32 %v4627, 16
      %v4804 = vrot.slane %v4802, 7
      %v4805 = vshll.u32 %v4627, 16
      %v4807 = vor.u32 %v4804, %v4805
      %v4808 = vsel %vm1586, %v4800, %v4807
      %v4810 = vshrl.u32 %v4628, 16
      %v4812 = vrot.slane %v4810, 7
      %v4813 = vrot.slane %v4812, 4
      %v4815 = vshrl.u32 %v4629, 16
      %v4817 = vrot.slane %v4815, 7
      %v4818 = vshll.u32 %v4629, 16
      %v4820 = vor.u32 %v4817, %v4818
      %v4821 = vsel %vm1586, %v4813, %v4820
      %v4822 = vrot.slane %v4817, 4
      %v4824 = vshrl.u32 %v4630, 16
      %v4826 = vrot.slane %v4824, 7
      %v4827 = vshll.u32 %v4630, 16
      %v4829 = vor.u32 %v4826, %v4827
      %v4830 = vsel %vm1586, %v4822, %v4829
      %v4832 = vshrl.u32 %v4631, 16
      %v4834 = vrot.slane %v4832, 7
      %v4835 = vrot.slane %v4834, 4
      %v4837 = vshrl.u32 %v4632, 16
      %v4839 = vrot.slane %v4837, 7
      %v4840 = vshll.u32 %v4632, 16
      %v4842 = vor.u32 %v4839, %v4840
      %v4843 = vsel %vm1586, %v4835, %v4842
      %v4844 = vrot.slane %v4839, 4
      %v4846 = vshrl.u32 %v4633, 16
      %v4848 = vrot.slane %v4846, 7
      %v4849 = vshll.u32 %v4633, 16
      %v4851 = vor.u32 %v4848, %v4849
      %v4852 = vsel %vm1586, %v4844, %v4851
      %v4854 = vshrl.u32 %v4634, 16
      %v4856 = vrot.slane %v4854, 7
      %v4857 = vrot.slane %v4856, 4
      %v4859 = vshrl.u32 %v4635, 16
      %v4861 = vrot.slane %v4859, 7
      %v4862 = vshll.u32 %v4635, 16
      %v4864 = vor.u32 %v4861, %v4862
      %v4865 = vsel %vm1586, %v4857, %v4864
      %v4866 = vrot.slane %v4861, 4
      %v4868 = vshrl.u32 %v4636, 16
      %v4870 = vrot.slane %v4868, 7
      %v4871 = vshll.u32 %v4636, 16
      %v4873 = vor.u32 %v4870, %v4871
      %v4874 = vsel %vm1586, %v4866, %v4873
      %v4876 = vshrl.u32 %v4637, 16
      %v4878 = vrot.slane %v4876, 7
      %v4879 = vrot.slane %v4878, 4
      %v4881 = vshrl.u32 %v4638, 16
      %v4883 = vrot.slane %v4881, 7
      %v4884 = vshll.u32 %v4638, 16
      %v4886 = vor.u32 %v4883, %v4884
      %v4887 = vsel %vm1586, %v4879, %v4886
      %v4888 = vrot.slane %v4883, 4
      %v4890 = vshrl.u32 %v4639, 16
      %v4892 = vrot.slane %v4890, 7
      %v4893 = vshll.u32 %v4639, 16
      %v4895 = vor.u32 %v4892, %v4893
      %v4896 = vsel %vm1586, %v4888, %v4895
      %v4898 = vshrl.u32 %v4640, 16
      %v4900 = vrot.slane %v4898, 7
      %v4901 = vrot.slane %v4900, 4
      %v4903 = vshrl.u32 %v4641, 16
      %v4905 = vrot.slane %v4903, 7
      %v4906 = vshll.u32 %v4641, 16
      %v4908 = vor.u32 %v4905, %v4906
      %v4909 = vsel %vm1586, %v4901, %v4908
      %v4910 = vrot.slane %v4905, 4
      %v4912 = vshrl.u32 %v4642, 16
      %v4914 = vrot.slane %v4912, 7
      %v4915 = vshll.u32 %v4642, 16
      %v4917 = vor.u32 %v4914, %v4915
      %v4918 = vsel %vm1586, %v4910, %v4917
      %v4920 = vshrl.u32 %v4643, 16
      %v4922 = vrot.slane %v4920, 7
      %v4923 = vrot.slane %v4922, 4
      %v4925 = vshrl.u32 %v4644, 16
      %v4927 = vrot.slane %v4925, 7
      %v4928 = vshll.u32 %v4644, 16
      %v4930 = vor.u32 %v4927, %v4928
      %v4931 = vsel %vm1586, %v4923, %v4930
      %v4932 = vrot.slane %v4927, 4
      %v4934 = vshrl.u32 %v4645, 16
      %v4936 = vrot.slane %v4934, 7
      %v4937 = vshll.u32 %v4645, 16
      %v4939 = vor.u32 %v4936, %v4937
      %v4940 = vsel %vm1586, %v4932, %v4939
      %v4942 = vshrl.u32 %v4646, 16
      %v4944 = vrot.slane %v4942, 7
      %v4945 = vrot.slane %v4944, 4
      %v4947 = vshrl.u32 %v4647, 16
      %v4949 = vrot.slane %v4947, 7
      %v4950 = vshll.u32 %v4647, 16
      %v4952 = vor.u32 %v4949, %v4950
      %v4953 = vsel %vm1586, %v4945, %v4952
      %v4954 = vrot.slane %v4949, 4
      %v4956 = vshrl.u32 %v4648, 16
      %v4958 = vrot.slane %v4956, 7
      %v4959 = vshll.u32 %v4648, 16
      %v4961 = vor.u32 %v4958, %v4959
      %v4962 = vsel %vm1586, %v4954, %v4961
      %v4964 = vshrl.u32 %v4649, 16
      %v4966 = vrot.slane %v4964, 7
      %v4967 = vrot.slane %v4966, 4
      %v4969 = vshrl.u32 %v4650, 16
      %v4971 = vrot.slane %v4969, 7
      %v4972 = vshll.u32 %v4650, 16
      %v4974 = vor.u32 %v4971, %v4972
      %v4975 = vsel %vm1586, %v4967, %v4974
      %v4976 = vrot.slane %v4971, 4
      %v4978 = vshrl.u32 %v4651, 16
      %v4980 = vrot.slane %v4978, 7
      %v4981 = vshll.u32 %v4651, 16
      %v4983 = vor.u32 %v4980, %v4981
      %v4984 = vsel %vm1586, %v4976, %v4983
      %v4986 = vshrl.u32 %v4652, 16
      %v4988 = vrot.slane %v4986, 7
      %v4989 = vrot.slane %v4988, 4
      %v4991 = vshrl.u32 %v4653, 16
      %v4993 = vrot.slane %v4991, 7
      %v4994 = vshll.u32 %v4653, 16
      %v4996 = vor.u32 %v4993, %v4994
      %v4997 = vsel %vm1586, %v4989, %v4996
      %v4998 = vrot.slane %v4993, 4
      %v5000 = vshrl.u32 %v4654, 16
      %v5002 = vrot.slane %v5000, 7
      %v5003 = vshll.u32 %v4654, 16
      %v5005 = vor.u32 %v5002, %v5003
      %v5006 = vsel %vm1586, %v4998, %v5005
      %s5007 = scalar_lea.vmem %s5, 24
      %v5008 = vld [vmem:[%s5007] sm:$0xf]
      %v5009 = vunpack.c.l.b16 %v4667
      %v5010 = vunpack.c.l.b16 %v4676
      %v5011 = vunpack.c.l.b16 %v4689
      %v5012 = vunpack.c.l.b16 %v4698
      %v5013 = vunpack.c.l.b16 %v4711
      %v5014 = vunpack.c.l.b16 %v4720
      %v5015 = vunpack.c.l.b16 %v4733
      %v5016 = vunpack.c.l.b16 %v4742
      %v5017 = vunpack.c.l.b16 %v4755
      %v5018 = vunpack.c.l.b16 %v4764
      %v5019 = vunpack.c.l.b16 %v4777
      %v5020 = vunpack.c.l.b16 %v4786
      %v5021 = vunpack.c.l.b16 %v4799
      %v5022 = vunpack.c.l.b16 %v4808
      %v5023 = vunpack.c.l.b16 %v4821
      %v5024 = vunpack.c.l.b16 %v4830
      %v5025 = vunpack.c.l.b16 %v4843
      %v5026 = vunpack.c.l.b16 %v4852
      %v5027 = vunpack.c.l.b16 %v4865
      %v5028 = vunpack.c.l.b16 %v4874
      %v5029 = vunpack.c.l.b16 %v4887
      %v5030 = vunpack.c.l.b16 %v4896
      %v5031 = vunpack.c.l.b16 %v4909
      %v5032 = vunpack.c.l.b16 %v4918
      %v5033 = vunpack.c.l.b16 %v4931
      %v5034 = vunpack.c.l.b16 %v4940
      %v5035 = vunpack.c.l.b16 %v4953
      %v5036 = vunpack.c.l.b16 %v4962
      %v5037 = vunpack.c.l.b16 %v4975
      %v5038 = vunpack.c.l.b16 %v4984
      %v5039 = vunpack.c.l.b16 %v4997
      %v5040 = vunpack.c.l.b16 %v5006
      %v5041 = vpack.c.b16 %v5010, %v5009
      %v5042 = vpack.c.b16 %v5012, %v5011
      %v5043 = vpack.c.b16 %v5014, %v5013
      %v5044 = vpack.c.b16 %v5016, %v5015
      %v5045 = vpack.c.b16 %v5018, %v5017
      %v5046 = vpack.c.b16 %v5020, %v5019
      %v5047 = vpack.c.b16 %v5022, %v5021
      %v5048 = vpack.c.b16 %v5024, %v5023
      %v5049 = vpack.c.b16 %v5026, %v5025
      %v5050 = vpack.c.b16 %v5028, %v5027
      %v5051 = vpack.c.b16 %v5030, %v5029
      %v5052 = vpack.c.b16 %v5032, %v5031
      %v5053 = vpack.c.b16 %v5034, %v5033
      %v5054 = vpack.c.b16 %v5036, %v5035
      %v5055 = vpack.c.b16 %v5038, %v5037
      %v5056 = vpack.c.b16 %v5040, %v5039
      %v5058 = vsel %vm1988, %v5041, 0
      %v5061 = vsel %vm1988, %v5042, 0
      %v5064 = vsel %vm1988, %v5043, 0
      %v5067 = vsel %vm1988, %v5044, 0
      %v5070 = vsel %vm1988, %v5045, 0
      %v5073 = vsel %vm1988, %v5046, 0
      %v5076 = vsel %vm1988, %v5047, 0
      %v5079 = vsel %vm1988, %v5048, 0
      %v5082 = vsel %vm1988, %v5049, 0
      %v5085 = vsel %vm1988, %v5050, 0
      %v5088 = vsel %vm1988, %v5051, 0
      %v5091 = vsel %vm1988, %v5052, 0
      %v5094 = vsel %vm1988, %v5053, 0
      %v5097 = vsel %vm1988, %v5054, 0
      %v5100 = vsel %vm1988, %v5055, 0
      %v5103 = vsel %vm1988, %v5056, 0
      %v5106 = vsel %vm2037, %v5008, 0
      %5108 = vmatpush.bf16.msra.mxu0 0
      %5109 = vmatpush.bf16.msra.mxu0 0
      %5110 = vmatpush.bf16.msra.mxu0 0
      %5111 = vmatpush.bf16.msra.mxu0 0
      %5112 = vmatpush.bf16.msra.mxu0 0
      %5113 = vmatpush.bf16.msra.mxu0 0
      %5114 = vmatpush.bf16.msra.mxu0 0
      %5115 = vmatpush.bf16.msra.mxu0 %v5106
      %5116 = vmatmul.bf16.gmra.mxu0 %v5058
      %v5117 = vpop.f32.mrf.mxu0
      %v5118 = vadd.f32 0.0, %v5117
      %v5119 = vpop.f32.mrf.mxu0
      %v5120 = vadd.f32 0.0, %v5119
      %5121 = vmatmul.bf16.gmra.mxu0 %v5061
      %v5122 = vpop.f32.mrf.mxu0
      %v5123 = vadd.f32 0.0, %v5122
      %v5124 = vpop.f32.mrf.mxu0
      %v5125 = vadd.f32 0.0, %v5124
      %5126 = vmatmul.bf16.gmra.mxu0 %v5064
      %v5127 = vpop.f32.mrf.mxu0
      %v5128 = vadd.f32 0.0, %v5127
      %v5129 = vpop.f32.mrf.mxu0
      %v5130 = vadd.f32 0.0, %v5129
      %5131 = vmatmul.bf16.gmra.mxu0 %v5067
      %v5132 = vpop.f32.mrf.mxu0
      %v5133 = vadd.f32 0.0, %v5132
      %v5134 = vpop.f32.mrf.mxu0
      %v5135 = vadd.f32 0.0, %v5134
      %5136 = vmatmul.bf16.gmra.mxu0 %v5070
      %v5137 = vpop.f32.mrf.mxu0
      %v5138 = vadd.f32 0.0, %v5137
      %v5139 = vpop.f32.mrf.mxu0
      %v5140 = vadd.f32 0.0, %v5139
      %5141 = vmatmul.bf16.gmra.mxu0 %v5073
      %v5142 = vpop.f32.mrf.mxu0
      %v5143 = vadd.f32 0.0, %v5142
      %v5144 = vpop.f32.mrf.mxu0
      %v5145 = vadd.f32 0.0, %v5144
      %5146 = vmatmul.bf16.gmra.mxu0 %v5076
      %v5147 = vpop.f32.mrf.mxu0
      %v5148 = vadd.f32 0.0, %v5147
      %v5149 = vpop.f32.mrf.mxu0
      %v5150 = vadd.f32 0.0, %v5149
      %5151 = vmatmul.bf16.gmra.mxu0 %v5079
      %v5152 = vpop.f32.mrf.mxu0
      %v5153 = vadd.f32 0.0, %v5152
      %v5154 = vpop.f32.mrf.mxu0
      %v5155 = vadd.f32 0.0, %v5154
      %5156 = vmatmul.bf16.gmra.mxu0 %v5082
      %v5157 = vpop.f32.mrf.mxu0
      %v5158 = vadd.f32 0.0, %v5157
      %v5159 = vpop.f32.mrf.mxu0
      %v5160 = vadd.f32 0.0, %v5159
      %5161 = vmatmul.bf16.gmra.mxu0 %v5085
      %v5162 = vpop.f32.mrf.mxu0
      %v5163 = vadd.f32 0.0, %v5162
      %v5164 = vpop.f32.mrf.mxu0
      %v5165 = vadd.f32 0.0, %v5164
      %5166 = vmatmul.bf16.gmra.mxu0 %v5088
      %v5167 = vpop.f32.mrf.mxu0
      %v5168 = vadd.f32 0.0, %v5167
      %v5169 = vpop.f32.mrf.mxu0
      %v5170 = vadd.f32 0.0, %v5169
      %5171 = vmatmul.bf16.gmra.mxu0 %v5091
      %v5172 = vpop.f32.mrf.mxu0
      %v5173 = vadd.f32 0.0, %v5172
      %v5174 = vpop.f32.mrf.mxu0
      %v5175 = vadd.f32 0.0, %v5174
      %5176 = vmatmul.bf16.gmra.mxu0 %v5094
      %v5177 = vpop.f32.mrf.mxu0
      %v5178 = vadd.f32 0.0, %v5177
      %v5179 = vpop.f32.mrf.mxu0
      %v5180 = vadd.f32 0.0, %v5179
      %5181 = vmatmul.bf16.gmra.mxu0 %v5097
      %v5182 = vpop.f32.mrf.mxu0
      %v5183 = vadd.f32 0.0, %v5182
      %v5184 = vpop.f32.mrf.mxu0
      %v5185 = vadd.f32 0.0, %v5184
      %5186 = vmatmul.bf16.gmra.mxu0 %v5100
      %v5187 = vpop.f32.mrf.mxu0
      %v5188 = vadd.f32 0.0, %v5187
      %v5189 = vpop.f32.mrf.mxu0
      %v5190 = vadd.f32 0.0, %v5189
      %5191 = vmatmul.bf16.gmra.mxu0 %v5103
      %v5192 = vpop.f32.mrf.mxu0
      %v5193 = vadd.f32 0.0, %v5192
      %v5194 = vpop.f32.mrf.mxu0
      %v5195 = vadd.f32 0.0, %v5194
      %5196 = vdwg.mxu0
      %v5197 = vadd.f32 %v4574, %v5118
      %v5198 = vadd.f32 %v4575, %v5120
      %v5199 = vadd.f32 %v4576, %v5123
      %v5200 = vadd.f32 %v4577, %v5125
      %v5201 = vadd.f32 %v4578, %v5128
      %v5202 = vadd.f32 %v4579, %v5130
      %v5203 = vadd.f32 %v4580, %v5133
      %v5204 = vadd.f32 %v4581, %v5135
      %v5205 = vadd.f32 %v4582, %v5138
      %v5206 = vadd.f32 %v4583, %v5140
      %v5207 = vadd.f32 %v4584, %v5143
      %v5208 = vadd.f32 %v4585, %v5145
      %v5209 = vadd.f32 %v4586, %v5148
      %v5210 = vadd.f32 %v4587, %v5150
      %v5211 = vadd.f32 %v4588, %v5153
      %v5212 = vadd.f32 %v4589, %v5155
      %v5213 = vadd.f32 %v4590, %v5158
      %v5214 = vadd.f32 %v4591, %v5160
      %v5215 = vadd.f32 %v4592, %v5163
      %v5216 = vadd.f32 %v4593, %v5165
      %v5217 = vadd.f32 %v4594, %v5168
      %v5218 = vadd.f32 %v4595, %v5170
      %v5219 = vadd.f32 %v4596, %v5173
      %v5220 = vadd.f32 %v4597, %v5175
      %v5221 = vadd.f32 %v4598, %v5178
      %v5222 = vadd.f32 %v4599, %v5180
      %v5223 = vadd.f32 %v4600, %v5183
      %v5224 = vadd.f32 %v4601, %v5185
      %v5225 = vadd.f32 %v4602, %v5188
      %v5226 = vadd.f32 %v4603, %v5190
      %v5227 = vadd.f32 %v4604, %v5193
      %v5228 = vadd.f32 %v4605, %v5195
      %s5229 = scalar_lea.vmem %s5, 28
      %v5230 = vld [vmem:[%s5229] sm:$0xf]
      %v5263 = vunpack.c.l.b16 %v4608
      %v5264 = vunpack.c.l.b16 %v4609
      %v5265 = vunpack.c.l.b16 %v4611
      %v5266 = vunpack.c.l.b16 %v4612
      %v5267 = vunpack.c.l.b16 %v4614
      %v5268 = vunpack.c.l.b16 %v4615
      %v5269 = vunpack.c.l.b16 %v4617
      %v5270 = vunpack.c.l.b16 %v4618
      %v5271 = vunpack.c.l.b16 %v4620
      %v5272 = vunpack.c.l.b16 %v4621
      %v5273 = vunpack.c.l.b16 %v4623
      %v5274 = vunpack.c.l.b16 %v4624
      %v5275 = vunpack.c.l.b16 %v4626
      %v5276 = vunpack.c.l.b16 %v4627
      %v5277 = vunpack.c.l.b16 %v4629
      %v5278 = vunpack.c.l.b16 %v4630
      %v5279 = vunpack.c.l.b16 %v4632
      %v5280 = vunpack.c.l.b16 %v4633
      %v5281 = vunpack.c.l.b16 %v4635
      %v5282 = vunpack.c.l.b16 %v4636
      %v5283 = vunpack.c.l.b16 %v4638
      %v5284 = vunpack.c.l.b16 %v4639
      %v5285 = vunpack.c.l.b16 %v4641
      %v5286 = vunpack.c.l.b16 %v4642
      %v5287 = vunpack.c.l.b16 %v4644
      %v5288 = vunpack.c.l.b16 %v4645
      %v5289 = vunpack.c.l.b16 %v4647
      %v5290 = vunpack.c.l.b16 %v4648
      %v5291 = vunpack.c.l.b16 %v4650
      %v5292 = vunpack.c.l.b16 %v4651
      %v5293 = vunpack.c.l.b16 %v4653
      %v5294 = vunpack.c.l.b16 %v4654
      %v5295 = vpack.c.b16 %v5264, %v5263
      %v5296 = vpack.c.b16 %v5266, %v5265
      %v5297 = vpack.c.b16 %v5268, %v5267
      %v5298 = vpack.c.b16 %v5270, %v5269
      %v5299 = vpack.c.b16 %v5272, %v5271
      %v5300 = vpack.c.b16 %v5274, %v5273
      %v5301 = vpack.c.b16 %v5276, %v5275
      %v5302 = vpack.c.b16 %v5278, %v5277
      %v5303 = vpack.c.b16 %v5280, %v5279
      %v5304 = vpack.c.b16 %v5282, %v5281
      %v5305 = vpack.c.b16 %v5284, %v5283
      %v5306 = vpack.c.b16 %v5286, %v5285
      %v5307 = vpack.c.b16 %v5288, %v5287
      %v5308 = vpack.c.b16 %v5290, %v5289
      %v5309 = vpack.c.b16 %v5292, %v5291
      %v5310 = vpack.c.b16 %v5294, %v5293
      %v5312 = vsel %vm1988, %v5295, 0
      %v5315 = vsel %vm1988, %v5296, 0
      %v5318 = vsel %vm1988, %v5297, 0
      %v5321 = vsel %vm1988, %v5298, 0
      %v5324 = vsel %vm1988, %v5299, 0
      %v5327 = vsel %vm1988, %v5300, 0
      %v5330 = vsel %vm1988, %v5301, 0
      %v5333 = vsel %vm1988, %v5302, 0
      %v5336 = vsel %vm1988, %v5303, 0
      %v5339 = vsel %vm1988, %v5304, 0
      %v5342 = vsel %vm1988, %v5305, 0
      %v5345 = vsel %vm1988, %v5306, 0
      %v5348 = vsel %vm1988, %v5307, 0
      %v5351 = vsel %vm1988, %v5308, 0
      %v5354 = vsel %vm1988, %v5309, 0
      %v5357 = vsel %vm1988, %v5310, 0
      %v5360 = vsel %vm2037, %v5230, 0
      %5362 = vmatpush.bf16.msra.mxu0 0
      %5363 = vmatpush.bf16.msra.mxu0 0
      %5364 = vmatpush.bf16.msra.mxu0 0
      %5365 = vmatpush.bf16.msra.mxu0 0
      %5366 = vmatpush.bf16.msra.mxu0 0
      %5367 = vmatpush.bf16.msra.mxu0 0
      %5368 = vmatpush.bf16.msra.mxu0 0
      %5369 = vmatpush.bf16.msra.mxu0 %v5360
      %5370 = vmatmul.bf16.gmra.mxu0 %v5312
      %v5371 = vpop.f32.mrf.mxu0
      %v5372 = vadd.f32 0.0, %v5371
      %v5373 = vpop.f32.mrf.mxu0
      %v5374 = vadd.f32 0.0, %v5373
      %5375 = vmatmul.bf16.gmra.mxu0 %v5315
      %v5376 = vpop.f32.mrf.mxu0
      %v5377 = vadd.f32 0.0, %v5376
      %v5378 = vpop.f32.mrf.mxu0
      %v5379 = vadd.f32 0.0, %v5378
      %5380 = vmatmul.bf16.gmra.mxu0 %v5318
      %v5381 = vpop.f32.mrf.mxu0
      %v5382 = vadd.f32 0.0, %v5381
      %v5383 = vpop.f32.mrf.mxu0
      %v5384 = vadd.f32 0.0, %v5383
      %5385 = vmatmul.bf16.gmra.mxu0 %v5321
      %v5386 = vpop.f32.mrf.mxu0
      %v5387 = vadd.f32 0.0, %v5386
      %v5388 = vpop.f32.mrf.mxu0
      %v5389 = vadd.f32 0.0, %v5388
      %5390 = vmatmul.bf16.gmra.mxu0 %v5324
      %v5391 = vpop.f32.mrf.mxu0
      %v5392 = vadd.f32 0.0, %v5391
      %v5393 = vpop.f32.mrf.mxu0
      %v5394 = vadd.f32 0.0, %v5393
      %5395 = vmatmul.bf16.gmra.mxu0 %v5327
      %v5396 = vpop.f32.mrf.mxu0
      %v5397 = vadd.f32 0.0, %v5396
      %v5398 = vpop.f32.mrf.mxu0
      %v5399 = vadd.f32 0.0, %v5398
      %5400 = vmatmul.bf16.gmra.mxu0 %v5330
      %v5401 = vpop.f32.mrf.mxu0
      %v5402 = vadd.f32 0.0, %v5401
      %v5403 = vpop.f32.mrf.mxu0
      %v5404 = vadd.f32 0.0, %v5403
      %5405 = vmatmul.bf16.gmra.mxu0 %v5333
      %v5406 = vpop.f32.mrf.mxu0
      %v5407 = vadd.f32 0.0, %v5406
      %v5408 = vpop.f32.mrf.mxu0
      %v5409 = vadd.f32 0.0, %v5408
      %5410 = vmatmul.bf16.gmra.mxu0 %v5336
      %v5411 = vpop.f32.mrf.mxu0
      %v5412 = vadd.f32 0.0, %v5411
      %v5413 = vpop.f32.mrf.mxu0
      %v5414 = vadd.f32 0.0, %v5413
      %5415 = vmatmul.bf16.gmra.mxu0 %v5339
      %v5416 = vpop.f32.mrf.mxu0
      %v5417 = vadd.f32 0.0, %v5416
      %v5418 = vpop.f32.mrf.mxu0
      %v5419 = vadd.f32 0.0, %v5418
      %5420 = vmatmul.bf16.gmra.mxu0 %v5342
      %v5421 = vpop.f32.mrf.mxu0
      %v5422 = vadd.f32 0.0, %v5421
      %v5423 = vpop.f32.mrf.mxu0
      %v5424 = vadd.f32 0.0, %v5423
      %5425 = vmatmul.bf16.gmra.mxu0 %v5345
      %v5426 = vpop.f32.mrf.mxu0
      %v5427 = vadd.f32 0.0, %v5426
      %v5428 = vpop.f32.mrf.mxu0
      %v5429 = vadd.f32 0.0, %v5428
      %5430 = vmatmul.bf16.gmra.mxu0 %v5348
      %v5431 = vpop.f32.mrf.mxu0
      %v5432 = vadd.f32 0.0, %v5431
      %v5433 = vpop.f32.mrf.mxu0
      %v5434 = vadd.f32 0.0, %v5433
      %5435 = vmatmul.bf16.gmra.mxu0 %v5351
      %v5436 = vpop.f32.mrf.mxu0
      %v5437 = vadd.f32 0.0, %v5436
      %v5438 = vpop.f32.mrf.mxu0
      %v5439 = vadd.f32 0.0, %v5438
      %5440 = vmatmul.bf16.gmra.mxu0 %v5354
      %v5441 = vpop.f32.mrf.mxu0
      %v5442 = vadd.f32 0.0, %v5441
      %v5443 = vpop.f32.mrf.mxu0
      %v5444 = vadd.f32 0.0, %v5443
      %5445 = vmatmul.bf16.gmra.mxu0 %v5357
      %v5446 = vpop.f32.mrf.mxu0
      %v5447 = vadd.f32 0.0, %v5446
      %v5448 = vpop.f32.mrf.mxu0
      %v5449 = vadd.f32 0.0, %v5448
      %5450 = vdwg.mxu0
      %v5451 = vadd.f32 %v5197, %v5372
      %v5452 = vadd.f32 %v5198, %v5374
      %v5453 = vadd.f32 %v5199, %v5377
      %v5454 = vadd.f32 %v5200, %v5379
      %v5455 = vadd.f32 %v5201, %v5382
      %v5456 = vadd.f32 %v5202, %v5384
      %v5457 = vadd.f32 %v5203, %v5387
      %v5458 = vadd.f32 %v5204, %v5389
      %v5459 = vadd.f32 %v5205, %v5392
      %v5460 = vadd.f32 %v5206, %v5394
      %v5461 = vadd.f32 %v5207, %v5397
      %v5462 = vadd.f32 %v5208, %v5399
      %v5463 = vadd.f32 %v5209, %v5402
      %v5464 = vadd.f32 %v5210, %v5404
      %v5465 = vadd.f32 %v5211, %v5407
      %v5466 = vadd.f32 %v5212, %v5409
      %v5467 = vadd.f32 %v5213, %v5412
      %v5468 = vadd.f32 %v5214, %v5414
      %v5469 = vadd.f32 %v5215, %v5417
      %v5470 = vadd.f32 %v5216, %v5419
      %v5471 = vadd.f32 %v5217, %v5422
      %v5472 = vadd.f32 %v5218, %v5424
      %v5473 = vadd.f32 %v5219, %v5427
      %v5474 = vadd.f32 %v5220, %v5429
      %v5475 = vadd.f32 %v5221, %v5432
      %v5476 = vadd.f32 %v5222, %v5434
      %v5477 = vadd.f32 %v5223, %v5437
      %v5478 = vadd.f32 %v5224, %v5439
      %v5479 = vadd.f32 %v5225, %v5442
      %v5480 = vadd.f32 %v5226, %v5444
      %v5481 = vadd.f32 %v5227, %v5447
      %v5482 = vadd.f32 %v5228, %v5449
      %v5483 = vld [vmem:[%s4606 + $0x4] sm:$0xf]
      %v5484 = vld [vmem:[%s4606 + $0x8] sm:$0xf]
      %v5485 = vld [vmem:[%s4606 + $0xc] sm:$0x1]
      %v5486 = vld [vmem:[%s4606 + $0x14] sm:$0xf]
      %v5487 = vld [vmem:[%s4606 + $0x18] sm:$0xf]
      %v5488 = vld [vmem:[%s4606 + $0x1c] sm:$0x1]
      %v5489 = vld [vmem:[%s4606 + $0x24] sm:$0xf]
      %v5490 = vld [vmem:[%s4606 + $0x28] sm:$0xf]
      %v5491 = vld [vmem:[%s4606 + $0x2c] sm:$0x1]
      %v5492 = vld [vmem:[%s4606 + $0x34] sm:$0xf]
      %v5493 = vld [vmem:[%s4606 + $0x38] sm:$0xf]
      %v5494 = vld [vmem:[%s4606 + $0x3c] sm:$0x1]
      %v5495 = vld [vmem:[%s4606 + $0x44] sm:$0xf]
      %v5496 = vld [vmem:[%s4606 + $0x48] sm:$0xf]
      %v5497 = vld [vmem:[%s4606 + $0x4c] sm:$0x1]
      %v5498 = vld [vmem:[%s4606 + $0x54] sm:$0xf]
      %v5499 = vld [vmem:[%s4606 + $0x58] sm:$0xf]
      %v5500 = vld [vmem:[%s4606 + $0x5c] sm:$0x1]
      %v5501 = vld [vmem:[%s4606 + $0x64] sm:$0xf]
      %v5502 = vld [vmem:[%s4606 + $0x68] sm:$0xf]
      %v5503 = vld [vmem:[%s4606 + $0x6c] sm:$0x1]
      %v5504 = vld [vmem:[%s4606 + $0x74] sm:$0xf]
      %v5505 = vld [vmem:[%s4606 + $0x78] sm:$0xf]
      %v5506 = vld [vmem:[%s4606 + $0x7c] sm:$0x1]
      %v5507 = vld [vmem:[%s4606 + $0x84] sm:$0xf]
      %v5508 = vld [vmem:[%s4606 + $0x88] sm:$0xf]
      %v5509 = vld [vmem:[%s4606 + $0x8c] sm:$0x1]
      %v5510 = vld [vmem:[%s4606 + $0x94] sm:$0xf]
      %v5511 = vld [vmem:[%s4606 + $0x98] sm:$0xf]
      %v5512 = vld [vmem:[%s4606 + $0x9c] sm:$0x1]
      %v5513 = vld [vmem:[%s4606 + $0xa4] sm:$0xf]
      %v5514 = vld [vmem:[%s4606 + $0xa8] sm:$0xf]
      %v5515 = vld [vmem:[%s4606 + $0xac] sm:$0x1]
      %v5516 = vld [vmem:[%s4606 + $0xb4] sm:$0xf]
      %v5517 = vld [vmem:[%s4606 + $0xb8] sm:$0xf]
      %v5518 = vld [vmem:[%s4606 + $0xbc] sm:$0x1]
      %v5519 = vld [vmem:[%s4606 + $0xc4] sm:$0xf]
      %v5520 = vld [vmem:[%s4606 + $0xc8] sm:$0xf]
      %v5521 = vld [vmem:[%s4606 + $0xcc] sm:$0x1]
      %v5522 = vld [vmem:[%s4606 + $0xd4] sm:$0xf]
      %v5523 = vld [vmem:[%s4606 + $0xd8] sm:$0xf]
      %v5524 = vld [vmem:[%s4606 + $0xdc] sm:$0x1]
      %v5525 = vld [vmem:[%s4606 + $0xe4] sm:$0xf]
      %v5526 = vld [vmem:[%s4606 + $0xe8] sm:$0xf]
      %v5527 = vld [vmem:[%s4606 + $0xec] sm:$0x1]
      %v5528 = vld [vmem:[%s4606 + $0xf4] sm:$0xf]
      %v5529 = vld [vmem:[%s4606 + $0xf8] sm:$0xf]
      %v5530 = vld [vmem:[%s4606 + $0xfc] sm:$0x1]
      %v5532 = vshrl.u32 %v5483, 16
      %v5534 = vrot.slane %v5532, 4
      %v5535 = vshll.u32 %v5483, 16
      %v5537 = vrot.slane %v5535, 5
      %v5538 = vor.u32 %v5534, %v5537
      %v5539 = vrot.slane %v5538, 4
      %v5541 = vshll.u32 %v5484, 16
      %v5543 = vrot.slane %v5541, 5
      %v5544 = vsel %vm2469, %v5539, %v5543
      %v5545 = vshrl.u32 %v5484, 16
      %v5547 = vrot.slane %v5545, 4
      %v5548 = vor.u32 %v5547, %v5543
      %v5549 = vrot.slane %v5548, 4
      %v5551 = vshll.u32 %v5485, 16
      %v5553 = vrot.slane %v5551, 5
      %v5554 = vsel %vm2469, %v5549, %v5553
      %v5556 = vshrl.u32 %v5486, 16
      %v5558 = vrot.slane %v5556, 4
      %v5559 = vshll.u32 %v5486, 16
      %v5561 = vrot.slane %v5559, 5
      %v5562 = vor.u32 %v5558, %v5561
      %v5563 = vrot.slane %v5562, 4
      %v5565 = vshll.u32 %v5487, 16
      %v5567 = vrot.slane %v5565, 5
      %v5568 = vsel %vm2469, %v5563, %v5567
      %v5569 = vshrl.u32 %v5487, 16
      %v5571 = vrot.slane %v5569, 4
      %v5572 = vor.u32 %v5571, %v5567
      %v5573 = vrot.slane %v5572, 4
      %v5575 = vshll.u32 %v5488, 16
      %v5577 = vrot.slane %v5575, 5
      %v5578 = vsel %vm2469, %v5573, %v5577
      %v5580 = vshrl.u32 %v5489, 16
      %v5582 = vrot.slane %v5580, 4
      %v5583 = vshll.u32 %v5489, 16
      %v5585 = vrot.slane %v5583, 5
      %v5586 = vor.u32 %v5582, %v5585
      %v5587 = vrot.slane %v5586, 4
      %v5589 = vshll.u32 %v5490, 16
      %v5591 = vrot.slane %v5589, 5
      %v5592 = vsel %vm2469, %v5587, %v5591
      %v5593 = vshrl.u32 %v5490, 16
      %v5595 = vrot.slane %v5593, 4
      %v5596 = vor.u32 %v5595, %v5591
      %v5597 = vrot.slane %v5596, 4
      %v5599 = vshll.u32 %v5491, 16
      %v5601 = vrot.slane %v5599, 5
      %v5602 = vsel %vm2469, %v5597, %v5601
      %v5604 = vshrl.u32 %v5492, 16
      %v5606 = vrot.slane %v5604, 4
      %v5607 = vshll.u32 %v5492, 16
      %v5609 = vrot.slane %v5607, 5
      %v5610 = vor.u32 %v5606, %v5609
      %v5611 = vrot.slane %v5610, 4
      %v5613 = vshll.u32 %v5493, 16
      %v5615 = vrot.slane %v5613, 5
      %v5616 = vsel %vm2469, %v5611, %v5615
      %v5617 = vshrl.u32 %v5493, 16
      %v5619 = vrot.slane %v5617, 4
      %v5620 = vor.u32 %v5619, %v5615
      %v5621 = vrot.slane %v5620, 4
      %v5623 = vshll.u32 %v5494, 16
      %v5625 = vrot.slane %v5623, 5
      %v5626 = vsel %vm2469, %v5621, %v5625
      %v5628 = vshrl.u32 %v5495, 16
      %v5630 = vrot.slane %v5628, 4
      %v5631 = vshll.u32 %v5495, 16
      %v5633 = vrot.slane %v5631, 5
      %v5634 = vor.u32 %v5630, %v5633
      %v5635 = vrot.slane %v5634, 4
      %v5637 = vshll.u32 %v5496, 16
      %v5639 = vrot.slane %v5637, 5
      %v5640 = vsel %vm2469, %v5635, %v5639
      %v5641 = vshrl.u32 %v5496, 16
      %v5643 = vrot.slane %v5641, 4
      %v5644 = vor.u32 %v5643, %v5639
      %v5645 = vrot.slane %v5644, 4
      %v5647 = vshll.u32 %v5497, 16
      %v5649 = vrot.slane %v5647, 5
      %v5650 = vsel %vm2469, %v5645, %v5649
      %v5652 = vshrl.u32 %v5498, 16
      %v5654 = vrot.slane %v5652, 4
      %v5655 = vshll.u32 %v5498, 16
      %v5657 = vrot.slane %v5655, 5
      %v5658 = vor.u32 %v5654, %v5657
      %v5659 = vrot.slane %v5658, 4
      %v5661 = vshll.u32 %v5499, 16
      %v5663 = vrot.slane %v5661, 5
      %v5664 = vsel %vm2469, %v5659, %v5663
      %v5665 = vshrl.u32 %v5499, 16
      %v5667 = vrot.slane %v5665, 4
      %v5668 = vor.u32 %v5667, %v5663
      %v5669 = vrot.slane %v5668, 4
      %v5671 = vshll.u32 %v5500, 16
      %v5673 = vrot.slane %v5671, 5
      %v5674 = vsel %vm2469, %v5669, %v5673
      %v5676 = vshrl.u32 %v5501, 16
      %v5678 = vrot.slane %v5676, 4
      %v5679 = vshll.u32 %v5501, 16
      %v5681 = vrot.slane %v5679, 5
      %v5682 = vor.u32 %v5678, %v5681
      %v5683 = vrot.slane %v5682, 4
      %v5685 = vshll.u32 %v5502, 16
      %v5687 = vrot.slane %v5685, 5
      %v5688 = vsel %vm2469, %v5683, %v5687
      %v5689 = vshrl.u32 %v5502, 16
      %v5691 = vrot.slane %v5689, 4
      %v5692 = vor.u32 %v5691, %v5687
      %v5693 = vrot.slane %v5692, 4
      %v5695 = vshll.u32 %v5503, 16
      %v5697 = vrot.slane %v5695, 5
      %v5698 = vsel %vm2469, %v5693, %v5697
      %v5700 = vshrl.u32 %v5504, 16
      %v5702 = vrot.slane %v5700, 4
      %v5703 = vshll.u32 %v5504, 16
      %v5705 = vrot.slane %v5703, 5
      %v5706 = vor.u32 %v5702, %v5705
      %v5707 = vrot.slane %v5706, 4
      %v5709 = vshll.u32 %v5505, 16
      %v5711 = vrot.slane %v5709, 5
      %v5712 = vsel %vm2469, %v5707, %v5711
      %v5713 = vshrl.u32 %v5505, 16
      %v5715 = vrot.slane %v5713, 4
      %v5716 = vor.u32 %v5715, %v5711
      %v5717 = vrot.slane %v5716, 4
      %v5719 = vshll.u32 %v5506, 16
      %v5721 = vrot.slane %v5719, 5
      %v5722 = vsel %vm2469, %v5717, %v5721
      %v5724 = vshrl.u32 %v5507, 16
      %v5726 = vrot.slane %v5724, 4
      %v5727 = vshll.u32 %v5507, 16
      %v5729 = vrot.slane %v5727, 5
      %v5730 = vor.u32 %v5726, %v5729
      %v5731 = vrot.slane %v5730, 4
      %v5733 = vshll.u32 %v5508, 16
      %v5735 = vrot.slane %v5733, 5
      %v5736 = vsel %vm2469, %v5731, %v5735
      %v5737 = vshrl.u32 %v5508, 16
      %v5739 = vrot.slane %v5737, 4
      %v5740 = vor.u32 %v5739, %v5735
      %v5741 = vrot.slane %v5740, 4
      %v5743 = vshll.u32 %v5509, 16
      %v5745 = vrot.slane %v5743, 5
      %v5746 = vsel %vm2469, %v5741, %v5745
      %v5748 = vshrl.u32 %v5510, 16
      %v5750 = vrot.slane %v5748, 4
      %v5751 = vshll.u32 %v5510, 16
      %v5753 = vrot.slane %v5751, 5
      %v5754 = vor.u32 %v5750, %v5753
      %v5755 = vrot.slane %v5754, 4
      %v5757 = vshll.u32 %v5511, 16
      %v5759 = vrot.slane %v5757, 5
      %v5760 = vsel %vm2469, %v5755, %v5759
      %v5761 = vshrl.u32 %v5511, 16
      %v5763 = vrot.slane %v5761, 4
      %v5764 = vor.u32 %v5763, %v5759
      %v5765 = vrot.slane %v5764, 4
      %v5767 = vshll.u32 %v5512, 16
      %v5769 = vrot.slane %v5767, 5
      %v5770 = vsel %vm2469, %v5765, %v5769
      %v5772 = vshrl.u32 %v5513, 16
      %v5774 = vrot.slane %v5772, 4
      %v5775 = vshll.u32 %v5513, 16
      %v5777 = vrot.slane %v5775, 5
      %v5778 = vor.u32 %v5774, %v5777
      %v5779 = vrot.slane %v5778, 4
      %v5781 = vshll.u32 %v5514, 16
      %v5783 = vrot.slane %v5781, 5
      %v5784 = vsel %vm2469, %v5779, %v5783
      %v5785 = vshrl.u32 %v5514, 16
      %v5787 = vrot.slane %v5785, 4
      %v5788 = vor.u32 %v5787, %v5783
      %v5789 = vrot.slane %v5788, 4
      %v5791 = vshll.u32 %v5515, 16
      %v5793 = vrot.slane %v5791, 5
      %v5794 = vsel %vm2469, %v5789, %v5793
      %v5796 = vshrl.u32 %v5516, 16
      %v5798 = vrot.slane %v5796, 4
      %v5799 = vshll.u32 %v5516, 16
      %v5801 = vrot.slane %v5799, 5
      %v5802 = vor.u32 %v5798, %v5801
      %v5803 = vrot.slane %v5802, 4
      %v5805 = vshll.u32 %v5517, 16
      %v5807 = vrot.slane %v5805, 5
      %v5808 = vsel %vm2469, %v5803, %v5807
      %v5809 = vshrl.u32 %v5517, 16
      %v5811 = vrot.slane %v5809, 4
      %v5812 = vor.u32 %v5811, %v5807
      %v5813 = vrot.slane %v5812, 4
      %v5815 = vshll.u32 %v5518, 16
      %v5817 = vrot.slane %v5815, 5
      %v5818 = vsel %vm2469, %v5813, %v5817
      %v5820 = vshrl.u32 %v5519, 16
      %v5822 = vrot.slane %v5820, 4
      %v5823 = vshll.u32 %v5519, 16
      %v5825 = vrot.slane %v5823, 5
      %v5826 = vor.u32 %v5822, %v5825
      %v5827 = vrot.slane %v5826, 4
      %v5829 = vshll.u32 %v5520, 16
      %v5831 = vrot.slane %v5829, 5
      %v5832 = vsel %vm2469, %v5827, %v5831
      %v5833 = vshrl.u32 %v5520, 16
      %v5835 = vrot.slane %v5833, 4
      %v5836 = vor.u32 %v5835, %v5831
      %v5837 = vrot.slane %v5836, 4
      %v5839 = vshll.u32 %v5521, 16
      %v5841 = vrot.slane %v5839, 5
      %v5842 = vsel %vm2469, %v5837, %v5841
      %v5844 = vshrl.u32 %v5522, 16
      %v5846 = vrot.slane %v5844, 4
      %v5847 = vshll.u32 %v5522, 16
      %v5849 = vrot.slane %v5847, 5
      %v5850 = vor.u32 %v5846, %v5849
      %v5851 = vrot.slane %v5850, 4
      %v5853 = vshll.u32 %v5523, 16
      %v5855 = vrot.slane %v5853, 5
      %v5856 = vsel %vm2469, %v5851, %v5855
      %v5857 = vshrl.u32 %v5523, 16
      %v5859 = vrot.slane %v5857, 4
      %v5860 = vor.u32 %v5859, %v5855
      %v5861 = vrot.slane %v5860, 4
      %v5863 = vshll.u32 %v5524, 16
      %v5865 = vrot.slane %v5863, 5
      %v5866 = vsel %vm2469, %v5861, %v5865
      %v5868 = vshrl.u32 %v5525, 16
      %v5870 = vrot.slane %v5868, 4
      %v5871 = vshll.u32 %v5525, 16
      %v5873 = vrot.slane %v5871, 5
      %v5874 = vor.u32 %v5870, %v5873
      %v5875 = vrot.slane %v5874, 4
      %v5877 = vshll.u32 %v5526, 16
      %v5879 = vrot.slane %v5877, 5
      %v5880 = vsel %vm2469, %v5875, %v5879
      %v5881 = vshrl.u32 %v5526, 16
      %v5883 = vrot.slane %v5881, 4
      %v5884 = vor.u32 %v5883, %v5879
      %v5885 = vrot.slane %v5884, 4
      %v5887 = vshll.u32 %v5527, 16
      %v5889 = vrot.slane %v5887, 5
      %v5890 = vsel %vm2469, %v5885, %v5889
      %v5892 = vshrl.u32 %v5528, 16
      %v5894 = vrot.slane %v5892, 4
      %v5895 = vshll.u32 %v5528, 16
      %v5897 = vrot.slane %v5895, 5
      %v5898 = vor.u32 %v5894, %v5897
      %v5899 = vrot.slane %v5898, 4
      %v5901 = vshll.u32 %v5529, 16
      %v5903 = vrot.slane %v5901, 5
      %v5904 = vsel %vm2469, %v5899, %v5903
      %v5905 = vshrl.u32 %v5529, 16
      %v5907 = vrot.slane %v5905, 4
      %v5908 = vor.u32 %v5907, %v5903
      %v5909 = vrot.slane %v5908, 4
      %v5911 = vshll.u32 %v5530, 16
      %v5913 = vrot.slane %v5911, 5
      %v5914 = vsel %vm2469, %v5909, %v5913
      %s5915 = scalar_lea.vmem %s5, 32
      %v5916 = vld [vmem:[%s5915] sm:$0xf]
      %v5917 = vunpack.c.l.b16 %v5544
      %v5918 = vunpack.c.l.b16 %v5554
      %v5919 = vunpack.c.l.b16 %v5568
      %v5920 = vunpack.c.l.b16 %v5578
      %v5921 = vunpack.c.l.b16 %v5592
      %v5922 = vunpack.c.l.b16 %v5602
      %v5923 = vunpack.c.l.b16 %v5616
      %v5924 = vunpack.c.l.b16 %v5626
      %v5925 = vunpack.c.l.b16 %v5640
      %v5926 = vunpack.c.l.b16 %v5650
      %v5927 = vunpack.c.l.b16 %v5664
      %v5928 = vunpack.c.l.b16 %v5674
      %v5929 = vunpack.c.l.b16 %v5688
      %v5930 = vunpack.c.l.b16 %v5698
      %v5931 = vunpack.c.l.b16 %v5712
      %v5932 = vunpack.c.l.b16 %v5722
      %v5933 = vunpack.c.l.b16 %v5736
      %v5934 = vunpack.c.l.b16 %v5746
      %v5935 = vunpack.c.l.b16 %v5760
      %v5936 = vunpack.c.l.b16 %v5770
      %v5937 = vunpack.c.l.b16 %v5784
      %v5938 = vunpack.c.l.b16 %v5794
      %v5939 = vunpack.c.l.b16 %v5808
      %v5940 = vunpack.c.l.b16 %v5818
      %v5941 = vunpack.c.l.b16 %v5832
      %v5942 = vunpack.c.l.b16 %v5842
      %v5943 = vunpack.c.l.b16 %v5856
      %v5944 = vunpack.c.l.b16 %v5866
      %v5945 = vunpack.c.l.b16 %v5880
      %v5946 = vunpack.c.l.b16 %v5890
      %v5947 = vunpack.c.l.b16 %v5904
      %v5948 = vunpack.c.l.b16 %v5914
      %v5949 = vpack.c.b16 %v5918, %v5917
      %v5950 = vpack.c.b16 %v5920, %v5919
      %v5951 = vpack.c.b16 %v5922, %v5921
      %v5952 = vpack.c.b16 %v5924, %v5923
      %v5953 = vpack.c.b16 %v5926, %v5925
      %v5954 = vpack.c.b16 %v5928, %v5927
      %v5955 = vpack.c.b16 %v5930, %v5929
      %v5956 = vpack.c.b16 %v5932, %v5931
      %v5957 = vpack.c.b16 %v5934, %v5933
      %v5958 = vpack.c.b16 %v5936, %v5935
      %v5959 = vpack.c.b16 %v5938, %v5937
      %v5960 = vpack.c.b16 %v5940, %v5939
      %v5961 = vpack.c.b16 %v5942, %v5941
      %v5962 = vpack.c.b16 %v5944, %v5943
      %v5963 = vpack.c.b16 %v5946, %v5945
      %v5964 = vpack.c.b16 %v5948, %v5947
      %v5966 = vsel %vm1988, %v5949, 0
      %v5969 = vsel %vm1988, %v5950, 0
      %v5972 = vsel %vm1988, %v5951, 0
      %v5975 = vsel %vm1988, %v5952, 0
      %v5978 = vsel %vm1988, %v5953, 0
      %v5981 = vsel %vm1988, %v5954, 0
      %v5984 = vsel %vm1988, %v5955, 0
      %v5987 = vsel %vm1988, %v5956, 0
      %v5990 = vsel %vm1988, %v5957, 0
      %v5993 = vsel %vm1988, %v5958, 0
      %v5996 = vsel %vm1988, %v5959, 0
      %v5999 = vsel %vm1988, %v5960, 0
      %v6002 = vsel %vm1988, %v5961, 0
      %v6005 = vsel %vm1988, %v5962, 0
      %v6008 = vsel %vm1988, %v5963, 0
      %v6011 = vsel %vm1988, %v5964, 0
      %v6014 = vsel %vm2037, %v5916, 0
      %6016 = vmatpush.bf16.msra.mxu0 0
      %6017 = vmatpush.bf16.msra.mxu0 0
      %6018 = vmatpush.bf16.msra.mxu0 0
      %6019 = vmatpush.bf16.msra.mxu0 0
      %6020 = vmatpush.bf16.msra.mxu0 0
      %6021 = vmatpush.bf16.msra.mxu0 0
      %6022 = vmatpush.bf16.msra.mxu0 0
      %6023 = vmatpush.bf16.msra.mxu0 %v6014
      %6024 = vmatmul.bf16.gmra.mxu0 %v5966
      %v6025 = vpop.f32.mrf.mxu0
      %v6026 = vadd.f32 0.0, %v6025
      %v6027 = vpop.f32.mrf.mxu0
      %v6028 = vadd.f32 0.0, %v6027
      %6029 = vmatmul.bf16.gmra.mxu0 %v5969
      %v6030 = vpop.f32.mrf.mxu0
      %v6031 = vadd.f32 0.0, %v6030
      %v6032 = vpop.f32.mrf.mxu0
      %v6033 = vadd.f32 0.0, %v6032
      %6034 = vmatmul.bf16.gmra.mxu0 %v5972
      %v6035 = vpop.f32.mrf.mxu0
      %v6036 = vadd.f32 0.0, %v6035
      %v6037 = vpop.f32.mrf.mxu0
      %v6038 = vadd.f32 0.0, %v6037
      %6039 = vmatmul.bf16.gmra.mxu0 %v5975
      %v6040 = vpop.f32.mrf.mxu0
      %v6041 = vadd.f32 0.0, %v6040
      %v6042 = vpop.f32.mrf.mxu0
      %v6043 = vadd.f32 0.0, %v6042
      %6044 = vmatmul.bf16.gmra.mxu0 %v5978
      %v6045 = vpop.f32.mrf.mxu0
      %v6046 = vadd.f32 0.0, %v6045
      %v6047 = vpop.f32.mrf.mxu0
      %v6048 = vadd.f32 0.0, %v6047
      %6049 = vmatmul.bf16.gmra.mxu0 %v5981
      %v6050 = vpop.f32.mrf.mxu0
      %v6051 = vadd.f32 0.0, %v6050
      %v6052 = vpop.f32.mrf.mxu0
      %v6053 = vadd.f32 0.0, %v6052
      %6054 = vmatmul.bf16.gmra.mxu0 %v5984
      %v6055 = vpop.f32.mrf.mxu0
      %v6056 = vadd.f32 0.0, %v6055
      %v6057 = vpop.f32.mrf.mxu0
      %v6058 = vadd.f32 0.0, %v6057
      %6059 = vmatmul.bf16.gmra.mxu0 %v5987
      %v6060 = vpop.f32.mrf.mxu0
      %v6061 = vadd.f32 0.0, %v6060
      %v6062 = vpop.f32.mrf.mxu0
      %v6063 = vadd.f32 0.0, %v6062
      %6064 = vmatmul.bf16.gmra.mxu0 %v5990
      %v6065 = vpop.f32.mrf.mxu0
      %v6066 = vadd.f32 0.0, %v6065
      %v6067 = vpop.f32.mrf.mxu0
      %v6068 = vadd.f32 0.0, %v6067
      %6069 = vmatmul.bf16.gmra.mxu0 %v5993
      %v6070 = vpop.f32.mrf.mxu0
      %v6071 = vadd.f32 0.0, %v6070
      %v6072 = vpop.f32.mrf.mxu0
      %v6073 = vadd.f32 0.0, %v6072
      %6074 = vmatmul.bf16.gmra.mxu0 %v5996
      %v6075 = vpop.f32.mrf.mxu0
      %v6076 = vadd.f32 0.0, %v6075
      %v6077 = vpop.f32.mrf.mxu0
      %v6078 = vadd.f32 0.0, %v6077
      %6079 = vmatmul.bf16.gmra.mxu0 %v5999
      %v6080 = vpop.f32.mrf.mxu0
      %v6081 = vadd.f32 0.0, %v6080
      %v6082 = vpop.f32.mrf.mxu0
      %v6083 = vadd.f32 0.0, %v6082
      %6084 = vmatmul.bf16.gmra.mxu0 %v6002
      %v6085 = vpop.f32.mrf.mxu0
      %v6086 = vadd.f32 0.0, %v6085
      %v6087 = vpop.f32.mrf.mxu0
      %v6088 = vadd.f32 0.0, %v6087
      %6089 = vmatmul.bf16.gmra.mxu0 %v6005
      %v6090 = vpop.f32.mrf.mxu0
      %v6091 = vadd.f32 0.0, %v6090
      %v6092 = vpop.f32.mrf.mxu0
      %v6093 = vadd.f32 0.0, %v6092
      %6094 = vmatmul.bf16.gmra.mxu0 %v6008
      %v6095 = vpop.f32.mrf.mxu0
      %v6096 = vadd.f32 0.0, %v6095
      %v6097 = vpop.f32.mrf.mxu0
      %v6098 = vadd.f32 0.0, %v6097
      %6099 = vmatmul.bf16.gmra.mxu0 %v6011
      %v6100 = vpop.f32.mrf.mxu0
      %v6101 = vadd.f32 0.0, %v6100
      %v6102 = vpop.f32.mrf.mxu0
      %v6103 = vadd.f32 0.0, %v6102
      %6104 = vdwg.mxu0
      %v6105 = vadd.f32 %v5451, %v6026
      %v6106 = vadd.f32 %v5452, %v6028
      %v6107 = vadd.f32 %v5453, %v6031
      %v6108 = vadd.f32 %v5454, %v6033
      %v6109 = vadd.f32 %v5455, %v6036
      %v6110 = vadd.f32 %v5456, %v6038
      %v6111 = vadd.f32 %v5457, %v6041
      %v6112 = vadd.f32 %v5458, %v6043
      %v6113 = vadd.f32 %v5459, %v6046
      %v6114 = vadd.f32 %v5460, %v6048
      %v6115 = vadd.f32 %v5461, %v6051
      %v6116 = vadd.f32 %v5462, %v6053
      %v6117 = vadd.f32 %v5463, %v6056
      %v6118 = vadd.f32 %v5464, %v6058
      %v6119 = vadd.f32 %v5465, %v6061
      %v6120 = vadd.f32 %v5466, %v6063
      %v6121 = vadd.f32 %v5467, %v6066
      %v6122 = vadd.f32 %v5468, %v6068
      %v6123 = vadd.f32 %v5469, %v6071
      %v6124 = vadd.f32 %v5470, %v6073
      %v6125 = vadd.f32 %v5471, %v6076
      %v6126 = vadd.f32 %v5472, %v6078
      %v6127 = vadd.f32 %v5473, %v6081
      %v6128 = vadd.f32 %v5474, %v6083
      %v6129 = vadd.f32 %v5475, %v6086
      %v6130 = vadd.f32 %v5476, %v6088
      %v6131 = vadd.f32 %v5477, %v6091
      %v6132 = vadd.f32 %v5478, %v6093
      %v6133 = vadd.f32 %v5479, %v6096
      %v6134 = vadd.f32 %v5480, %v6098
      %v6135 = vadd.f32 %v5481, %v6101
      %v6136 = vadd.f32 %v5482, %v6103
      %v6137 = vxor.u32 %v6105, 2147483648
      %v6138 = vxor.u32 %v6106, 2147483648
      %v6139 = vxor.u32 %v6107, 2147483648
      %v6140 = vxor.u32 %v6108, 2147483648
      %v6141 = vxor.u32 %v6109, 2147483648
      %v6142 = vxor.u32 %v6110, 2147483648
      %v6143 = vxor.u32 %v6111, 2147483648
      %v6144 = vxor.u32 %v6112, 2147483648
      %v6145 = vxor.u32 %v6113, 2147483648
      %v6146 = vxor.u32 %v6114, 2147483648
      %v6147 = vxor.u32 %v6115, 2147483648
      %v6148 = vxor.u32 %v6116, 2147483648
      %v6149 = vxor.u32 %v6117, 2147483648
      %v6150 = vxor.u32 %v6118, 2147483648
      %v6151 = vxor.u32 %v6119, 2147483648
      %v6152 = vxor.u32 %v6120, 2147483648
      %v6153 = vxor.u32 %v6121, 2147483648
      %v6154 = vxor.u32 %v6122, 2147483648
      %v6155 = vxor.u32 %v6123, 2147483648
      %v6156 = vxor.u32 %v6124, 2147483648
      %v6157 = vxor.u32 %v6125, 2147483648
      %v6158 = vxor.u32 %v6126, 2147483648
      %v6159 = vxor.u32 %v6127, 2147483648
      %v6160 = vxor.u32 %v6128, 2147483648
      %v6161 = vxor.u32 %v6129, 2147483648
      %v6162 = vxor.u32 %v6130, 2147483648
      %v6163 = vxor.u32 %v6131, 2147483648
      %v6164 = vxor.u32 %v6132, 2147483648
      %v6165 = vxor.u32 %v6133, 2147483648
      %v6166 = vxor.u32 %v6134, 2147483648
      %v6167 = vxor.u32 %v6135, 2147483648
      %v6168 = vxor.u32 %v6136, 2147483648
      %v6169 = vmul.f32 %v6137, 1.442695
      %v6170 = vpow.pop %v6169
      %v6171 = vmul.f32 %v6138, 1.442695
      %v6172 = vpow.pop %v6171
      %v6173 = vmul.f32 %v6139, 1.442695
      %v6174 = vpow.pop %v6173
      %v6175 = vmul.f32 %v6140, 1.442695
      %v6176 = vpow.pop %v6175
      %v6177 = vmul.f32 %v6141, 1.442695
      %v6178 = vpow.pop %v6177
      %v6179 = vmul.f32 %v6142, 1.442695
      %v6180 = vpow.pop %v6179
      %v6181 = vmul.f32 %v6143, 1.442695
      %v6182 = vpow.pop %v6181
      %v6183 = vmul.f32 %v6144, 1.442695
      %v6184 = vpow.pop %v6183
      %v6185 = vmul.f32 %v6145, 1.442695
      %v6186 = vpow.pop %v6185
      %v6187 = vmul.f32 %v6146, 1.442695
      %v6188 = vpow.pop %v6187
      %v6189 = vmul.f32 %v6147, 1.442695
      %v6190 = vpow.pop %v6189
      %v6191 = vmul.f32 %v6148, 1.442695
      %v6192 = vpow.pop %v6191
      %v6193 = vmul.f32 %v6149, 1.442695
      %v6194 = vpow.pop %v6193
      %v6195 = vmul.f32 %v6150, 1.442695
      %v6196 = vpow.pop %v6195
      %v6197 = vmul.f32 %v6151, 1.442695
      %v6198 = vpow.pop %v6197
      %v6199 = vmul.f32 %v6152, 1.442695
      %v6200 = vpow.pop %v6199
      %v6201 = vmul.f32 %v6153, 1.442695
      %v6202 = vpow.pop %v6201
      %v6203 = vmul.f32 %v6154, 1.442695
      %v6204 = vpow.pop %v6203
      %v6205 = vmul.f32 %v6155, 1.442695
      %v6206 = vpow.pop %v6205
      %v6207 = vmul.f32 %v6156, 1.442695
      %v6208 = vpow.pop %v6207
      %v6209 = vmul.f32 %v6157, 1.442695
      %v6210 = vpow.pop %v6209
      %v6211 = vmul.f32 %v6158, 1.442695
      %v6212 = vpow.pop %v6211
      %v6213 = vmul.f32 %v6159, 1.442695
      %v6214 = vpow.pop %v6213
      %v6215 = vmul.f32 %v6160, 1.442695
      %v6216 = vpow.pop %v6215
      %v6217 = vmul.f32 %v6161, 1.442695
      %v6218 = vpow.pop %v6217
      %v6219 = vmul.f32 %v6162, 1.442695
      %v6220 = vpow.pop %v6219
      %v6221 = vmul.f32 %v6163, 1.442695
      %v6222 = vpow.pop %v6221
      %v6223 = vmul.f32 %v6164, 1.442695
      %v6224 = vpow.pop %v6223
      %v6225 = vmul.f32 %v6165, 1.442695
      %v6226 = vpow.pop %v6225
      %v6227 = vmul.f32 %v6166, 1.442695
      %v6228 = vpow.pop %v6227
      %v6229 = vmul.f32 %v6167, 1.442695
      %v6230 = vpow.pop %v6229
      %v6231 = vmul.f32 %v6168, 1.442695
      %v6232 = vpow.pop %v6231
      %v6233 = vadd.f32 %v6170, 1.0
      %v6234 = vadd.f32 %v6172, 1.0
      %v6235 = vadd.f32 %v6174, 1.0
      %v6236 = vadd.f32 %v6176, 1.0
      %v6237 = vadd.f32 %v6178, 1.0
      %v6238 = vadd.f32 %v6180, 1.0
      %v6239 = vadd.f32 %v6182, 1.0
      %v6240 = vadd.f32 %v6184, 1.0
      %v6241 = vadd.f32 %v6186, 1.0
      %v6242 = vadd.f32 %v6188, 1.0
      %v6243 = vadd.f32 %v6190, 1.0
      %v6244 = vadd.f32 %v6192, 1.0
      %v6245 = vadd.f32 %v6194, 1.0
      %v6246 = vadd.f32 %v6196, 1.0
      %v6247 = vadd.f32 %v6198, 1.0
      %v6248 = vadd.f32 %v6200, 1.0
      %v6249 = vadd.f32 %v6202, 1.0
      %v6250 = vadd.f32 %v6204, 1.0
      %v6251 = vadd.f32 %v6206, 1.0
      %v6252 = vadd.f32 %v6208, 1.0
      %v6253 = vadd.f32 %v6210, 1.0
      %v6254 = vadd.f32 %v6212, 1.0
      %v6255 = vadd.f32 %v6214, 1.0
      %v6256 = vadd.f32 %v6216, 1.0
      %v6257 = vadd.f32 %v6218, 1.0
      %v6258 = vadd.f32 %v6220, 1.0
      %v6259 = vadd.f32 %v6222, 1.0
      %v6260 = vadd.f32 %v6224, 1.0
      %v6261 = vadd.f32 %v6226, 1.0
      %v6262 = vadd.f32 %v6228, 1.0
      %v6263 = vadd.f32 %v6230, 1.0
      %v6264 = vadd.f32 %v6232, 1.0
      %v6265 = vrcp.pop %v6233
      %v6266 = vmul.f32 %v6233, %v6265
      %v6267 = vsub.f32 1.0, %v6266
      %v6268 = vmul.f32 %v6265, %v6267
      %v6269 = vadd.f32 %v6265, %v6268
      %vm6270 = vweird.f32 %v6233
      %vm6271 = vweird.f32 %v6265
      %vm6272 = vmor %vm6270, %vm6271
      %v6273 = vsel %vm6272, %v6265, %v6269
      %v6274 = vand.u32 2147483647, %v6233
      %vm6275 = vcmp.eq.f32.partialorder %v6274, 8.507059e+37
      %v6276 = vand.u32 %v6233, 2147483648
      %v6277 = vor.u32 1.1754944e-38, %v6276
      %v6278 = vsel %vm6275, %v6277, %v6273
      %v6279 = vmul.f32 1.0, %v6278
      %v6280 = vrcp.pop %v6234
      %v6281 = vmul.f32 %v6234, %v6280
      %v6282 = vsub.f32 1.0, %v6281
      %v6283 = vmul.f32 %v6280, %v6282
      %v6284 = vadd.f32 %v6280, %v6283
      %vm6285 = vweird.f32 %v6234
      %vm6286 = vweird.f32 %v6280
      %vm6287 = vmor %vm6285, %vm6286
      %v6288 = vsel %vm6287, %v6280, %v6284
      %v6289 = vand.u32 2147483647, %v6234
      %vm6290 = vcmp.eq.f32.partialorder %v6289, 8.507059e+37
      %v6291 = vand.u32 %v6234, 2147483648
      %v6292 = vor.u32 1.1754944e-38, %v6291
      %v6293 = vsel %vm6290, %v6292, %v6288
      %v6294 = vmul.f32 1.0, %v6293
      %v6295 = vrcp.pop %v6235
      %v6296 = vmul.f32 %v6235, %v6295
      %v6297 = vsub.f32 1.0, %v6296
      %v6298 = vmul.f32 %v6295, %v6297
      %v6299 = vadd.f32 %v6295, %v6298
      %vm6300 = vweird.f32 %v6235
      %vm6301 = vweird.f32 %v6295
      %vm6302 = vmor %vm6300, %vm6301
      %v6303 = vsel %vm6302, %v6295, %v6299
      %v6304 = vand.u32 2147483647, %v6235
      %vm6305 = vcmp.eq.f32.partialorder %v6304, 8.507059e+37
      %v6306 = vand.u32 %v6235, 2147483648
      %v6307 = vor.u32 1.1754944e-38, %v6306
      %v6308 = vsel %vm6305, %v6307, %v6303
      %v6309 = vmul.f32 1.0, %v6308
      %v6310 = vrcp.pop %v6236
      %v6311 = vmul.f32 %v6236, %v6310
      %v6312 = vsub.f32 1.0, %v6311
      %v6313 = vmul.f32 %v6310, %v6312
      %v6314 = vadd.f32 %v6310, %v6313
      %vm6315 = vweird.f32 %v6236
      %vm6316 = vweird.f32 %v6310
      %vm6317 = vmor %vm6315, %vm6316
      %v6318 = vsel %vm6317, %v6310, %v6314
      %v6319 = vand.u32 2147483647, %v6236
      %vm6320 = vcmp.eq.f32.partialorder %v6319, 8.507059e+37
      %v6321 = vand.u32 %v6236, 2147483648
      %v6322 = vor.u32 1.1754944e-38, %v6321
      %v6323 = vsel %vm6320, %v6322, %v6318
      %v6324 = vmul.f32 1.0, %v6323
      %v6325 = vrcp.pop %v6237
      %v6326 = vmul.f32 %v6237, %v6325
      %v6327 = vsub.f32 1.0, %v6326
      %v6328 = vmul.f32 %v6325, %v6327
      %v6329 = vadd.f32 %v6325, %v6328
      %vm6330 = vweird.f32 %v6237
      %vm6331 = vweird.f32 %v6325
      %vm6332 = vmor %vm6330, %vm6331
      %v6333 = vsel %vm6332, %v6325, %v6329
      %v6334 = vand.u32 2147483647, %v6237
      %vm6335 = vcmp.eq.f32.partialorder %v6334, 8.507059e+37
      %v6336 = vand.u32 %v6237, 2147483648
      %v6337 = vor.u32 1.1754944e-38, %v6336
      %v6338 = vsel %vm6335, %v6337, %v6333
      %v6339 = vmul.f32 1.0, %v6338
      %v6340 = vrcp.pop %v6238
      %v6341 = vmul.f32 %v6238, %v6340
      %v6342 = vsub.f32 1.0, %v6341
      %v6343 = vmul.f32 %v6340, %v6342
      %v6344 = vadd.f32 %v6340, %v6343
      %vm6345 = vweird.f32 %v6238
      %vm6346 = vweird.f32 %v6340
      %vm6347 = vmor %vm6345, %vm6346
      %v6348 = vsel %vm6347, %v6340, %v6344
      %v6349 = vand.u32 2147483647, %v6238
      %vm6350 = vcmp.eq.f32.partialorder %v6349, 8.507059e+37
      %v6351 = vand.u32 %v6238, 2147483648
      %v6352 = vor.u32 1.1754944e-38, %v6351
      %v6353 = vsel %vm6350, %v6352, %v6348
      %v6354 = vmul.f32 1.0, %v6353
      %v6355 = vrcp.pop %v6239
      %v6356 = vmul.f32 %v6239, %v6355
      %v6357 = vsub.f32 1.0, %v6356
      %v6358 = vmul.f32 %v6355, %v6357
      %v6359 = vadd.f32 %v6355, %v6358
      %vm6360 = vweird.f32 %v6239
      %vm6361 = vweird.f32 %v6355
      %vm6362 = vmor %vm6360, %vm6361
      %v6363 = vsel %vm6362, %v6355, %v6359
      %v6364 = vand.u32 2147483647, %v6239
      %vm6365 = vcmp.eq.f32.partialorder %v6364, 8.507059e+37
      %v6366 = vand.u32 %v6239, 2147483648
      %v6367 = vor.u32 1.1754944e-38, %v6366
      %v6368 = vsel %vm6365, %v6367, %v6363
      %v6369 = vmul.f32 1.0, %v6368
      %v6370 = vrcp.pop %v6240
      %v6371 = vmul.f32 %v6240, %v6370
      %v6372 = vsub.f32 1.0, %v6371
      %v6373 = vmul.f32 %v6370, %v6372
      %v6374 = vadd.f32 %v6370, %v6373
      %vm6375 = vweird.f32 %v6240
      %vm6376 = vweird.f32 %v6370
      %vm6377 = vmor %vm6375, %vm6376
      %v6378 = vsel %vm6377, %v6370, %v6374
      %v6379 = vand.u32 2147483647, %v6240
      %vm6380 = vcmp.eq.f32.partialorder %v6379, 8.507059e+37
      %v6381 = vand.u32 %v6240, 2147483648
      %v6382 = vor.u32 1.1754944e-38, %v6381
      %v6383 = vsel %vm6380, %v6382, %v6378
      %v6384 = vmul.f32 1.0, %v6383
      %v6385 = vrcp.pop %v6241
      %v6386 = vmul.f32 %v6241, %v6385
      %v6387 = vsub.f32 1.0, %v6386
      %v6388 = vmul.f32 %v6385, %v6387
      %v6389 = vadd.f32 %v6385, %v6388
      %vm6390 = vweird.f32 %v6241
      %vm6391 = vweird.f32 %v6385
      %vm6392 = vmor %vm6390, %vm6391
      %v6393 = vsel %vm6392, %v6385, %v6389
      %v6394 = vand.u32 2147483647, %v6241
      %vm6395 = vcmp.eq.f32.partialorder %v6394, 8.507059e+37
      %v6396 = vand.u32 %v6241, 2147483648
      %v6397 = vor.u32 1.1754944e-38, %v6396
      %v6398 = vsel %vm6395, %v6397, %v6393
      %v6399 = vmul.f32 1.0, %v6398
      %v6400 = vrcp.pop %v6242
      %v6401 = vmul.f32 %v6242, %v6400
      %v6402 = vsub.f32 1.0, %v6401
      %v6403 = vmul.f32 %v6400, %v6402
      %v6404 = vadd.f32 %v6400, %v6403
      %vm6405 = vweird.f32 %v6242
      %vm6406 = vweird.f32 %v6400
      %vm6407 = vmor %vm6405, %vm6406
      %v6408 = vsel %vm6407, %v6400, %v6404
      %v6409 = vand.u32 2147483647, %v6242
      %vm6410 = vcmp.eq.f32.partialorder %v6409, 8.507059e+37
      %v6411 = vand.u32 %v6242, 2147483648
      %v6412 = vor.u32 1.1754944e-38, %v6411
      %v6413 = vsel %vm6410, %v6412, %v6408
      %v6414 = vmul.f32 1.0, %v6413
      %v6415 = vrcp.pop %v6243
      %v6416 = vmul.f32 %v6243, %v6415
      %v6417 = vsub.f32 1.0, %v6416
      %v6418 = vmul.f32 %v6415, %v6417
      %v6419 = vadd.f32 %v6415, %v6418
      %vm6420 = vweird.f32 %v6243
      %vm6421 = vweird.f32 %v6415
      %vm6422 = vmor %vm6420, %vm6421
      %v6423 = vsel %vm6422, %v6415, %v6419
      %v6424 = vand.u32 2147483647, %v6243
      %vm6425 = vcmp.eq.f32.partialorder %v6424, 8.507059e+37
      %v6426 = vand.u32 %v6243, 2147483648
      %v6427 = vor.u32 1.1754944e-38, %v6426
      %v6428 = vsel %vm6425, %v6427, %v6423
      %v6429 = vmul.f32 1.0, %v6428
      %v6430 = vrcp.pop %v6244
      %v6431 = vmul.f32 %v6244, %v6430
      %v6432 = vsub.f32 1.0, %v6431
      %v6433 = vmul.f32 %v6430, %v6432
      %v6434 = vadd.f32 %v6430, %v6433
      %vm6435 = vweird.f32 %v6244
      %vm6436 = vweird.f32 %v6430
      %vm6437 = vmor %vm6435, %vm6436
      %v6438 = vsel %vm6437, %v6430, %v6434
      %v6439 = vand.u32 2147483647, %v6244
      %vm6440 = vcmp.eq.f32.partialorder %v6439, 8.507059e+37
      %v6441 = vand.u32 %v6244, 2147483648
      %v6442 = vor.u32 1.1754944e-38, %v6441
      %v6443 = vsel %vm6440, %v6442, %v6438
      %v6444 = vmul.f32 1.0, %v6443
      %v6445 = vrcp.pop %v6245
      %v6446 = vmul.f32 %v6245, %v6445
      %v6447 = vsub.f32 1.0, %v6446
      %v6448 = vmul.f32 %v6445, %v6447
      %v6449 = vadd.f32 %v6445, %v6448
      %vm6450 = vweird.f32 %v6245
      %vm6451 = vweird.f32 %v6445
      %vm6452 = vmor %vm6450, %vm6451
      %v6453 = vsel %vm6452, %v6445, %v6449
      %v6454 = vand.u32 2147483647, %v6245
      %vm6455 = vcmp.eq.f32.partialorder %v6454, 8.507059e+37
      %v6456 = vand.u32 %v6245, 2147483648
      %v6457 = vor.u32 1.1754944e-38, %v6456
      %v6458 = vsel %vm6455, %v6457, %v6453
      %v6459 = vmul.f32 1.0, %v6458
      %v6460 = vrcp.pop %v6246
      %v6461 = vmul.f32 %v6246, %v6460
      %v6462 = vsub.f32 1.0, %v6461
      %v6463 = vmul.f32 %v6460, %v6462
      %v6464 = vadd.f32 %v6460, %v6463
      %vm6465 = vweird.f32 %v6246
      %vm6466 = vweird.f32 %v6460
      %vm6467 = vmor %vm6465, %vm6466
      %v6468 = vsel %vm6467, %v6460, %v6464
      %v6469 = vand.u32 2147483647, %v6246
      %vm6470 = vcmp.eq.f32.partialorder %v6469, 8.507059e+37
      %v6471 = vand.u32 %v6246, 2147483648
      %v6472 = vor.u32 1.1754944e-38, %v6471
      %v6473 = vsel %vm6470, %v6472, %v6468
      %v6474 = vmul.f32 1.0, %v6473
      %v6475 = vrcp.pop %v6247
      %v6476 = vmul.f32 %v6247, %v6475
      %v6477 = vsub.f32 1.0, %v6476
      %v6478 = vmul.f32 %v6475, %v6477
      %v6479 = vadd.f32 %v6475, %v6478
      %vm6480 = vweird.f32 %v6247
      %vm6481 = vweird.f32 %v6475
      %vm6482 = vmor %vm6480, %vm6481
      %v6483 = vsel %vm6482, %v6475, %v6479
      %v6484 = vand.u32 2147483647, %v6247
      %vm6485 = vcmp.eq.f32.partialorder %v6484, 8.507059e+37
      %v6486 = vand.u32 %v6247, 2147483648
      %v6487 = vor.u32 1.1754944e-38, %v6486
      %v6488 = vsel %vm6485, %v6487, %v6483
      %v6489 = vmul.f32 1.0, %v6488
      %v6490 = vrcp.pop %v6248
      %v6491 = vmul.f32 %v6248, %v6490
      %v6492 = vsub.f32 1.0, %v6491
      %v6493 = vmul.f32 %v6490, %v6492
      %v6494 = vadd.f32 %v6490, %v6493
      %vm6495 = vweird.f32 %v6248
      %vm6496 = vweird.f32 %v6490
      %vm6497 = vmor %vm6495, %vm6496
      %v6498 = vsel %vm6497, %v6490, %v6494
      %v6499 = vand.u32 2147483647, %v6248
      %vm6500 = vcmp.eq.f32.partialorder %v6499, 8.507059e+37
      %v6501 = vand.u32 %v6248, 2147483648
      %v6502 = vor.u32 1.1754944e-38, %v6501
      %v6503 = vsel %vm6500, %v6502, %v6498
      %v6504 = vmul.f32 1.0, %v6503
      %v6505 = vrcp.pop %v6249
      %v6506 = vmul.f32 %v6249, %v6505
      %v6507 = vsub.f32 1.0, %v6506
      %v6508 = vmul.f32 %v6505, %v6507
      %v6509 = vadd.f32 %v6505, %v6508
      %vm6510 = vweird.f32 %v6249
      %vm6511 = vweird.f32 %v6505
      %vm6512 = vmor %vm6510, %vm6511
      %v6513 = vsel %vm6512, %v6505, %v6509
      %v6514 = vand.u32 2147483647, %v6249
      %vm6515 = vcmp.eq.f32.partialorder %v6514, 8.507059e+37
      %v6516 = vand.u32 %v6249, 2147483648
      %v6517 = vor.u32 1.1754944e-38, %v6516
      %v6518 = vsel %vm6515, %v6517, %v6513
      %v6519 = vmul.f32 1.0, %v6518
      %v6520 = vrcp.pop %v6250
      %v6521 = vmul.f32 %v6250, %v6520
      %v6522 = vsub.f32 1.0, %v6521
      %v6523 = vmul.f32 %v6520, %v6522
      %v6524 = vadd.f32 %v6520, %v6523
      %vm6525 = vweird.f32 %v6250
      %vm6526 = vweird.f32 %v6520
      %vm6527 = vmor %vm6525, %vm6526
      %v6528 = vsel %vm6527, %v6520, %v6524
      %v6529 = vand.u32 2147483647, %v6250
      %vm6530 = vcmp.eq.f32.partialorder %v6529, 8.507059e+37
      %v6531 = vand.u32 %v6250, 2147483648
      %v6532 = vor.u32 1.1754944e-38, %v6531
      %v6533 = vsel %vm6530, %v6532, %v6528
      %v6534 = vmul.f32 1.0, %v6533
      %v6535 = vrcp.pop %v6251
      %v6536 = vmul.f32 %v6251, %v6535
      %v6537 = vsub.f32 1.0, %v6536
      %v6538 = vmul.f32 %v6535, %v6537
      %v6539 = vadd.f32 %v6535, %v6538
      %vm6540 = vweird.f32 %v6251
      %vm6541 = vweird.f32 %v6535
      %vm6542 = vmor %vm6540, %vm6541
      %v6543 = vsel %vm6542, %v6535, %v6539
      %v6544 = vand.u32 2147483647, %v6251
      %vm6545 = vcmp.eq.f32.partialorder %v6544, 8.507059e+37
      %v6546 = vand.u32 %v6251, 2147483648
      %v6547 = vor.u32 1.1754944e-38, %v6546
      %v6548 = vsel %vm6545, %v6547, %v6543
      %v6549 = vmul.f32 1.0, %v6548
      %v6550 = vrcp.pop %v6252
      %v6551 = vmul.f32 %v6252, %v6550
      %v6552 = vsub.f32 1.0, %v6551
      %v6553 = vmul.f32 %v6550, %v6552
      %v6554 = vadd.f32 %v6550, %v6553
      %vm6555 = vweird.f32 %v6252
      %vm6556 = vweird.f32 %v6550
      %vm6557 = vmor %vm6555, %vm6556
      %v6558 = vsel %vm6557, %v6550, %v6554
      %v6559 = vand.u32 2147483647, %v6252
      %vm6560 = vcmp.eq.f32.partialorder %v6559, 8.507059e+37
      %v6561 = vand.u32 %v6252, 2147483648
      %v6562 = vor.u32 1.1754944e-38, %v6561
      %v6563 = vsel %vm6560, %v6562, %v6558
      %v6564 = vmul.f32 1.0, %v6563
      %v6565 = vrcp.pop %v6253
      %v6566 = vmul.f32 %v6253, %v6565
      %v6567 = vsub.f32 1.0, %v6566
      %v6568 = vmul.f32 %v6565, %v6567
      %v6569 = vadd.f32 %v6565, %v6568
      %vm6570 = vweird.f32 %v6253
      %vm6571 = vweird.f32 %v6565
      %vm6572 = vmor %vm6570, %vm6571
      %v6573 = vsel %vm6572, %v6565, %v6569
      %v6574 = vand.u32 2147483647, %v6253
      %vm6575 = vcmp.eq.f32.partialorder %v6574, 8.507059e+37
      %v6576 = vand.u32 %v6253, 2147483648
      %v6577 = vor.u32 1.1754944e-38, %v6576
      %v6578 = vsel %vm6575, %v6577, %v6573
      %v6579 = vmul.f32 1.0, %v6578
      %v6580 = vrcp.pop %v6254
      %v6581 = vmul.f32 %v6254, %v6580
      %v6582 = vsub.f32 1.0, %v6581
      %v6583 = vmul.f32 %v6580, %v6582
      %v6584 = vadd.f32 %v6580, %v6583
      %vm6585 = vweird.f32 %v6254
      %vm6586 = vweird.f32 %v6580
      %vm6587 = vmor %vm6585, %vm6586
      %v6588 = vsel %vm6587, %v6580, %v6584
      %v6589 = vand.u32 2147483647, %v6254
      %vm6590 = vcmp.eq.f32.partialorder %v6589, 8.507059e+37
      %v6591 = vand.u32 %v6254, 2147483648
      %v6592 = vor.u32 1.1754944e-38, %v6591
      %v6593 = vsel %vm6590, %v6592, %v6588
      %v6594 = vmul.f32 1.0, %v6593
      %v6595 = vrcp.pop %v6255
      %v6596 = vmul.f32 %v6255, %v6595
      %v6597 = vsub.f32 1.0, %v6596
      %v6598 = vmul.f32 %v6595, %v6597
      %v6599 = vadd.f32 %v6595, %v6598
      %vm6600 = vweird.f32 %v6255
      %vm6601 = vweird.f32 %v6595
      %vm6602 = vmor %vm6600, %vm6601
      %v6603 = vsel %vm6602, %v6595, %v6599
      %v6604 = vand.u32 2147483647, %v6255
      %vm6605 = vcmp.eq.f32.partialorder %v6604, 8.507059e+37
      %v6606 = vand.u32 %v6255, 2147483648
      %v6607 = vor.u32 1.1754944e-38, %v6606
      %v6608 = vsel %vm6605, %v6607, %v6603
      %v6609 = vmul.f32 1.0, %v6608
      %v6610 = vrcp.pop %v6256
      %v6611 = vmul.f32 %v6256, %v6610
      %v6612 = vsub.f32 1.0, %v6611
      %v6613 = vmul.f32 %v6610, %v6612
      %v6614 = vadd.f32 %v6610, %v6613
      %vm6615 = vweird.f32 %v6256
      %vm6616 = vweird.f32 %v6610
      %vm6617 = vmor %vm6615, %vm6616
      %v6618 = vsel %vm6617, %v6610, %v6614
      %v6619 = vand.u32 2147483647, %v6256
      %vm6620 = vcmp.eq.f32.partialorder %v6619, 8.507059e+37
      %v6621 = vand.u32 %v6256, 2147483648
      %v6622 = vor.u32 1.1754944e-38, %v6621
      %v6623 = vsel %vm6620, %v6622, %v6618
      %v6624 = vmul.f32 1.0, %v6623
      %v6625 = vrcp.pop %v6257
      %v6626 = vmul.f32 %v6257, %v6625
      %v6627 = vsub.f32 1.0, %v6626
      %v6628 = vmul.f32 %v6625, %v6627
      %v6629 = vadd.f32 %v6625, %v6628
      %vm6630 = vweird.f32 %v6257
      %vm6631 = vweird.f32 %v6625
      %vm6632 = vmor %vm6630, %vm6631
      %v6633 = vsel %vm6632, %v6625, %v6629
      %v6634 = vand.u32 2147483647, %v6257
      %vm6635 = vcmp.eq.f32.partialorder %v6634, 8.507059e+37
      %v6636 = vand.u32 %v6257, 2147483648
      %v6637 = vor.u32 1.1754944e-38, %v6636
      %v6638 = vsel %vm6635, %v6637, %v6633
      %v6639 = vmul.f32 1.0, %v6638
      %v6640 = vrcp.pop %v6258
      %v6641 = vmul.f32 %v6258, %v6640
      %v6642 = vsub.f32 1.0, %v6641
      %v6643 = vmul.f32 %v6640, %v6642
      %v6644 = vadd.f32 %v6640, %v6643
      %vm6645 = vweird.f32 %v6258
      %vm6646 = vweird.f32 %v6640
      %vm6647 = vmor %vm6645, %vm6646
      %v6648 = vsel %vm6647, %v6640, %v6644
      %v6649 = vand.u32 2147483647, %v6258
      %vm6650 = vcmp.eq.f32.partialorder %v6649, 8.507059e+37
      %v6651 = vand.u32 %v6258, 2147483648
      %v6652 = vor.u32 1.1754944e-38, %v6651
      %v6653 = vsel %vm6650, %v6652, %v6648
      %v6654 = vmul.f32 1.0, %v6653
      %v6655 = vrcp.pop %v6259
      %v6656 = vmul.f32 %v6259, %v6655
      %v6657 = vsub.f32 1.0, %v6656
      %v6658 = vmul.f32 %v6655, %v6657
      %v6659 = vadd.f32 %v6655, %v6658
      %vm6660 = vweird.f32 %v6259
      %vm6661 = vweird.f32 %v6655
      %vm6662 = vmor %vm6660, %vm6661
      %v6663 = vsel %vm6662, %v6655, %v6659
      %v6664 = vand.u32 2147483647, %v6259
      %vm6665 = vcmp.eq.f32.partialorder %v6664, 8.507059e+37
      %v6666 = vand.u32 %v6259, 2147483648
      %v6667 = vor.u32 1.1754944e-38, %v6666
      %v6668 = vsel %vm6665, %v6667, %v6663
      %v6669 = vmul.f32 1.0, %v6668
      %v6670 = vrcp.pop %v6260
      %v6671 = vmul.f32 %v6260, %v6670
      %v6672 = vsub.f32 1.0, %v6671
      %v6673 = vmul.f32 %v6670, %v6672
      %v6674 = vadd.f32 %v6670, %v6673
      %vm6675 = vweird.f32 %v6260
      %vm6676 = vweird.f32 %v6670
      %vm6677 = vmor %vm6675, %vm6676
      %v6678 = vsel %vm6677, %v6670, %v6674
      %v6679 = vand.u32 2147483647, %v6260
      %vm6680 = vcmp.eq.f32.partialorder %v6679, 8.507059e+37
      %v6681 = vand.u32 %v6260, 2147483648
      %v6682 = vor.u32 1.1754944e-38, %v6681
      %v6683 = vsel %vm6680, %v6682, %v6678
      %v6684 = vmul.f32 1.0, %v6683
      %v6685 = vrcp.pop %v6261
      %v6686 = vmul.f32 %v6261, %v6685
      %v6687 = vsub.f32 1.0, %v6686
      %v6688 = vmul.f32 %v6685, %v6687
      %v6689 = vadd.f32 %v6685, %v6688
      %vm6690 = vweird.f32 %v6261
      %vm6691 = vweird.f32 %v6685
      %vm6692 = vmor %vm6690, %vm6691
      %v6693 = vsel %vm6692, %v6685, %v6689
      %v6694 = vand.u32 2147483647, %v6261
      %vm6695 = vcmp.eq.f32.partialorder %v6694, 8.507059e+37
      %v6696 = vand.u32 %v6261, 2147483648
      %v6697 = vor.u32 1.1754944e-38, %v6696
      %v6698 = vsel %vm6695, %v6697, %v6693
      %v6699 = vmul.f32 1.0, %v6698
      %v6700 = vrcp.pop %v6262
      %v6701 = vmul.f32 %v6262, %v6700
      %v6702 = vsub.f32 1.0, %v6701
      %v6703 = vmul.f32 %v6700, %v6702
      %v6704 = vadd.f32 %v6700, %v6703
      %vm6705 = vweird.f32 %v6262
      %vm6706 = vweird.f32 %v6700
      %vm6707 = vmor %vm6705, %vm6706
      %v6708 = vsel %vm6707, %v6700, %v6704
      %v6709 = vand.u32 2147483647, %v6262
      %vm6710 = vcmp.eq.f32.partialorder %v6709, 8.507059e+37
      %v6711 = vand.u32 %v6262, 2147483648
      %v6712 = vor.u32 1.1754944e-38, %v6711
      %v6713 = vsel %vm6710, %v6712, %v6708
      %v6714 = vmul.f32 1.0, %v6713
      %v6715 = vrcp.pop %v6263
      %v6716 = vmul.f32 %v6263, %v6715
      %v6717 = vsub.f32 1.0, %v6716
      %v6718 = vmul.f32 %v6715, %v6717
      %v6719 = vadd.f32 %v6715, %v6718
      %vm6720 = vweird.f32 %v6263
      %vm6721 = vweird.f32 %v6715
      %vm6722 = vmor %vm6720, %vm6721
      %v6723 = vsel %vm6722, %v6715, %v6719
      %v6724 = vand.u32 2147483647, %v6263
      %vm6725 = vcmp.eq.f32.partialorder %v6724, 8.507059e+37
      %v6726 = vand.u32 %v6263, 2147483648
      %v6727 = vor.u32 1.1754944e-38, %v6726
      %v6728 = vsel %vm6725, %v6727, %v6723
      %v6729 = vmul.f32 1.0, %v6728
      %v6730 = vrcp.pop %v6264
      %v6731 = vmul.f32 %v6264, %v6730
      %v6732 = vsub.f32 1.0, %v6731
      %v6733 = vmul.f32 %v6730, %v6732
      %v6734 = vadd.f32 %v6730, %v6733
      %vm6735 = vweird.f32 %v6264
      %vm6736 = vweird.f32 %v6730
      %vm6737 = vmor %vm6735, %vm6736
      %v6738 = vsel %vm6737, %v6730, %v6734
      %v6739 = vand.u32 2147483647, %v6264
      %vm6740 = vcmp.eq.f32.partialorder %v6739, 8.507059e+37
      %v6741 = vand.u32 %v6264, 2147483648
      %v6742 = vor.u32 1.1754944e-38, %v6741
      %v6743 = vsel %vm6740, %v6742, %v6738
      %v6744 = vmul.f32 1.0, %v6743
      %v6745 = vmul.f32 %v6105, %v6279
      %v6746 = vmul.f32 %v6106, %v6294
      %v6747 = vmul.f32 %v6107, %v6309
      %v6748 = vmul.f32 %v6108, %v6324
      %v6749 = vmul.f32 %v6109, %v6339
      %v6750 = vmul.f32 %v6110, %v6354
      %v6751 = vmul.f32 %v6111, %v6369
      %v6752 = vmul.f32 %v6112, %v6384
      %v6753 = vmul.f32 %v6113, %v6399
      %v6754 = vmul.f32 %v6114, %v6414
      %v6755 = vmul.f32 %v6115, %v6429
      %v6756 = vmul.f32 %v6116, %v6444
      %v6757 = vmul.f32 %v6117, %v6459
      %v6758 = vmul.f32 %v6118, %v6474
      %v6759 = vmul.f32 %v6119, %v6489
      %v6760 = vmul.f32 %v6120, %v6504
      %v6761 = vmul.f32 %v6121, %v6519
      %v6762 = vmul.f32 %v6122, %v6534
      %v6763 = vmul.f32 %v6123, %v6549
      %v6764 = vmul.f32 %v6124, %v6564
      %v6765 = vmul.f32 %v6125, %v6579
      %v6766 = vmul.f32 %v6126, %v6594
      %v6767 = vmul.f32 %v6127, %v6609
      %v6768 = vmul.f32 %v6128, %v6624
      %v6769 = vmul.f32 %v6129, %v6639
      %v6770 = vmul.f32 %v6130, %v6654
      %v6771 = vmul.f32 %v6131, %v6669
      %v6772 = vmul.f32 %v6132, %v6684
      %v6773 = vmul.f32 %v6133, %v6699
      %v6774 = vmul.f32 %v6134, %v6714
      %v6775 = vmul.f32 %v6135, %v6729
      %v6776 = vmul.f32 %v6136, %v6744
      %v6777 = vadd.f32 %v6745, %v1250
      %v6778 = vadd.f32 %v6746, %v1251
      %v6779 = vadd.f32 %v6747, %v1252
      %v6780 = vadd.f32 %v6748, %v1253
      %v6781 = vadd.f32 %v6749, %v1254
      %v6782 = vadd.f32 %v6750, %v1255
      %v6783 = vadd.f32 %v6751, %v1256
      %v6784 = vadd.f32 %v6752, %v1257
      %v6785 = vadd.f32 %v6753, %v1258
      %v6786 = vadd.f32 %v6754, %v1259
      %v6787 = vadd.f32 %v6755, %v1260
      %v6788 = vadd.f32 %v6756, %v1261
      %v6789 = vadd.f32 %v6757, %v1262
      %v6790 = vadd.f32 %v6758, %v1263
      %v6791 = vadd.f32 %v6759, %v1264
      %v6792 = vadd.f32 %v6760, %v1265
      %v6793 = vadd.f32 %v6761, %v1266
      %v6794 = vadd.f32 %v6762, %v1267
      %v6795 = vadd.f32 %v6763, %v1268
      %v6796 = vadd.f32 %v6764, %v1269
      %v6797 = vadd.f32 %v6765, %v1270
      %v6798 = vadd.f32 %v6766, %v1271
      %v6799 = vadd.f32 %v6767, %v1272
      %v6800 = vadd.f32 %v6768, %v1273
      %v6801 = vadd.f32 %v6769, %v1274
      %v6802 = vadd.f32 %v6770, %v1275
      %v6803 = vadd.f32 %v6771, %v1276
      %v6804 = vadd.f32 %v6772, %v1277
      %v6805 = vadd.f32 %v6773, %v1278
      %v6806 = vadd.f32 %v6774, %v1279
      %v6807 = vadd.f32 %v6775, %v1280
      %v6808 = vadd.f32 %v6776, %v1281
      %6809 = vst.msk [vmem:[%s444] sm:$0xff] %vm1988, %v6777
      %6810 = vst.msk [vmem:[%s444 + $0x8] sm:$0xff] %vm1988, %v6778
      %6811 = vst.msk [vmem:[%s444 + $0x10] sm:$0xff] %vm1988, %v6779
      %6812 = vst.msk [vmem:[%s444 + $0x18] sm:$0xff] %vm1988, %v6780
      %6813 = vst.msk [vmem:[%s444 + $0x20] sm:$0xff] %vm1988, %v6781
      %6814 = vst.msk [vmem:[%s444 + $0x28] sm:$0xff] %vm1988, %v6782
      %6815 = vst.msk [vmem:[%s444 + $0x30] sm:$0xff] %vm1988, %v6783
      %6816 = vst.msk [vmem:[%s444 + $0x38] sm:$0xff] %vm1988, %v6784
      %6817 = vst.msk [vmem:[%s444 + $0x40] sm:$0xff] %vm1988, %v6785
      %6818 = vst.msk [vmem:[%s444 + $0x48] sm:$0xff] %vm1988, %v6786
      %6819 = vst.msk [vmem:[%s444 + $0x50] sm:$0xff] %vm1988, %v6787
      %6820 = vst.msk [vmem:[%s444 + $0x58] sm:$0xff] %vm1988, %v6788
      %6821 = vst.msk [vmem:[%s444 + $0x60] sm:$0xff] %vm1988, %v6789
      %6822 = vst.msk [vmem:[%s444 + $0x68] sm:$0xff] %vm1988, %v6790
      %6823 = vst.msk [vmem:[%s444 + $0x70] sm:$0xff] %vm1988, %v6791
      %6824 = vst.msk [vmem:[%s444 + $0x78] sm:$0xff] %vm1988, %v6792
      %6825 = vst.msk [vmem:[%s444 + $0x80] sm:$0xff] %vm1988, %v6793
      %6826 = vst.msk [vmem:[%s444 + $0x88] sm:$0xff] %vm1988, %v6794
      %6827 = vst.msk [vmem:[%s444 + $0x90] sm:$0xff] %vm1988, %v6795
      %6828 = vst.msk [vmem:[%s444 + $0x98] sm:$0xff] %vm1988, %v6796
      %6829 = vst.msk [vmem:[%s444 + $0xa0] sm:$0xff] %vm1988, %v6797
      %6830 = vst.msk [vmem:[%s444 + $0xa8] sm:$0xff] %vm1988, %v6798
      %6831 = vst.msk [vmem:[%s444 + $0xb0] sm:$0xff] %vm1988, %v6799
      %6832 = vst.msk [vmem:[%s444 + $0xb8] sm:$0xff] %vm1988, %v6800
      %6833 = vst.msk [vmem:[%s444 + $0xc0] sm:$0xff] %vm1988, %v6801
      %6834 = vst.msk [vmem:[%s444 + $0xc8] sm:$0xff] %vm1988, %v6802
      %6835 = vst.msk [vmem:[%s444 + $0xd0] sm:$0xff] %vm1988, %v6803
      %6836 = vst.msk [vmem:[%s444 + $0xd8] sm:$0xff] %vm1988, %v6804
      %6837 = vst.msk [vmem:[%s444 + $0xe0] sm:$0xff] %vm1988, %v6805
      %6838 = vst.msk [vmem:[%s444 + $0xe8] sm:$0xff] %vm1988, %v6806
      %6839 = vst.msk [vmem:[%s444 + $0xf0] sm:$0xff] %vm1988, %v6807
      %6840 = vst.msk [vmem:[%s444 + $0xf8] sm:$0xff] %vm1988, %v6808
      %s6841 = smul.u32 32, %s23
      %p6842 = scmp.lt.s32.totalorder %s22, 1
      %s6843 = scalar_select %p6842, %s22, 1
      %p6844 = scmp.lt.s32.totalorder %s6841, 31
      %s6845 = scalar_select %p6844, %s6841, 31
      %s6846 = smul.addr %s6843, 32
      %s6847 = sadd.s32 %s6845, %s6846
      %s6848 = smul.addr %s6847, 8
      %s6849 = scalar_lea.vmem %s7, %s6848
      // Predicated region
      $region65: #{c1_forward.1} parent=47 // pred_check
        %p6850 = pneg %p234
      $region66: #{c1_forward.1} parent=47 // pred_check_branch
        %6852 = sbr.rel (%p6850) target = $region68
      $region67: #{c1_forward.1} parent=47 // pred_region
        %s6853 = smul.u32 32, %s23
      $region68: #{c1_forward.1} parent=47 // pred_fallthru
        _
    $region48: #{c1_forward.1} parent=5 // pred_fallthru
      _
    %p6854 = scmp.le.s32.totalorder 2, %s13
    // Predicated region
    $region69: #{c1_forward.1} parent=5 // pred_check
      %p6855 = pneg %p6854
    $region70: #{c1_forward.1} parent=5 // pred_check_branch
      %6857 = sbr.rel (%p6855) target = $region72
    $region71: #{c1_forward.1} parent=5 // pred_region
      %s6858 = ssub.s32 %s13, 2
      // Predicated region
      $region73: #{c1_forward.1} parent=71 // pred_check
        %p6859 = pneg %p240
      $region74: #{c1_forward.1} parent=71 // pred_check_branch
        %6861 = sbr.rel (%p6859) target = $region76
      $region75: #{c1_forward.1} parent=71 // pred_region
        %s6862 = smul.u32 32, %s25
        %p6863 = scmp.lt.s32.totalorder %s24, 1
        %s6864 = scalar_select %p6863, %s24, 1
        %p6865 = scmp.lt.s32.totalorder %s6862, 31
        %s6866 = scalar_select %p6865, %s6862, 31
        %s6867 = smul.addr %s6864, 32
        %s6868 = sadd.s32 %s6866, %s6867
        %s6869 = smul.addr %s6868, 8
        %s6870 = scalar_lea.vmem %s7, %s6869
      $region76: #{c1_forward.1} parent=71 // pred_fallthru
        _
    $region72: #{c1_forward.1} parent=5 // pred_fallthru
      _
  $region6: #{c1_forward.1} parent=0 // loop_footer
    %s17 = sadd.s32 1, %s13
  $region7: #{c1_forward.1} parent=0 // loop_footer_branch
    %12 = sbr.rel target = $region3
  $region8: #{c1_forward.1} parent=0 // loop_exit
    _

</llo_original>
